<compile_context>
chip_gen: v5e
topology: v5e:2x2
jax: 0.10.0
libtpu: 0.0.40
codegen_flags: <defaults>
</compile_context>

<pallas_src>
import math
import functools

import jax
import jax.numpy as jnp
from jax.experimental import pallas as pl
from jax.experimental.pallas import tpu as pltpu


def _layernorm(y, gamma, beta, eps=1e-5):
    # PyTorch nn.LayerNorm over last dim: biased variance, eps inside rsqrt.
    mu = jnp.mean(y, axis=-1, keepdims=True)
    var = jnp.mean((y - mu) ** 2, axis=-1, keepdims=True)
    return (y - mu) * jax.lax.rsqrt(var + eps) * gamma + beta


def _attention_ffn(xq_f32, q, kh, vh,
                   wo_ref, bo_ref, g1_ref, be1_ref,
                   w1_ref, b1_ref, w2_ref, b2_ref,
                   g2_ref, be2_ref, o_ref, *, num_head, head_dim):
    """Shared tail: softmax(q k^T) v -> wo -> AddNorm -> FFN -> AddNorm.

    xq_f32 : (tq, H) residual copy of the query rows (f32 precision path).
    q      : (tq, H) f32, already scaled by 1/sqrt(head_dim).
    kh, vh : (NH, S, head_dim) in compute dtype (direct MXU inputs).
    """
    f32 = jnp.float32
    cdt = kh.dtype
    tq = q.shape[0]
    H = num_head * head_dim

    qh = jnp.transpose(q.reshape(tq, num_head, head_dim), (1, 0, 2)).astype(cdt)

    s = jnp.einsum("hqd,hkd->hqk", qh, kh, preferred_element_type=f32)
    s = s - jnp.max(s, axis=-1, keepdims=True)
    p = jnp.exp(s)
    p = p * pl.reciprocal(jnp.sum(p, axis=-1, keepdims=True), approx=True)

    ctx = jnp.einsum("hqk,hkd->hqd", p.astype(cdt), vh,
                     preferred_element_type=f32)               # (NH, tq, hd)

    # Single relayout back to lane-dense (tq, H), then ONE K=H matmul through
    # wo (no per-head tiny-K matmuls, no (NH,tq,H) intermediate, no sum).
    ctx2d = jnp.transpose(ctx, (1, 0, 2)).reshape(tq, H)
    y1 = jnp.dot(ctx2d.astype(cdt), wo_ref[...],
                 preferred_element_type=f32) + bo_ref[...]

    # AddNorm 1 (dropout = identity in eval mode); residual stays f32.
    x2 = _layernorm(xq_f32 + y1, g1_ref[...], be1_ref[...])

    # Position-wise FFN.
    f = jnp.dot(x2.astype(cdt), w1_ref[...], preferred_element_type=f32) + b1_ref[...]
    f = jnp.maximum(f, 0.0)                                    # ReLU
    y2 = jnp.dot(f.astype(cdt), w2_ref[...], preferred_element_type=f32) + b2_ref[...]

    # AddNorm 2.
    o_ref[0] = _layernorm(x2 + y2, g2_ref[...], be2_ref[...]).astype(o_ref.dtype)


def _encoder_block_kernel_full(x_ref,
                               wqkv_ref, bqkv_ref, wo_ref, bo_ref,
                               g1_ref, be1_ref, w1_ref, b1_ref,
                               w2_ref, b2_ref, g2_ref, be2_ref,
                               o_ref, *, num_head, head_dim):
    """tq == S: one operand, fully fused QKV projection (one big MXU dot)."""
    f32 = jnp.float32
    S = x_ref.shape[1]
    H = num_head * head_dim
    cdt = wqkv_ref.dtype

    x = x_ref[0]                                               # (S, H) residual
    qkv = jnp.dot(x.astype(cdt), wqkv_ref[...],
                  preferred_element_type=f32) + bqkv_ref[...]  # (S, 3H) f32
    q = qkv[:, :H]                                             # pre-scaled
    kh = jnp.transpose(qkv[:, H:2 * H].reshape(S, num_head, head_dim),
                       (1, 0, 2)).astype(cdt)
    vh = jnp.transpose(qkv[:, 2 * H:].reshape(S, num_head, head_dim),
                       (1, 0, 2)).astype(cdt)
    _attention_ffn(x, q, kh, vh, wo_ref, bo_ref, g1_ref, be1_ref,
                   w1_ref, b1_ref, w2_ref, b2_ref, g2_ref, be2_ref, o_ref,
                   num_head=num_head, head_dim=head_dim)


def _encoder_block_kernel_tiled(xq_ref, xkv_ref,
                                wqkv_ref, bqkv_ref, wo_ref, bo_ref,
                                g1_ref, be1_ref, w1_ref, b1_ref,
                                w2_ref, b2_ref, g2_ref, be2_ref,
                                o_ref, kh_scr, vh_scr, *, num_head, head_dim):
    """nq > 1: K/V projected once per batch element, cached in VMEM scratch."""
    f32 = jnp.float32
    S = xkv_ref.shape[1]
    H = num_head * head_dim
    cdt = wqkv_ref.dtype

    @pl.when(pl.program_id(1) == 0)
    def _():
        xkv = xkv_ref[0].astype(cdt)                           # (S, H)
        kv = jnp.dot(xkv, wqkv_ref[:, H:],
                     preferred_element_type=f32) + bqkv_ref[:, H:]
        kh_scr[...] = jnp.transpose(kv[:, :H].reshape(S, num_head, head_dim),
                                    (1, 0, 2)).astype(cdt)
        vh_scr[...] = jnp.transpose(kv[:, H:].reshape(S, num_head, head_dim),
                                    (1, 0, 2)).astype(cdt)

    xq = xq_ref[0]                                             # (tq, H) residual
    q = jnp.dot(xq.astype(cdt), wqkv_ref[:, :H],
                preferred_element_type=f32) + bqkv_ref[:, :H]  # pre-scaled
    _attention_ffn(xq, q, kh_scr[...], vh_scr[...], wo_ref, bo_ref,
                   g1_ref, be1_ref, w1_ref, b1_ref, w2_ref, b2_ref,
                   g2_ref, be2_ref, o_ref,
                   num_head=num_head, head_dim=head_dim)


def _pick_vmem_limit_bytes():
    """Per-generation VMEM request: headroom on v7x (64 MiB/TC), more on
    v5e/v6e (128 MiB)."""
    try:
        cap = int(pltpu.get_tpu_info().vmem_capacity_bytes)
    except Exception:
        cap = 128 * 1024 * 1024
    headroom = 16 * 1024 * 1024
    return int(max(32 * 1024 * 1024, min(cap - headroom, 100 * 1024 * 1024)))


def transformer_encoder_block(x, params, *, num_head,
                              compute_dtype=jnp.bfloat16, tq=None,
                              out_dtype=None):
    """x: (B, S, H).  params: dict of weights (see init_params).

    compute_dtype: MXU-input dtype (weights / matmul operands); accumulation,
      softmax, layernorm and residual adds stay float32.
    out_dtype: output dtype (defaults to x.dtype; bf16 halves writeback on
      bandwidth-bound v5e).
    """
    B, S, H = x.shape
    F = params["w1"].shape[1]
    assert H % num_head == 0
    head_dim = H // num_head
    out_dtype = x.dtype if out_dtype is None else out_dtype
    cdt = compute_dtype
    f32 = jnp.float32

    # VMEM-aware query-tile size: keep the per-tile f32 intermediates (scores
    # NH*tq*S, FFN tq*F, qkv/residual ~8*tq*H) around ~12 MiB so the kernel
    # fits every generation alongside weights + double-buffered activations.
    if tq is None:
        per_row_bytes = 4 * (num_head * S + F + 8 * H)
        cap = max(8, (12 * 1024 * 1024) // per_row_bytes)
        tq = S
        while tq > cap and tq % 2 == 0:
            tq //= 2
    assert S % tq == 0, "tq must divide S"
    nq = S // tq

    # Fold 1/sqrt(head_dim) into the Q columns of the fused QKV weight/bias.
    scale = 1.0 / math.sqrt(head_dim)
    wqkv = jnp.concatenate([params["wq"] * scale, params["wk"], params["wv"]],
                           axis=1).astype(cdt)                 # (H, 3H)
    bqkv = jnp.concatenate([params["bq"] * scale, params["bk"], params["bv"]],
                           axis=1).astype(f32)                 # (1, 3H)
    weights = [
        wqkv, bqkv,
        params["wo"].astype(cdt), params["bo"].astype(f32),
        params["g1"].astype(f32), params["be1"].astype(f32),
        params["w1"].astype(cdt), params["b1"].astype(f32),
        params["w2"].astype(cdt), params["b2"].astype(f32),
        params["g2"].astype(f32), params["be2"].astype(f32),
    ]

    # Advisory cost estimate for XLA's scheduler.
    flops = 2 * B * S * (4 * H * H + 2 * H * F + 2 * S * H)
    bytes_accessed = (x.size * x.dtype.itemsize
                      + B * S * H * jnp.dtype(out_dtype).itemsize
                      + sum(int(w.size) * jnp.dtype(w.dtype).itemsize
                            for w in weights))
    cost = pl.CostEstimate(flops=int(flops),
                           transcendentals=int(B * num_head * S * S),
                           bytes_accessed=int(bytes_accessed))
    vmem_limit = _pick_vmem_limit_bytes()

    def run(single_buffer_weights):
        # Constant-index weight blocks never re-fetch: single-buffer them.
        wkw = ({"pipeline_mode": pl.Buffered(1)}
               if single_buffer_weights else {})

        if nq == 1:
            # Single operand: the query tile IS the full sequence (no
            # duplicated x / xkv DMA, no VMEM double-residency).
            in_specs = (
                [pl.BlockSpec((1, S, H), lambda b: (b, 0, 0))]
                + [pl.BlockSpec(w.shape, lambda b: (0, 0), **wkw)
                   for w in weights])
            grid = (B,)
            out_spec = pl.BlockSpec((1, S, H), lambda b: (b, 0, 0))
            scratch = []
            sem = ("parallel",)            # B >= 2 -> both v7x cores get work
            kernel = functools.partial(_encoder_block_kernel_full,
                                       num_head=num_head, head_dim=head_dim)
            operands = (x,) + tuple(weights)
        else:
            in_specs = (
                [pl.BlockSpec((1, tq, H), lambda b, qi: (b, qi, 0)),
                 pl.BlockSpec((1, S, H), lambda b, qi: (b, 0, 0))]
                + [pl.BlockSpec(w.shape, lambda b, qi: (0, 0), **wkw)
                   for w in weights])
            grid = (B, nq)
            out_spec = pl.BlockSpec((1, tq, H), lambda b, qi: (b, qi, 0))
            # Head-major K/V cached per batch element, reused by every query
            # tile -> the qi axis carries state and must be "arbitrary".
            scratch = [pltpu.VMEM((num_head, S, head_dim), cdt),
                       pltpu.VMEM((num_head, S, head_dim), cdt)]
            sem = ("parallel", "arbitrary")
            kernel = functools.partial(_encoder_block_kernel_tiled,
                                       num_head=num_head, head_dim=head_dim)
            operands = (x, x) + tuple(weights)

        return pl.pallas_call(
            kernel,
            out_shape=jax.ShapeDtypeStruct((B, S, H), out_dtype),
            grid_spec=pltpu.PrefetchScalarGridSpec(
                num_scalar_prefetch=0,
                grid=grid,
                in_specs=in_specs,
                out_specs=out_spec,
                scratch_shapes=scratch),
            compiler_params=pltpu.CompilerParams(
                dimension_semantics=sem,
                vmem_limit_bytes=vmem_limit),
            cost_estimate=cost,
        )(*operands)

    try:
        return run(True)
    except Exception:
        # Fallback for jax versions where single-buffering constant weight
        # blocks via pl.Buffered(1) is not supported.
        return run(False)


def init_params(key, hidden_size, ffn_hidden_size):
    """Deterministic synthetic init.  Biases/gamma/beta stored as (1, dim)."""
    keys = jax.random.split(key, 8)
    H, F = hidden_size, ffn_hidden_size
    s_h = 1.0 / math.sqrt(H)
    s_f = 1.0 / math.sqrt(F)
    return {
        "wq": jax.random.uniform(keys[0], (H, H), jnp.float32, -s_h, s_h),
        "wk": jax.random.uniform(keys[1], (H, H), jnp.float32, -s_h, s_h),
        "wv": jax.random.uniform(keys[2], (H, H), jnp.float32, -s_h, s_h),
        "wo": jax.random.uniform(keys[3], (H, H), jnp.float32, -s_h, s_h),
        "bq": jax.random.uniform(keys[4], (1, H), jnp.float32, -s_h, s_h),
        "bk": jax.random.uniform(keys[5], (1, H), jnp.float32, -s_h, s_h),
        "bv": jax.random.uniform(keys[6], (1, H), jnp.float32, -s_h, s_h),
        "bo": jnp.zeros((1, H), jnp.float32),
        "g1": jnp.ones((1, H), jnp.float32),
        "be1": jnp.zeros((1, H), jnp.float32),
        "w1": jax.random.uniform(keys[7], (H, F), jnp.float32, -s_h, s_h),
        "b1": jnp.zeros((1, F), jnp.float32),
        "w2": jax.random.uniform(jax.random.fold_in(key, 99), (F, H),
                                 jnp.float32, -s_f, s_f),
        "b2": jnp.zeros((1, H), jnp.float32),
        "g2": jnp.ones((1, H), jnp.float32),
        "be2": jnp.zeros((1, H), jnp.float32),
    }


def _reference(x, p, num_head):
    """Plain-JAX reference (same math as the PyTorch module in eval mode)."""
    B, S, H = x.shape
    hd = H // num_head

    def one(xb):
        q = xb @ p["wq"] + p["bq"]
        k = xb @ p["wk"] + p["bk"]
        v = xb @ p["wv"] + p["bv"]
        outs = []
        for h in range(num_head):
            qh, kh, vh = (t[:, h * hd:(h + 1) * hd] for t in (q, k, v))
            s = (qh @ kh.T) / math.sqrt(hd)
            pw = jax.nn.softmax(s, axis=-1)
            outs.append(pw @ vh)
        attn = jnp.concatenate(outs, axis=-1)
        y1 = attn @ p["wo"] + p["bo"]

        def ln(y, g, b):
            mu = jnp.mean(y, -1, keepdims=True)
            var = jnp.mean((y - mu) ** 2, -1, keepdims=True)
            return (y - mu) * jax.lax.rsqrt(var + 1e-5) * g + b

        x2 = ln(xb + y1, p["g1"], p["be1"])
        f = jnp.maximum(x2 @ p["w1"] + p["b1"], 0.0)
        y2 = f @ p["w2"] + p["b2"]
        return ln(x2 + y2, p["g2"], p["be2"])

    return jax.vmap(one)(x)


if __name__ == "__main__":
    # Small, lane-dense shapes: batch=2, seq=16, hidden=128, ffn=256, heads=4.
    B, S, H, F, NH = 2, 16, 128, 256, 4
    key = jax.random.PRNGKey(0)
    kx, kp = jax.random.split(key)
    x = jax.random.normal(kx, (B, S, H), jnp.float32)
    params = init_params(kp, H, F)
    ref = _reference(x, params, NH)

    # f32 MXU path, full-sequence (nq == 1) kernel: strict check (tolerance
    # covers the EUP approx-reciprocal in the softmax denominator).
    out_f32 = jax.block_until_ready(
        transformer_encoder_block(x, params, num_head=NH,
                                  compute_dtype=jnp.float32))
    assert out_f32.shape == (B, S, H)
    assert jnp.allclose(out_f32, ref, atol=2e-3, rtol=2e-3), (
        "f32 mismatch vs reference, max abs err = %e"
        % float(jnp.max(jnp.abs(out_f32 - ref))))

    # Query-tiled path (nq > 1): exercises the per-batch K/V VMEM scratch and
    # the ("parallel", "arbitrary") grid.
    out_tiled = jax.block_until_ready(
        transformer_encoder_block(x, params, num_head=NH,
                                  compute_dtype=jnp.float32, tq=8))
    assert jnp.allclose(out_tiled, ref, atol=2e-3, rtol=2e-3), (
        "tiled-path mismatch vs reference, max abs err = %e"
        % float(jnp.max(jnp.abs(out_tiled - ref))))

    # Default path: bf16 MXU inputs, f32 accumulation/softmax/LN/residuals.
    out_bf16 = jax.block_until_ready(
        transformer_encoder_block(x, params, num_head=NH))
    assert float(jnp.max(jnp.abs(out_bf16 - ref))) < 0.25, "bf16 path diverged"

    print("KERNEL_OK")
</pallas_src>

<mosaic_0001>
module attributes {stable_mosaic.version = 11 : i64} {
  func.func @_encoder_block_kernel_full(%arg0: i32, %arg1: memref<1x16x128xf32, #tpu.memory_space<vmem>>, %arg2: memref<128x384xf32, #tpu.memory_space<vmem>>, %arg3: memref<1x384xf32, #tpu.memory_space<vmem>>, %arg4: memref<128x128xf32, #tpu.memory_space<vmem>>, %arg5: memref<1x128xf32, #tpu.memory_space<vmem>>, %arg6: memref<1x128xf32, #tpu.memory_space<vmem>>, %arg7: memref<1x128xf32, #tpu.memory_space<vmem>>, %arg8: memref<128x256xf32, #tpu.memory_space<vmem>>, %arg9: memref<1x256xf32, #tpu.memory_space<vmem>>, %arg10: memref<256x128xf32, #tpu.memory_space<vmem>>, %arg11: memref<1x128xf32, #tpu.memory_space<vmem>>, %arg12: memref<1x128xf32, #tpu.memory_space<vmem>>, %arg13: memref<1x128xf32, #tpu.memory_space<vmem>>, %arg14: memref<1x16x128xf32, #tpu.memory_space<vmem>>) attributes {dimension_semantics = [#tpu.dimension_semantics<parallel>], iteration_bounds = array<i64: 2>, scalar_prefetch = 0 : i64, scratch_operands = 0 : i64, tpu.core_type = #tpu.core_type<tc>, window_params = [{transform_indices = @transform_0, window_bounds = array<i64: 1, 16, 128>}, {pipeline_mode = #tpu.pipeline_mode<synchronous>, transform_indices = @transform_1, window_bounds = array<i64: 128, 384>}, {pipeline_mode = #tpu.pipeline_mode<synchronous>, transform_indices = @transform_2, window_bounds = array<i64: 1, 384>}, {pipeline_mode = #tpu.pipeline_mode<synchronous>, transform_indices = @transform_3, window_bounds = array<i64: 128, 128>}, {pipeline_mode = #tpu.pipeline_mode<synchronous>, transform_indices = @transform_4, window_bounds = array<i64: 1, 128>}, {pipeline_mode = #tpu.pipeline_mode<synchronous>, transform_indices = @transform_5, window_bounds = array<i64: 1, 128>}, {pipeline_mode = #tpu.pipeline_mode<synchronous>, transform_indices = @transform_6, window_bounds = array<i64: 1, 128>}, {pipeline_mode = #tpu.pipeline_mode<synchronous>, transform_indices = @transform_7, window_bounds = array<i64: 128, 256>}, {pipeline_mode = #tpu.pipeline_mode<synchronous>, transform_indices = @transform_8, window_bounds = array<i64: 1, 256>}, {pipeline_mode = #tpu.pipeline_mode<synchronous>, transform_indices = @transform_9, window_bounds = array<i64: 256, 128>}, {pipeline_mode = #tpu.pipeline_mode<synchronous>, transform_indices = @transform_10, window_bounds = array<i64: 1, 128>}, {pipeline_mode = #tpu.pipeline_mode<synchronous>, transform_indices = @transform_11, window_bounds = array<i64: 1, 128>}, {pipeline_mode = #tpu.pipeline_mode<synchronous>, transform_indices = @transform_12, window_bounds = array<i64: 1, 128>}, {transform_indices = @transform_13, window_bounds = array<i64: 1, 16, 128>}]} {
    %c0 = arith.constant 0 : index
    %c0_0 = arith.constant 0 : index
    %c0_1 = arith.constant 0 : index
    %0 = vector.load %arg1[%c0, %c0_0, %c0_1] : memref<1x16x128xf32, #tpu.memory_space<vmem>>, vector<1x16x128xf32>
    %1 = vector.shape_cast %0 : vector<1x16x128xf32> to vector<16x128xf32>
    %c0_2 = arith.constant 0 : index
    %c0_3 = arith.constant 0 : index
    %2 = vector.load %arg2[%c0_2, %c0_3] : memref<128x384xf32, #tpu.memory_space<vmem>>, vector<128x384xf32>
    %cst = arith.constant dense<0.000000e+00> : vector<16x384xf32>
    %3 = tpu.matmul %1, %2, %cst {dimension_numbers = #tpu.dot_dimension_numbers<[1], [0], [0], [1], [0, 0, 1, 1], [], []>} : vector<16x128xf32>, vector<128x384xf32>, vector<16x384xf32> -> vector<16x384xf32>
    %c0_4 = arith.constant 0 : index
    %c0_5 = arith.constant 0 : index
    %4 = vector.load %arg3[%c0_4, %c0_5] : memref<1x384xf32, #tpu.memory_space<vmem>>, vector<1x384xf32>
    %5 = vector.broadcast %4 : vector<1x384xf32> to vector<16x384xf32>
    %6 = arith.addf %3, %5 : vector<16x384xf32>
    %7 = vector.extract_strided_slice %6 {offsets = [0, 0], sizes = [16, 128], strides = [1, 1]} : vector<16x384xf32> to vector<16x128xf32>
    %8 = vector.extract_strided_slice %6 {offsets = [0, 128], sizes = [16, 128], strides = [1, 1]} : vector<16x384xf32> to vector<16x128xf32>
    %9 = vector.shape_cast %8 : vector<16x128xf32> to vector<16x4x32xf32>
    %10 = tpu.transpose %9, [1, 0, 2] : vector<16x4x32xf32> -> vector<4x16x32xf32>
    %11 = vector.extract_strided_slice %6 {offsets = [0, 256], sizes = [16, 128], strides = [1, 1]} : vector<16x384xf32> to vector<16x128xf32>
    %12 = vector.shape_cast %11 : vector<16x128xf32> to vector<16x4x32xf32>
    %13 = tpu.transpose %12, [1, 0, 2] : vector<16x4x32xf32> -> vector<4x16x32xf32>
    %14 = vector.shape_cast %7 : vector<16x128xf32> to vector<16x4x32xf32>
    %15 = tpu.transpose %14, [1, 0, 2] : vector<16x4x32xf32> -> vector<4x16x32xf32>
    "tpu.trace_start"() <{level = 10 : i32, message = "hqd,hkd->hqk"}> : () -> ()
    %cst_6 = arith.constant dense<0.000000e+00> : vector<4x16x16xf32>
    %16 = tpu.matmul %15, %10, %cst_6 {dimension_numbers = #tpu.dot_dimension_numbers<[2], [2], [1], [1], [0, 0, 0, 1, 1, 1], [0], [0]>} : vector<4x16x32xf32>, vector<4x16x32xf32>, vector<4x16x16xf32> -> vector<4x16x16xf32>
    "tpu.trace_stop"() : () -> ()
    %cst_7 = arith.constant dense<0xFF800000> : vector<4x16xf32>
    %17 = vector.multi_reduction <maximumf>, %16, %cst_7 [2] : vector<4x16x16xf32> to vector<4x16xf32>
    %18 = vector.shape_cast %17 : vector<4x16xf32> to vector<4x16x1xf32>
    %19 = vector.broadcast %18 : vector<4x16x1xf32> to vector<4x16x16xf32>
    %20 = arith.subf %16, %19 : vector<4x16x16xf32>
    %21 = math.exp %20 : vector<4x16x16xf32>
    %cst_8 = arith.constant dense<0.000000e+00> : vector<4x16xf32>
    %22 = vector.multi_reduction <add>, %21, %cst_8 [2] : vector<4x16x16xf32> to vector<4x16xf32>
    %23 = vector.shape_cast %22 : vector<4x16xf32> to vector<4x16x1xf32>
    %24 = tpu.reciprocal %23 {approx = true} : vector<4x16x1xf32> -> vector<4x16x1xf32>
    %25 = vector.broadcast %24 : vector<4x16x1xf32> to vector<4x16x16xf32>
    %26 = arith.mulf %21, %25 : vector<4x16x16xf32>
    "tpu.trace_start"() <{level = 10 : i32, message = "hqk,hkd->hqd"}> : () -> ()
    %cst_9 = arith.constant dense<0.000000e+00> : vector<4x16x32xf32>
    %27 = tpu.matmul %26, %13, %cst_9 {dimension_numbers = #tpu.dot_dimension_numbers<[2], [1], [1], [2], [0, 0, 0, 1, 1, 2], [0], [0]>} : vector<4x16x16xf32>, vector<4x16x32xf32>, vector<4x16x32xf32> -> vector<4x16x32xf32>
    "tpu.trace_stop"() : () -> ()
    %28 = tpu.transpose %27, [1, 0, 2] : vector<4x16x32xf32> -> vector<16x4x32xf32>
    %29 = vector.shape_cast %28 : vector<16x4x32xf32> to vector<16x128xf32>
    %c0_10 = arith.constant 0 : index
    %c0_11 = arith.constant 0 : index
    %30 = vector.load %arg4[%c0_10, %c0_11] : memref<128x128xf32, #tpu.memory_space<vmem>>, vector<128x128xf32>
    %cst_12 = arith.constant dense<0.000000e+00> : vector<16x128xf32>
    %31 = tpu.matmul %29, %30, %cst_12 {dimension_numbers = #tpu.dot_dimension_numbers<[1], [0], [0], [1], [0, 0, 1, 1], [], []>} : vector<16x128xf32>, vector<128x128xf32>, vector<16x128xf32> -> vector<16x128xf32>
    %c0_13 = arith.constant 0 : index
    %c0_14 = arith.constant 0 : index
    %32 = vector.load %arg5[%c0_13, %c0_14] : memref<1x128xf32, #tpu.memory_space<vmem>>, vector<1x128xf32>
    %33 = vector.broadcast %32 : vector<1x128xf32> to vector<16x128xf32>
    %34 = arith.addf %31, %33 : vector<16x128xf32>
    %35 = arith.addf %1, %34 : vector<16x128xf32>
    %c0_15 = arith.constant 0 : index
    %c0_16 = arith.constant 0 : index
    %36 = vector.load %arg6[%c0_15, %c0_16] : memref<1x128xf32, #tpu.memory_space<vmem>>, vector<1x128xf32>
    %c0_17 = arith.constant 0 : index
    %c0_18 = arith.constant 0 : index
    %37 = vector.load %arg7[%c0_17, %c0_18] : memref<1x128xf32, #tpu.memory_space<vmem>>, vector<1x128xf32>
    %cst_19 = arith.constant dense<0.000000e+00> : vector<16xf32>
    %38 = vector.multi_reduction <add>, %35, %cst_19 [1] : vector<16x128xf32> to vector<16xf32>
    %39 = vector.shape_cast %38 : vector<16xf32> to vector<16x1xf32>
    %cst_20 = arith.constant 1.280000e+02 : f32
    %40 = vector.broadcast %cst_20 : f32 to vector<16x1xf32>
    %41 = arith.divf %39, %40 : vector<16x1xf32>
    %42 = vector.broadcast %41 : vector<16x1xf32> to vector<16x128xf32>
    %43 = arith.subf %35, %42 : vector<16x128xf32>
    %44 = arith.mulf %43, %43 : vector<16x128xf32>
    %cst_21 = arith.constant dense<0.000000e+00> : vector<16xf32>
    %45 = vector.multi_reduction <add>, %44, %cst_21 [1] : vector<16x128xf32> to vector<16xf32>
    %46 = vector.shape_cast %45 : vector<16xf32> to vector<16x1xf32>
    %cst_22 = arith.constant 1.280000e+02 : f32
    %47 = vector.broadcast %cst_22 : f32 to vector<16x1xf32>
    %48 = arith.divf %46, %47 : vector<16x1xf32>
    %49 = vector.broadcast %41 : vector<16x1xf32> to vector<16x128xf32>
    %50 = arith.subf %35, %49 : vector<16x128xf32>
    %cst_23 = arith.constant 9.99999974E-6 : f32
    %51 = vector.broadcast %cst_23 : f32 to vector<16x1xf32>
    %52 = arith.addf %48, %51 : vector<16x1xf32>
    %53 = math.rsqrt %52 : vector<16x1xf32>
    %54 = vector.broadcast %53 : vector<16x1xf32> to vector<16x128xf32>
    %55 = arith.mulf %50, %54 : vector<16x128xf32>
    %56 = vector.broadcast %36 : vector<1x128xf32> to vector<16x128xf32>
    %57 = arith.mulf %55, %56 : vector<16x128xf32>
    %58 = vector.broadcast %37 : vector<1x128xf32> to vector<16x128xf32>
    %59 = arith.addf %57, %58 : vector<16x128xf32>
    %c0_24 = arith.constant 0 : index
    %c0_25 = arith.constant 0 : index
    %60 = vector.load %arg8[%c0_24, %c0_25] : memref<128x256xf32, #tpu.memory_space<vmem>>, vector<128x256xf32>
    %cst_26 = arith.constant dense<0.000000e+00> : vector<16x256xf32>
    %61 = tpu.matmul %59, %60, %cst_26 {dimension_numbers = #tpu.dot_dimension_numbers<[1], [0], [0], [1], [0, 0, 1, 1], [], []>} : vector<16x128xf32>, vector<128x256xf32>, vector<16x256xf32> -> vector<16x256xf32>
    %c0_27 = arith.constant 0 : index
    %c0_28 = arith.constant 0 : index
    %62 = vector.load %arg9[%c0_27, %c0_28] : memref<1x256xf32, #tpu.memory_space<vmem>>, vector<1x256xf32>
    %63 = vector.broadcast %62 : vector<1x256xf32> to vector<16x256xf32>
    %64 = arith.addf %61, %63 : vector<16x256xf32>
    %cst_29 = arith.constant 0.000000e+00 : f32
    %65 = vector.broadcast %cst_29 : f32 to vector<16x256xf32>
    %66 = arith.maximumf %64, %65 : vector<16x256xf32>
    %c0_30 = arith.constant 0 : index
    %c0_31 = arith.constant 0 : index
    %67 = vector.load %arg10[%c0_30, %c0_31] : memref<256x128xf32, #tpu.memory_space<vmem>>, vector<256x128xf32>
    %cst_32 = arith.constant dense<0.000000e+00> : vector<16x128xf32>
    %68 = tpu.matmul %66, %67, %cst_32 {dimension_numbers = #tpu.dot_dimension_numbers<[1], [0], [0], [1], [0, 0, 1, 1], [], []>} : vector<16x256xf32>, vector<256x128xf32>, vector<16x128xf32> -> vector<16x128xf32>
    %c0_33 = arith.constant 0 : index
    %c0_34 = arith.constant 0 : index
    %69 = vector.load %arg11[%c0_33, %c0_34] : memref<1x128xf32, #tpu.memory_space<vmem>>, vector<1x128xf32>
    %70 = vector.broadcast %69 : vector<1x128xf32> to vector<16x128xf32>
    %71 = arith.addf %68, %70 : vector<16x128xf32>
    %72 = arith.addf %59, %71 : vector<16x128xf32>
    %c0_35 = arith.constant 0 : index
    %c0_36 = arith.constant 0 : index
    %73 = vector.load %arg12[%c0_35, %c0_36] : memref<1x128xf32, #tpu.memory_space<vmem>>, vector<1x128xf32>
    %c0_37 = arith.constant 0 : index
    %c0_38 = arith.constant 0 : index
    %74 = vector.load %arg13[%c0_37, %c0_38] : memref<1x128xf32, #tpu.memory_space<vmem>>, vector<1x128xf32>
    %cst_39 = arith.constant dense<0.000000e+00> : vector<16xf32>
    %75 = vector.multi_reduction <add>, %72, %cst_39 [1] : vector<16x128xf32> to vector<16xf32>
    %76 = vector.shape_cast %75 : vector<16xf32> to vector<16x1xf32>
    %cst_40 = arith.constant 1.280000e+02 : f32
    %77 = vector.broadcast %cst_40 : f32 to vector<16x1xf32>
    %78 = arith.divf %76, %77 : vector<16x1xf32>
    %79 = vector.broadcast %78 : vector<16x1xf32> to vector<16x128xf32>
    %80 = arith.subf %72, %79 : vector<16x128xf32>
    %81 = arith.mulf %80, %80 : vector<16x128xf32>
    %cst_41 = arith.constant dense<0.000000e+00> : vector<16xf32>
    %82 = vector.multi_reduction <add>, %81, %cst_41 [1] : vector<16x128xf32> to vector<16xf32>
    %83 = vector.shape_cast %82 : vector<16xf32> to vector<16x1xf32>
    %cst_42 = arith.constant 1.280000e+02 : f32
    %84 = vector.broadcast %cst_42 : f32 to vector<16x1xf32>
    %85 = arith.divf %83, %84 : vector<16x1xf32>
    %86 = vector.broadcast %78 : vector<16x1xf32> to vector<16x128xf32>
    %87 = arith.subf %72, %86 : vector<16x128xf32>
    %cst_43 = arith.constant 9.99999974E-6 : f32
    %88 = vector.broadcast %cst_43 : f32 to vector<16x1xf32>
    %89 = arith.addf %85, %88 : vector<16x1xf32>
    %90 = math.rsqrt %89 : vector<16x1xf32>
    %91 = vector.broadcast %90 : vector<16x1xf32> to vector<16x128xf32>
    %92 = arith.mulf %87, %91 : vector<16x128xf32>
    %93 = vector.broadcast %73 : vector<1x128xf32> to vector<16x128xf32>
    %94 = arith.mulf %92, %93 : vector<16x128xf32>
    %95 = vector.broadcast %74 : vector<1x128xf32> to vector<16x128xf32>
    %96 = arith.addf %94, %95 : vector<16x128xf32>
    %c0_44 = arith.constant 0 : index
    %c0_45 = arith.constant 0 : index
    %c0_46 = arith.constant 0 : index
    %97 = vector.load %arg14[%c0_44, %c0_45, %c0_46] : memref<1x16x128xf32, #tpu.memory_space<vmem>>, vector<1x16x128xf32>
    %98 = vector.shape_cast %97 : vector<1x16x128xf32> to vector<16x128xf32>
    %99 = vector.shape_cast %96 : vector<16x128xf32> to vector<1x16x128xf32>
    tpu.vector_store %arg14[%c0_44, %c0_45, %c0_46], %99 {strides = array<i32>} : memref<1x16x128xf32, #tpu.memory_space<vmem>>, vector<1x16x128xf32>,
    return
  }
  func.func @transform_0(%arg0: i32) -> (i32, i32, i32) {
    %c0_i32 = arith.constant 0 : i32
    %c0_i32_0 = arith.constant 0 : i32
    %c0_i32_1 = arith.constant 0 : i32
    return %arg0, %c0_i32, %c0_i32_0 : i32, i32, i32
  }
  func.func @transform_1(%arg0: i32) -> (i32, i32) {
    %c0_i32 = arith.constant 0 : i32
    %c0_i32_0 = arith.constant 0 : i32
    %c0_i32_1 = arith.constant 0 : i32
    return %c0_i32, %c0_i32_0 : i32, i32
  }
  func.func @transform_2(%arg0: i32) -> (i32, i32) {
    %c0_i32 = arith.constant 0 : i32
    %c0_i32_0 = arith.constant 0 : i32
    %c0_i32_1 = arith.constant 0 : i32
    return %c0_i32, %c0_i32_0 : i32, i32
  }
  func.func @transform_3(%arg0: i32) -> (i32, i32) {
    %c0_i32 = arith.constant 0 : i32
    %c0_i32_0 = arith.constant 0 : i32
    %c0_i32_1 = arith.constant 0 : i32
    return %c0_i32, %c0_i32_0 : i32, i32
  }
  func.func @transform_4(%arg0: i32) -> (i32, i32) {
    %c0_i32 = arith.constant 0 : i32
    %c0_i32_0 = arith.constant 0 : i32
    %c0_i32_1 = arith.constant 0 : i32
    return %c0_i32, %c0_i32_0 : i32, i32
  }
  func.func @transform_5(%arg0: i32) -> (i32, i32) {
    %c0_i32 = arith.constant 0 : i32
    %c0_i32_0 = arith.constant 0 : i32
    %c0_i32_1 = arith.constant 0 : i32
    return %c0_i32, %c0_i32_0 : i32, i32
  }
  func.func @transform_6(%arg0: i32) -> (i32, i32) {
    %c0_i32 = arith.constant 0 : i32
    %c0_i32_0 = arith.constant 0 : i32
    %c0_i32_1 = arith.constant 0 : i32
    return %c0_i32, %c0_i32_0 : i32, i32
  }
  func.func @transform_7(%arg0: i32) -> (i32, i32) {
    %c0_i32 = arith.constant 0 : i32
    %c0_i32_0 = arith.constant 0 : i32
    %c0_i32_1 = arith.constant 0 : i32
    return %c0_i32, %c0_i32_0 : i32, i32
  }
  func.func @transform_8(%arg0: i32) -> (i32, i32) {
    %c0_i32 = arith.constant 0 : i32
    %c0_i32_0 = arith.constant 0 : i32
    %c0_i32_1 = arith.constant 0 : i32
    return %c0_i32, %c0_i32_0 : i32, i32
  }
  func.func @transform_9(%arg0: i32) -> (i32, i32) {
    %c0_i32 = arith.constant 0 : i32
    %c0_i32_0 = arith.constant 0 : i32
    %c0_i32_1 = arith.constant 0 : i32
    return %c0_i32, %c0_i32_0 : i32, i32
  }
  func.func @transform_10(%arg0: i32) -> (i32, i32) {
    %c0_i32 = arith.constant 0 : i32
    %c0_i32_0 = arith.constant 0 : i32
    %c0_i32_1 = arith.constant 0 : i32
    return %c0_i32, %c0_i32_0 : i32, i32
  }
  func.func @transform_11(%arg0: i32) -> (i32, i32) {
    %c0_i32 = arith.constant 0 : i32
    %c0_i32_0 = arith.constant 0 : i32
    %c0_i32_1 = arith.constant 0 : i32
    return %c0_i32, %c0_i32_0 : i32, i32
  }
  func.func @transform_12(%arg0: i32) -> (i32, i32) {
    %c0_i32 = arith.constant 0 : i32
    %c0_i32_0 = arith.constant 0 : i32
    %c0_i32_1 = arith.constant 0 : i32
    return %c0_i32, %c0_i32_0 : i32, i32
  }
  func.func @transform_13(%arg0: i32) -> (i32, i32, i32) {
    %c0_i32 = arith.constant 0 : i32
    %c0_i32_0 = arith.constant 0 : i32
    %c0_i32_1 = arith.constant 0 : i32
    return %arg0, %c0_i32, %c0_i32_0 : i32, i32, i32
  }
}

module attributes {stable_mosaic.version = 11 : i64} {
  func.func @_encoder_block_kernel_full(%arg0: i32, %arg1: memref<1x16x128xf32, #tpu.memory_space<vmem>>, %arg2: memref<128x384xf32, #tpu.memory_space<vmem>>, %arg3: memref<1x384xf32, #tpu.memory_space<vmem>>, %arg4: memref<128x128xf32, #tpu.memory_space<vmem>>, %arg5: memref<1x128xf32, #tpu.memory_space<vmem>>, %arg6: memref<1x128xf32, #tpu.memory_space<vmem>>, %arg7: memref<1x128xf32, #tpu.memory_space<vmem>>, %arg8: memref<128x256xf32, #tpu.memory_space<vmem>>, %arg9: memref<1x256xf32, #tpu.memory_space<vmem>>, %arg10: memref<256x128xf32, #tpu.memory_space<vmem>>, %arg11: memref<1x128xf32, #tpu.memory_space<vmem>>, %arg12: memref<1x128xf32, #tpu.memory_space<vmem>>, %arg13: memref<1x128xf32, #tpu.memory_space<vmem>>, %arg14: memref<1x16x128xf32, #tpu.memory_space<vmem>>) attributes {dimension_semantics = [#tpu.dimension_semantics<parallel>], iteration_bounds = array<i64: 2>, scalar_prefetch = 0 : i64, scratch_operands = 0 : i64, tpu.core_type = #tpu.core_type<tc>, window_params = [{transform_indices = @transform_0, window_bounds = array<i64: 1, 16, 128>}, {pipeline_mode = #tpu.pipeline_mode<synchronous>, transform_indices = @transform_1, window_bounds = array<i64: 128, 384>}, {pipeline_mode = #tpu.pipeline_mode<synchronous>, transform_indices = @transform_2, window_bounds = array<i64: 1, 384>}, {pipeline_mode = #tpu.pipeline_mode<synchronous>, transform_indices = @transform_3, window_bounds = array<i64: 128, 128>}, {pipeline_mode = #tpu.pipeline_mode<synchronous>, transform_indices = @transform_4, window_bounds = array<i64: 1, 128>}, {pipeline_mode = #tpu.pipeline_mode<synchronous>, transform_indices = @transform_5, window_bounds = array<i64: 1, 128>}, {pipeline_mode = #tpu.pipeline_mode<synchronous>, transform_indices = @transform_6, window_bounds = array<i64: 1, 128>}, {pipeline_mode = #tpu.pipeline_mode<synchronous>, transform_indices = @transform_7, window_bounds = array<i64: 128, 256>}, {pipeline_mode = #tpu.pipeline_mode<synchronous>, transform_indices = @transform_8, window_bounds = array<i64: 1, 256>}, {pipeline_mode = #tpu.pipeline_mode<synchronous>, transform_indices = @transform_9, window_bounds = array<i64: 256, 128>}, {pipeline_mode = #tpu.pipeline_mode<synchronous>, transform_indices = @transform_10, window_bounds = array<i64: 1, 128>}, {pipeline_mode = #tpu.pipeline_mode<synchronous>, transform_indices = @transform_11, window_bounds = array<i64: 1, 128>}, {pipeline_mode = #tpu.pipeline_mode<synchronous>, transform_indices = @transform_12, window_bounds = array<i64: 1, 128>}, {transform_indices = @transform_13, window_bounds = array<i64: 1, 16, 128>}]} {
    %c0 = arith.constant 0 : index
    %c0_0 = arith.constant 0 : index
    %c0_1 = arith.constant 0 : index
    %0 = vector.load %arg1[%c0, %c0_0, %c0_1] : memref<1x16x128xf32, #tpu.memory_space<vmem>>, vector<1x16x128xf32>
    %1 = vector.shape_cast %0 : vector<1x16x128xf32> to vector<16x128xf32>
    %c0_2 = arith.constant 0 : index
    %c0_3 = arith.constant 0 : index
    %2 = vector.load %arg2[%c0_2, %c0_3] : memref<128x384xf32, #tpu.memory_space<vmem>>, vector<128x384xf32>
    %cst = arith.constant dense<0.000000e+00> : vector<16x384xf32>
    %3 = tpu.matmul %1, %2, %cst {dimension_numbers = #tpu.dot_dimension_numbers<[1], [0], [0], [1], [0, 0, 1, 1], [], []>} : vector<16x128xf32>, vector<128x384xf32>, vector<16x384xf32> -> vector<16x384xf32>
    %c0_4 = arith.constant 0 : index
    %c0_5 = arith.constant 0 : index
    %4 = vector.load %arg3[%c0_4, %c0_5] : memref<1x384xf32, #tpu.memory_space<vmem>>, vector<1x384xf32>
    %5 = vector.broadcast %4 : vector<1x384xf32> to vector<16x384xf32>
    %6 = arith.addf %3, %5 : vector<16x384xf32>
    %7 = vector.extract_strided_slice %6 {offsets = [0, 0], sizes = [16, 128], strides = [1, 1]} : vector<16x384xf32> to vector<16x128xf32>
    %8 = vector.extract_strided_slice %6 {offsets = [0, 128], sizes = [16, 128], strides = [1, 1]} : vector<16x384xf32> to vector<16x128xf32>
    %9 = vector.shape_cast %8 : vector<16x128xf32> to vector<16x4x32xf32>
    %10 = tpu.transpose %9, [1, 0, 2] : vector<16x4x32xf32> -> vector<4x16x32xf32>
    %11 = vector.extract_strided_slice %6 {offsets = [0, 256], sizes = [16, 128], strides = [1, 1]} : vector<16x384xf32> to vector<16x128xf32>
    %12 = vector.shape_cast %11 : vector<16x128xf32> to vector<16x4x32xf32>
    %13 = tpu.transpose %12, [1, 0, 2] : vector<16x4x32xf32> -> vector<4x16x32xf32>
    %14 = vector.shape_cast %7 : vector<16x128xf32> to vector<16x4x32xf32>
    %15 = tpu.transpose %14, [1, 0, 2] : vector<16x4x32xf32> -> vector<4x16x32xf32>
    "tpu.trace_start"() <{level = 10 : i32, message = "hqd,hkd->hqk"}> : () -> ()
    %cst_6 = arith.constant dense<0.000000e+00> : vector<4x16x16xf32>
    %16 = tpu.matmul %15, %10, %cst_6 {dimension_numbers = #tpu.dot_dimension_numbers<[2], [2], [1], [1], [0, 0, 0, 1, 1, 1], [0], [0]>} : vector<4x16x32xf32>, vector<4x16x32xf32>, vector<4x16x16xf32> -> vector<4x16x16xf32>
    "tpu.trace_stop"() : () -> ()
    %cst_7 = arith.constant dense<0xFF800000> : vector<4x16xf32>
    %17 = vector.multi_reduction <maximumf>, %16, %cst_7 [2] : vector<4x16x16xf32> to vector<4x16xf32>
    %18 = vector.shape_cast %17 : vector<4x16xf32> to vector<4x16x1xf32>
    %19 = vector.broadcast %18 : vector<4x16x1xf32> to vector<4x16x16xf32>
    %20 = arith.subf %16, %19 : vector<4x16x16xf32>
    %21 = math.exp %20 : vector<4x16x16xf32>
    %cst_8 = arith.constant dense<0.000000e+00> : vector<4x16xf32>
    %22 = vector.multi_reduction <add>, %21, %cst_8 [2] : vector<4x16x16xf32> to vector<4x16xf32>
    %23 = vector.shape_cast %22 : vector<4x16xf32> to vector<4x16x1xf32>
    %24 = tpu.reciprocal %23 {approx = true} : vector<4x16x1xf32> -> vector<4x16x1xf32>
    %25 = vector.broadcast %24 : vector<4x16x1xf32> to vector<4x16x16xf32>
    %26 = arith.mulf %21, %25 : vector<4x16x16xf32>
    "tpu.trace_start"() <{level = 10 : i32, message = "hqk,hkd->hqd"}> : () -> ()
    %cst_9 = arith.constant dense<0.000000e+00> : vector<4x16x32xf32>
    %27 = tpu.matmul %26, %13, %cst_9 {dimension_numbers = #tpu.dot_dimension_numbers<[2], [1], [1], [2], [0, 0, 0, 1, 1, 2], [0], [0]>} : vector<4x16x16xf32>, vector<4x16x32xf32>, vector<4x16x32xf32> -> vector<4x16x32xf32>
    "tpu.trace_stop"() : () -> ()
    %28 = tpu.transpose %27, [1, 0, 2] : vector<4x16x32xf32> -> vector<16x4x32xf32>
    %29 = vector.shape_cast %28 : vector<16x4x32xf32> to vector<16x128xf32>
    %c0_10 = arith.constant 0 : index
    %c0_11 = arith.constant 0 : index
    %30 = vector.load %arg4[%c0_10, %c0_11] : memref<128x128xf32, #tpu.memory_space<vmem>>, vector<128x128xf32>
    %cst_12 = arith.constant dense<0.000000e+00> : vector<16x128xf32>
    %31 = tpu.matmul %29, %30, %cst_12 {dimension_numbers = #tpu.dot_dimension_numbers<[1], [0], [0], [1], [0, 0, 1, 1], [], []>} : vector<16x128xf32>, vector<128x128xf32>, vector<16x128xf32> -> vector<16x128xf32>
    %c0_13 = arith.constant 0 : index
    %c0_14 = arith.constant 0 : index
    %32 = vector.load %arg5[%c0_13, %c0_14] : memref<1x128xf32, #tpu.memory_space<vmem>>, vector<1x128xf32>
    %33 = vector.broadcast %32 : vector<1x128xf32> to vector<16x128xf32>
    %34 = arith.addf %31, %33 : vector<16x128xf32>
    %35 = arith.addf %1, %34 : vector<16x128xf32>
    %c0_15 = arith.constant 0 : index
    %c0_16 = arith.constant 0 : index
    %36 = vector.load %arg6[%c0_15, %c0_16] : memref<1x128xf32, #tpu.memory_space<vmem>>, vector<1x128xf32>
    %c0_17 = arith.constant 0 : index
    %c0_18 = arith.constant 0 : index
    %37 = vector.load %arg7[%c0_17, %c0_18] : memref<1x128xf32, #tpu.memory_space<vmem>>, vector<1x128xf32>
    %cst_19 = arith.constant dense<0.000000e+00> : vector<16xf32>
    %38 = vector.multi_reduction <add>, %35, %cst_19 [1] : vector<16x128xf32> to vector<16xf32>
    %39 = vector.shape_cast %38 : vector<16xf32> to vector<16x1xf32>
    %cst_20 = arith.constant 1.280000e+02 : f32
    %40 = vector.broadcast %cst_20 : f32 to vector<16x1xf32>
    %41 = arith.divf %39, %40 : vector<16x1xf32>
    %42 = vector.broadcast %41 : vector<16x1xf32> to vector<16x128xf32>
    %43 = arith.subf %35, %42 : vector<16x128xf32>
    %44 = arith.mulf %43, %43 : vector<16x128xf32>
    %cst_21 = arith.constant dense<0.000000e+00> : vector<16xf32>
    %45 = vector.multi_reduction <add>, %44, %cst_21 [1] : vector<16x128xf32> to vector<16xf32>
    %46 = vector.shape_cast %45 : vector<16xf32> to vector<16x1xf32>
    %cst_22 = arith.constant 1.280000e+02 : f32
    %47 = vector.broadcast %cst_22 : f32 to vector<16x1xf32>
    %48 = arith.divf %46, %47 : vector<16x1xf32>
    %49 = vector.broadcast %41 : vector<16x1xf32> to vector<16x128xf32>
    %50 = arith.subf %35, %49 : vector<16x128xf32>
    %cst_23 = arith.constant 9.99999974E-6 : f32
    %51 = vector.broadcast %cst_23 : f32 to vector<16x1xf32>
    %52 = arith.addf %48, %51 : vector<16x1xf32>
    %53 = math.rsqrt %52 : vector<16x1xf32>
    %54 = vector.broadcast %53 : vector<16x1xf32> to vector<16x128xf32>
    %55 = arith.mulf %50, %54 : vector<16x128xf32>
    %56 = vector.broadcast %36 : vector<1x128xf32> to vector<16x128xf32>
    %57 = arith.mulf %55, %56 : vector<16x128xf32>
    %58 = vector.broadcast %37 : vector<1x128xf32> to vector<16x128xf32>
    %59 = arith.addf %57, %58 : vector<16x128xf32>
    %c0_24 = arith.constant 0 : index
    %c0_25 = arith.constant 0 : index
    %60 = vector.load %arg8[%c0_24, %c0_25] : memref<128x256xf32, #tpu.memory_space<vmem>>, vector<128x256xf32>
    %cst_26 = arith.constant dense<0.000000e+00> : vector<16x256xf32>
    %61 = tpu.matmul %59, %60, %cst_26 {dimension_numbers = #tpu.dot_dimension_numbers<[1], [0], [0], [1], [0, 0, 1, 1], [], []>} : vector<16x128xf32>, vector<128x256xf32>, vector<16x256xf32> -> vector<16x256xf32>
    %c0_27 = arith.constant 0 : index
    %c0_28 = arith.constant 0 : index
    %62 = vector.load %arg9[%c0_27, %c0_28] : memref<1x256xf32, #tpu.memory_space<vmem>>, vector<1x256xf32>
    %63 = vector.broadcast %62 : vector<1x256xf32> to vector<16x256xf32>
    %64 = arith.addf %61, %63 : vector<16x256xf32>
    %cst_29 = arith.constant 0.000000e+00 : f32
    %65 = vector.broadcast %cst_29 : f32 to vector<16x256xf32>
    %66 = arith.maximumf %64, %65 : vector<16x256xf32>
    %c0_30 = arith.constant 0 : index
    %c0_31 = arith.constant 0 : index
    %67 = vector.load %arg10[%c0_30, %c0_31] : memref<256x128xf32, #tpu.memory_space<vmem>>, vector<256x128xf32>
    %cst_32 = arith.constant dense<0.000000e+00> : vector<16x128xf32>
    %68 = tpu.matmul %66, %67, %cst_32 {dimension_numbers = #tpu.dot_dimension_numbers<[1], [0], [0], [1], [0, 0, 1, 1], [], []>} : vector<16x256xf32>, vector<256x128xf32>, vector<16x128xf32> -> vector<16x128xf32>
    %c0_33 = arith.constant 0 : index
    %c0_34 = arith.constant 0 : index
    %69 = vector.load %arg11[%c0_33, %c0_34] : memref<1x128xf32, #tpu.memory_space<vmem>>, vector<1x128xf32>
    %70 = vector.broadcast %69 : vector<1x128xf32> to vector<16x128xf32>
    %71 = arith.addf %68, %70 : vector<16x128xf32>
    %72 = arith.addf %59, %71 : vector<16x128xf32>
    %c0_35 = arith.constant 0 : index
    %c0_36 = arith.constant 0 : index
    %73 = vector.load %arg12[%c0_35, %c0_36] : memref<1x128xf32, #tpu.memory_space<vmem>>, vector<1x128xf32>
    %c0_37 = arith.constant 0 : index
    %c0_38 = arith.constant 0 : index
    %74 = vector.load %arg13[%c0_37, %c0_38] : memref<1x128xf32, #tpu.memory_space<vmem>>, vector<1x128xf32>
    %cst_39 = arith.constant dense<0.000000e+00> : vector<16xf32>
    %75 = vector.multi_reduction <add>, %72, %cst_39 [1] : vector<16x128xf32> to vector<16xf32>
    %76 = vector.shape_cast %75 : vector<16xf32> to vector<16x1xf32>
    %cst_40 = arith.constant 1.280000e+02 : f32
    %77 = vector.broadcast %cst_40 : f32 to vector<16x1xf32>
    %78 = arith.divf %76, %77 : vector<16x1xf32>
    %79 = vector.broadcast %78 : vector<16x1xf32> to vector<16x128xf32>
    %80 = arith.subf %72, %79 : vector<16x128xf32>
    %81 = arith.mulf %80, %80 : vector<16x128xf32>
    %cst_41 = arith.constant dense<0.000000e+00> : vector<16xf32>
    %82 = vector.multi_reduction <add>, %81, %cst_41 [1] : vector<16x128xf32> to vector<16xf32>
    %83 = vector.shape_cast %82 : vector<16xf32> to vector<16x1xf32>
    %cst_42 = arith.constant 1.280000e+02 : f32
    %84 = vector.broadcast %cst_42 : f32 to vector<16x1xf32>
    %85 = arith.divf %83, %84 : vector<16x1xf32>
    %86 = vector.broadcast %78 : vector<16x1xf32> to vector<16x128xf32>
    %87 = arith.subf %72, %86 : vector<16x128xf32>
    %cst_43 = arith.constant 9.99999974E-6 : f32
    %88 = vector.broadcast %cst_43 : f32 to vector<16x1xf32>
    %89 = arith.addf %85, %88 : vector<16x1xf32>
    %90 = math.rsqrt %89 : vector<16x1xf32>
    %91 = vector.broadcast %90 : vector<16x1xf32> to vector<16x128xf32>
    %92 = arith.mulf %87, %91 : vector<16x128xf32>
    %93 = vector.broadcast %73 : vector<1x128xf32> to vector<16x128xf32>
    %94 = arith.mulf %92, %93 : vector<16x128xf32>
    %95 = vector.broadcast %74 : vector<1x128xf32> to vector<16x128xf32>
    %96 = arith.addf %94, %95 : vector<16x128xf32>
    %c0_44 = arith.constant 0 : index
    %c0_45 = arith.constant 0 : index
    %c0_46 = arith.constant 0 : index
    %97 = vector.load %arg14[%c0_44, %c0_45, %c0_46] : memref<1x16x128xf32, #tpu.memory_space<vmem>>, vector<1x16x128xf32>
    %98 = vector.shape_cast %97 : vector<1x16x128xf32> to vector<16x128xf32>
    %99 = vector.shape_cast %96 : vector<16x128xf32> to vector<1x16x128xf32>
    tpu.vector_store %arg14[%c0_44, %c0_45, %c0_46], %99 {strides = array<i32>} : memref<1x16x128xf32, #tpu.memory_space<vmem>>, vector<1x16x128xf32>,
    return
  }
  func.func @transform_0(%arg0: i32) -> (i32, i32, i32) {
    %c0_i32 = arith.constant 0 : i32
    %c0_i32_0 = arith.constant 0 : i32
    %c0_i32_1 = arith.constant 0 : i32
    return %arg0, %c0_i32, %c0_i32_0 : i32, i32, i32
  }
  func.func @transform_1(%arg0: i32) -> (i32, i32) {
    %c0_i32 = arith.constant 0 : i32
    %c0_i32_0 = arith.constant 0 : i32
    %c0_i32_1 = arith.constant 0 : i32
    return %c0_i32, %c0_i32_0 : i32, i32
  }
  func.func @transform_2(%arg0: i32) -> (i32, i32) {
    %c0_i32 = arith.constant 0 : i32
    %c0_i32_0 = arith.constant 0 : i32
    %c0_i32_1 = arith.constant 0 : i32
    return %c0_i32, %c0_i32_0 : i32, i32
  }
  func.func @transform_3(%arg0: i32) -> (i32, i32) {
    %c0_i32 = arith.constant 0 : i32
    %c0_i32_0 = arith.constant 0 : i32
    %c0_i32_1 = arith.constant 0 : i32
    return %c0_i32, %c0_i32_0 : i32, i32
  }
  func.func @transform_4(%arg0: i32) -> (i32, i32) {
    %c0_i32 = arith.constant 0 : i32
    %c0_i32_0 = arith.constant 0 : i32
    %c0_i32_1 = arith.constant 0 : i32
    return %c0_i32, %c0_i32_0 : i32, i32
  }
  func.func @transform_5(%arg0: i32) -> (i32, i32) {
    %c0_i32 = arith.constant 0 : i32
    %c0_i32_0 = arith.constant 0 : i32
    %c0_i32_1 = arith.constant 0 : i32
    return %c0_i32, %c0_i32_0 : i32, i32
  }
  func.func @transform_6(%arg0: i32) -> (i32, i32) {
    %c0_i32 = arith.constant 0 : i32
    %c0_i32_0 = arith.constant 0 : i32
    %c0_i32_1 = arith.constant 0 : i32
    return %c0_i32, %c0_i32_0 : i32, i32
  }
  func.func @transform_7(%arg0: i32) -> (i32, i32) {
    %c0_i32 = arith.constant 0 : i32
    %c0_i32_0 = arith.constant 0 : i32
    %c0_i32_1 = arith.constant 0 : i32
    return %c0_i32, %c0_i32_0 : i32, i32
  }
  func.func @transform_8(%arg0: i32) -> (i32, i32) {
    %c0_i32 = arith.constant 0 : i32
    %c0_i32_0 = arith.constant 0 : i32
    %c0_i32_1 = arith.constant 0 : i32
    return %c0_i32, %c0_i32_0 : i32, i32
  }
  func.func @transform_9(%arg0: i32) -> (i32, i32) {
    %c0_i32 = arith.constant 0 : i32
    %c0_i32_0 = arith.constant 0 : i32
    %c0_i32_1 = arith.constant 0 : i32
    return %c0_i32, %c0_i32_0 : i32, i32
  }
  func.func @transform_10(%arg0: i32) -> (i32, i32) {
    %c0_i32 = arith.constant 0 : i32
    %c0_i32_0 = arith.constant 0 : i32
    %c0_i32_1 = arith.constant 0 : i32
    return %c0_i32, %c0_i32_0 : i32, i32
  }
  func.func @transform_11(%arg0: i32) -> (i32, i32) {
    %c0_i32 = arith.constant 0 : i32
    %c0_i32_0 = arith.constant 0 : i32
    %c0_i32_1 = arith.constant 0 : i32
    return %c0_i32, %c0_i32_0 : i32, i32
  }
  func.func @transform_12(%arg0: i32) -> (i32, i32) {
    %c0_i32 = arith.constant 0 : i32
    %c0_i32_0 = arith.constant 0 : i32
    %c0_i32_1 = arith.constant 0 : i32
    return %c0_i32, %c0_i32_0 : i32, i32
  }
  func.func @transform_13(%arg0: i32) -> (i32, i32, i32) {
    %c0_i32 = arith.constant 0 : i32
    %c0_i32_0 = arith.constant 0 : i32
    %c0_i32_1 = arith.constant 0 : i32
    return %arg0, %c0_i32, %c0_i32_0 : i32, i32, i32
  }
}

</mosaic_0001>

<llo_original>
// kernel: tpu_custom_call.1
$region0: #{tpu_custom_call.1}
  #allocation0 [shape = 'u32[]', space=smem, size = 0x4, offset = 0x4, fixed_abs, tag = 'smem constant byte address 0x4 - core index']
  #allocation1 [shape = 'u32[72,128]{1,0:T(1,128)}', space=vmem, size = 0x9000, scoped, tag = 'internal scratch']
  %s0 = inlined_call_operand.hbm [shape: f32[2,16,128], index: 0, kind: input, shape index: {}]
  %s1 = inlined_call_operand.hbm [shape: f32[128,384], index: 1, kind: input, shape index: {}]
  %s2 = inlined_call_operand.hbm [shape: f32[1,384], index: 2, kind: input, shape index: {}]
  %s3 = inlined_call_operand.hbm [shape: f32[128,128], index: 3, kind: input, shape index: {}]
  %s4 = inlined_call_operand.vmem [shape: f32[1,128], index: 4, kind: input, shape index: {}]
  %s5 = inlined_call_operand.vmem [shape: f32[1,128], index: 5, kind: input, shape index: {}]
  %s6 = inlined_call_operand.vmem [shape: f32[1,128], index: 6, kind: input, shape index: {}]
  %s7 = inlined_call_operand.hbm [shape: f32[128,256], index: 7, kind: input, shape index: {}]
  %s8 = inlined_call_operand.vmem [shape: f32[1,256], index: 8, kind: input, shape index: {}]
  %s9 = inlined_call_operand.hbm [shape: f32[256,128], index: 9, kind: input, shape index: {}]
  %s10 = inlined_call_operand.vmem [shape: f32[1,128], index: 10, kind: input, shape index: {}]
  %s11 = inlined_call_operand.vmem [shape: f32[1,128], index: 11, kind: input, shape index: {}]
  %s12 = inlined_call_operand.vmem [shape: f32[1,128], index: 12, kind: input, shape index: {}]
  %s13 = inlined_call_operand.hbm [shape: f32[2,16,128], index: 13, kind: output, shape index: {}]
  %s14 = sld [smem:[#allocation0]]
  $region109: #{tpu_custom_call.1} parent=0
    _
  %s16 = ssub.s32 1, %s14
  %s17 = scalar_select 0, %s16, %s14
  $region1: #{tpu_custom_call.1} parent=0
    #allocation2 [shape = 'u8[16384]{0}', space=vmem, size = 0x4000, scoped, tag = 'input window, operand 0']
    #allocation3 [shape = 's32[2]{0}', space=sflag, size = 0x8, scoped, tag = 'scoped memory for tpu_custom_call.1']
    #allocation4 [shape = 's32[2]{0}', space=sflag, size = 0x8, scoped, tag = 'scoped memory for tpu_custom_call.1']
    #allocation5 [shape = 'u8[196608]{0}', space=vmem, size = 0x30000, scoped, tag = 'input window, operand 1, single buffered']
    #allocation6 [shape = 's32[1]{0}', space=sflag, size = 0x4, scoped, tag = 'scoped memory for tpu_custom_call.1']
    #allocation7 [shape = 'u8[1536]{0}', space=vmem, size = 0x800, scoped, tag = 'input window, operand 2, single buffered']
    #allocation8 [shape = 'u8[65536]{0}', space=vmem, size = 0x10000, scoped, tag = 'input window, operand 3, single buffered']
    #allocation9 [shape = 's32[1]{0}', space=sflag, size = 0x4, scoped, tag = 'scoped memory for tpu_custom_call.1']
    #allocation10 [shape = 'u8[131072]{0}', space=vmem, size = 0x20000, scoped, tag = 'input window, operand 7, single buffered']
    #allocation11 [shape = 'u8[131072]{0}', space=vmem, size = 0x20000, scoped, tag = 'input window, operand 9, single buffered']
    #allocation12 [shape = 's32[1]{0}', space=sflag, size = 0x4, scoped, tag = 'scoped memory for tpu_custom_call.1']
    #allocation13 [shape = 'u8[16384]{0}', space=vmem, size = 0x4000, scoped, tag = 'output window, operand 0']
    %18 = vsyncpa [#allocation3], 0
    %s19 = scalar_lea.sflag [#allocation3], 1
    %20 = vsyncpa %s19, 0
    %21 = vsyncpa [#allocation6], 0
    %22 = vsyncpa [#allocation9], 0
    %23 = vsyncpa [#allocation12], 0
    %24 = vsyncpa [#allocation4], 0
    %s25 = scalar_lea.sflag [#allocation4], 1
    %26 = vsyncpa %s25, 0
    loop: start=0, step=1, limit=4
    $region2: #{tpu_custom_call.1} parent=1 // loop_pre_header
      _
    $region3: #{tpu_custom_call.1} parent=1 // loop_header
      %s28 = sphi 0, %s32
      %p29 = scmp.ge.s32.totalorder %s28, 4
      %s38 = sphi 0, %s40
      %s41 = sphi 0, %s38
      %s42 = sphi 0, %s41
      %s58 = sphi 0, %s42
      %s62 = sphi 0, %s62
      %s64 = sphi 0, %s62
      %s65 = sphi 0, %s64
      %s79 = sphi 0, %s65
      %s83 = sphi 0, %s83
      %s85 = sphi 0, %s83
      %s86 = sphi 0, %s85
      %s100 = sphi 0, %s86
      %s104 = sphi 0, %s104
      %s106 = sphi 0, %s104
      %s107 = sphi 0, %s106
      %s121 = sphi 0, %s107
      %s125 = sphi 0, %s125
      %s127 = sphi 0, %s125
      %s128 = sphi 0, %s127
      %s142 = sphi 0, %s128
      %s146 = sphi 0, %s146
      %s148 = sphi 0, %s146
      %s149 = sphi 0, %s148
      %s163 = sphi 0, %s149
      %s167 = sphi 0, %s167
      %s169 = sphi 0, %s167
      %s170 = sphi 0, %s169
      %s184 = sphi 0, %s170
      %s188 = sphi 0, %s188
      %s190 = sphi 0, %s188
      %s191 = sphi 0, %s190
      %s205 = sphi 0, %s191
      %s209 = sphi 0, %s209
      %s211 = sphi 0, %s209
      %s212 = sphi 0, %s211
      %s226 = sphi 0, %s212
      %s230 = sphi 0, %s230
      %s232 = sphi 0, %s230
      %s233 = sphi 0, %s232
      %s247 = sphi 0, %s233
      %s251 = sphi 0, %s251
      %s253 = sphi 0, %s251
      %s254 = sphi 0, %s253
      %s268 = sphi 0, %s254
      %s272 = sphi 0, %s272
      %s274 = sphi 0, %s272
      %s275 = sphi 0, %s274
      %s289 = sphi 0, %s275
      %s293 = sphi 0, %s293
      %s295 = sphi 0, %s293
      %s296 = sphi 0, %s295
      %s310 = sphi 0, %s296
      %s316 = sphi 0, %s318
      %s319 = sphi 0, %s316
      %s320 = sphi 0, %s319
      %s336 = sphi 0, %s320
    $region4: #{tpu_custom_call.1} parent=1 // loop_header_branch
      %31 = sbr.rel (%p29) target = $region8
    $region5: #{tpu_custom_call.1} parent=1 // loop_body
      %s33 = ssub.s32 %s28, 1
      %s34 = ssub.s32 %s28, 2
      %s35 = sadd.s32 %s28, 1
      %s36 = ssub.s32 %s28, %s35
      %p37 = scmp.eq.s32.totalorder %s36, 0
      %s39 = sadd.s32 %s38, 1
      %s40 = scalar_select %p37, %s38, %s39
      %p43 = pneg %p37
      %p44 = scmp.eq.s32.totalorder %s28, 1
      %p45 = por %p43, %p44
      %p46 = scmp.ne.s32.totalorder %s38, %s41
      %p47 = scmp.eq.s32.totalorder %s28, 0
      %p48 = por %p46, %p47
      %p49 = scmp.ne.s32.totalorder %s38, %s41
      %p50 = scmp.eq.s32.totalorder %s33, 1
      %p51 = por %p49, %p50
      %p52 = scmp.ne.s32.totalorder %s41, %s42
      %p53 = scmp.eq.s32.totalorder %s33, 0
      %p54 = por %p52, %p53
      %p55 = scmp.ne.s32.totalorder %s41, %s42
      %p56 = scmp.eq.s32.totalorder %s34, 1
      %p57 = por %p55, %p56
      %p59 = scmp.ne.s32.totalorder %s42, %s58
      %p60 = scmp.eq.s32.totalorder %s34, 0
      %p61 = por %p59, %p60
      %s63 = sadd.s32 %s62, 1
      %p66 = scmp.eq.s32.totalorder %s28, 1
      %p67 = scmp.ne.s32.totalorder %s62, %s64
      %p68 = scmp.eq.s32.totalorder %s28, 0
      %p69 = por %p67, %p68
      %p70 = scmp.ne.s32.totalorder %s62, %s64
      %p71 = scmp.eq.s32.totalorder %s33, 1
      %p72 = por %p70, %p71
      %p73 = scmp.ne.s32.totalorder %s64, %s65
      %p74 = scmp.eq.s32.totalorder %s33, 0
      %p75 = por %p73, %p74
      %p76 = scmp.ne.s32.totalorder %s64, %s65
      %p77 = scmp.eq.s32.totalorder %s34, 1
      %p78 = por %p76, %p77
      %p80 = scmp.ne.s32.totalorder %s65, %s79
      %p81 = scmp.eq.s32.totalorder %s34, 0
      %p82 = por %p80, %p81
      %s84 = sadd.s32 %s83, 1
      %p87 = scmp.eq.s32.totalorder %s28, 1
      %p88 = scmp.ne.s32.totalorder %s83, %s85
      %p89 = scmp.eq.s32.totalorder %s28, 0
      %p90 = por %p88, %p89
      %p91 = scmp.ne.s32.totalorder %s83, %s85
      %p92 = scmp.eq.s32.totalorder %s33, 1
      %p93 = por %p91, %p92
      %p94 = scmp.ne.s32.totalorder %s85, %s86
      %p95 = scmp.eq.s32.totalorder %s33, 0
      %p96 = por %p94, %p95
      %p97 = scmp.ne.s32.totalorder %s85, %s86
      %p98 = scmp.eq.s32.totalorder %s34, 1
      %p99 = por %p97, %p98
      %p101 = scmp.ne.s32.totalorder %s86, %s100
      %p102 = scmp.eq.s32.totalorder %s34, 0
      %p103 = por %p101, %p102
      %s105 = sadd.s32 %s104, 1
      %p108 = scmp.eq.s32.totalorder %s28, 1
      %p109 = scmp.ne.s32.totalorder %s104, %s106
      %p110 = scmp.eq.s32.totalorder %s28, 0
      %p111 = por %p109, %p110
      %p112 = scmp.ne.s32.totalorder %s104, %s106
      %p113 = scmp.eq.s32.totalorder %s33, 1
      %p114 = por %p112, %p113
      %p115 = scmp.ne.s32.totalorder %s106, %s107
      %p116 = scmp.eq.s32.totalorder %s33, 0
      %p117 = por %p115, %p116
      %p118 = scmp.ne.s32.totalorder %s106, %s107
      %p119 = scmp.eq.s32.totalorder %s34, 1
      %p120 = por %p118, %p119
      %p122 = scmp.ne.s32.totalorder %s107, %s121
      %p123 = scmp.eq.s32.totalorder %s34, 0
      %p124 = por %p122, %p123
      %s126 = sadd.s32 %s125, 1
      %p129 = scmp.eq.s32.totalorder %s28, 1
      %p130 = scmp.ne.s32.totalorder %s125, %s127
      %p131 = scmp.eq.s32.totalorder %s28, 0
      %p132 = por %p130, %p131
      %p133 = scmp.ne.s32.totalorder %s125, %s127
      %p134 = scmp.eq.s32.totalorder %s33, 1
      %p135 = por %p133, %p134
      %p136 = scmp.ne.s32.totalorder %s127, %s128
      %p137 = scmp.eq.s32.totalorder %s33, 0
      %p138 = por %p136, %p137
      %p139 = scmp.ne.s32.totalorder %s127, %s128
      %p140 = scmp.eq.s32.totalorder %s34, 1
      %p141 = por %p139, %p140
      %p143 = scmp.ne.s32.totalorder %s128, %s142
      %p144 = scmp.eq.s32.totalorder %s34, 0
      %p145 = por %p143, %p144
      %s147 = sadd.s32 %s146, 1
      %p150 = scmp.eq.s32.totalorder %s28, 1
      %p151 = scmp.ne.s32.totalorder %s146, %s148
      %p152 = scmp.eq.s32.totalorder %s28, 0
      %p153 = por %p151, %p152
      %p154 = scmp.ne.s32.totalorder %s146, %s148
      %p155 = scmp.eq.s32.totalorder %s33, 1
      %p156 = por %p154, %p155
      %p157 = scmp.ne.s32.totalorder %s148, %s149
      %p158 = scmp.eq.s32.totalorder %s33, 0
      %p159 = por %p157, %p158
      %p160 = scmp.ne.s32.totalorder %s148, %s149
      %p161 = scmp.eq.s32.totalorder %s34, 1
      %p162 = por %p160, %p161
      %p164 = scmp.ne.s32.totalorder %s149, %s163
      %p165 = scmp.eq.s32.totalorder %s34, 0
      %p166 = por %p164, %p165
      %s168 = sadd.s32 %s167, 1
      %p171 = scmp.eq.s32.totalorder %s28, 1
      %p172 = scmp.ne.s32.totalorder %s167, %s169
      %p173 = scmp.eq.s32.totalorder %s28, 0
      %p174 = por %p172, %p173
      %p175 = scmp.ne.s32.totalorder %s167, %s169
      %p176 = scmp.eq.s32.totalorder %s33, 1
      %p177 = por %p175, %p176
      %p178 = scmp.ne.s32.totalorder %s169, %s170
      %p179 = scmp.eq.s32.totalorder %s33, 0
      %p180 = por %p178, %p179
      %p181 = scmp.ne.s32.totalorder %s169, %s170
      %p182 = scmp.eq.s32.totalorder %s34, 1
      %p183 = por %p181, %p182
      %p185 = scmp.ne.s32.totalorder %s170, %s184
      %p186 = scmp.eq.s32.totalorder %s34, 0
      %p187 = por %p185, %p186
      %s189 = sadd.s32 %s188, 1
      %p192 = scmp.eq.s32.totalorder %s28, 1
      %p193 = scmp.ne.s32.totalorder %s188, %s190
      %p194 = scmp.eq.s32.totalorder %s28, 0
      %p195 = por %p193, %p194
      %p196 = scmp.ne.s32.totalorder %s188, %s190
      %p197 = scmp.eq.s32.totalorder %s33, 1
      %p198 = por %p196, %p197
      %p199 = scmp.ne.s32.totalorder %s190, %s191
      %p200 = scmp.eq.s32.totalorder %s33, 0
      %p201 = por %p199, %p200
      %p202 = scmp.ne.s32.totalorder %s190, %s191
      %p203 = scmp.eq.s32.totalorder %s34, 1
      %p204 = por %p202, %p203
      %p206 = scmp.ne.s32.totalorder %s191, %s205
      %p207 = scmp.eq.s32.totalorder %s34, 0
      %p208 = por %p206, %p207
      %s210 = sadd.s32 %s209, 1
      %p213 = scmp.eq.s32.totalorder %s28, 1
      %p214 = scmp.ne.s32.totalorder %s209, %s211
      %p215 = scmp.eq.s32.totalorder %s28, 0
      %p216 = por %p214, %p215
      %p217 = scmp.ne.s32.totalorder %s209, %s211
      %p218 = scmp.eq.s32.totalorder %s33, 1
      %p219 = por %p217, %p218
      %p220 = scmp.ne.s32.totalorder %s211, %s212
      %p221 = scmp.eq.s32.totalorder %s33, 0
      %p222 = por %p220, %p221
      %p223 = scmp.ne.s32.totalorder %s211, %s212
      %p224 = scmp.eq.s32.totalorder %s34, 1
      %p225 = por %p223, %p224
      %p227 = scmp.ne.s32.totalorder %s212, %s226
      %p228 = scmp.eq.s32.totalorder %s34, 0
      %p229 = por %p227, %p228
      %s231 = sadd.s32 %s230, 1
      %p234 = scmp.eq.s32.totalorder %s28, 1
      %p235 = scmp.ne.s32.totalorder %s230, %s232
      %p236 = scmp.eq.s32.totalorder %s28, 0
      %p237 = por %p235, %p236
      %p238 = scmp.ne.s32.totalorder %s230, %s232
      %p239 = scmp.eq.s32.totalorder %s33, 1
      %p240 = por %p238, %p239
      %p241 = scmp.ne.s32.totalorder %s232, %s233
      %p242 = scmp.eq.s32.totalorder %s33, 0
      %p243 = por %p241, %p242
      %p244 = scmp.ne.s32.totalorder %s232, %s233
      %p245 = scmp.eq.s32.totalorder %s34, 1
      %p246 = por %p244, %p245
      %p248 = scmp.ne.s32.totalorder %s233, %s247
      %p249 = scmp.eq.s32.totalorder %s34, 0
      %p250 = por %p248, %p249
      %s252 = sadd.s32 %s251, 1
      %p255 = scmp.eq.s32.totalorder %s28, 1
      %p256 = scmp.ne.s32.totalorder %s251, %s253
      %p257 = scmp.eq.s32.totalorder %s28, 0
      %p258 = por %p256, %p257
      %p259 = scmp.ne.s32.totalorder %s251, %s253
      %p260 = scmp.eq.s32.totalorder %s33, 1
      %p261 = por %p259, %p260
      %p262 = scmp.ne.s32.totalorder %s253, %s254
      %p263 = scmp.eq.s32.totalorder %s33, 0
      %p264 = por %p262, %p263
      %p265 = scmp.ne.s32.totalorder %s253, %s254
      %p266 = scmp.eq.s32.totalorder %s34, 1
      %p267 = por %p265, %p266
      %p269 = scmp.ne.s32.totalorder %s254, %s268
      %p270 = scmp.eq.s32.totalorder %s34, 0
      %p271 = por %p269, %p270
      %s273 = sadd.s32 %s272, 1
      %p276 = scmp.eq.s32.totalorder %s28, 1
      %p277 = scmp.ne.s32.totalorder %s272, %s274
      %p278 = scmp.eq.s32.totalorder %s28, 0
      %p279 = por %p277, %p278
      %p280 = scmp.ne.s32.totalorder %s272, %s274
      %p281 = scmp.eq.s32.totalorder %s33, 1
      %p282 = por %p280, %p281
      %p283 = scmp.ne.s32.totalorder %s274, %s275
      %p284 = scmp.eq.s32.totalorder %s33, 0
      %p285 = por %p283, %p284
      %p286 = scmp.ne.s32.totalorder %s274, %s275
      %p287 = scmp.eq.s32.totalorder %s34, 1
      %p288 = por %p286, %p287
      %p290 = scmp.ne.s32.totalorder %s275, %s289
      %p291 = scmp.eq.s32.totalorder %s34, 0
      %p292 = por %p290, %p291
      %s294 = sadd.s32 %s293, 1
      %p297 = scmp.eq.s32.totalorder %s28, 1
      %p298 = scmp.ne.s32.totalorder %s293, %s295
      %p299 = scmp.eq.s32.totalorder %s28, 0
      %p300 = por %p298, %p299
      %p301 = scmp.ne.s32.totalorder %s293, %s295
      %p302 = scmp.eq.s32.totalorder %s33, 1
      %p303 = por %p301, %p302
      %p304 = scmp.ne.s32.totalorder %s295, %s296
      %p305 = scmp.eq.s32.totalorder %s33, 0
      %p306 = por %p304, %p305
      %p307 = scmp.ne.s32.totalorder %s295, %s296
      %p308 = scmp.eq.s32.totalorder %s34, 1
      %p309 = por %p307, %p308
      %p311 = scmp.ne.s32.totalorder %s296, %s310
      %p312 = scmp.eq.s32.totalorder %s34, 0
      %p313 = por %p311, %p312
      %s314 = ssub.s32 %s28, %s35
      %p315 = scmp.eq.s32.totalorder %s314, 0
      %s317 = sadd.s32 %s316, 1
      %s318 = scalar_select %p315, %s316, %s317
      %p321 = pneg %p315
      %p322 = scmp.eq.s32.totalorder %s28, 1
      %p323 = por %p321, %p322
      %p324 = scmp.ne.s32.totalorder %s316, %s319
      %p325 = scmp.eq.s32.totalorder %s28, 0
      %p326 = por %p324, %p325
      %p327 = scmp.ne.s32.totalorder %s316, %s319
      %p328 = scmp.eq.s32.totalorder %s33, 1
      %p329 = por %p327, %p328
      %p330 = scmp.ne.s32.totalorder %s319, %s320
      %p331 = scmp.eq.s32.totalorder %s33, 0
      %p332 = por %p330, %p331
      %p333 = scmp.ne.s32.totalorder %s319, %s320
      %p334 = scmp.eq.s32.totalorder %s34, 1
      %p335 = por %p333, %p334
      %p337 = scmp.ne.s32.totalorder %s320, %s336
      %p338 = scmp.eq.s32.totalorder %s34, 0
      %p339 = por %p337, %p338
      %p340 = scmp.le.s32.totalorder 1, %s28
      %p341 = scmp.lt.s32.totalorder %s28, 3
      %p342 = pnand %p340, %p341
      %p343 = pneg %p342
      // Predicated region
      $region9: #{tpu_custom_call.1} parent=5 // pred_check
        _
      $region10: #{tpu_custom_call.1} parent=5 // pred_check_branch
        %345 = sbr.rel (%p342) target = $region12
      $region11: #{tpu_custom_call.1} parent=5 // pred_region
        %s346 = ssub.s32 %s28, 1
        // Predicated region
        $region13: #{tpu_custom_call.1} parent=11 // pred_check
          %p347 = pneg %p75
        $region14: #{tpu_custom_call.1} parent=11 // pred_check_branch
          %349 = sbr.rel (%p347) target = $region16
        $region15: #{tpu_custom_call.1} parent=11 // pred_region
          %351 = vsyncadd [#allocation6], 0
          %s352 = sshll.u32 %s1, 4
          %s353 = int_to_ptr.hbm [resolvable:$true] %s352
          %s354 = sshll.u32 [#allocation5], 4
          %s355 = int_to_ptr.vmem [resolvable:$true] %s354
          %360 = dma.hbm_to_vmem [thread:$0]  %s353, 6144, %s355, [#allocation6], 384, 384, 24
        $region16: #{tpu_custom_call.1} parent=11 // pred_fallthru
          _
        // Predicated region
        $region17: #{tpu_custom_call.1} parent=11 // pred_check
          %p361 = pneg %p96
        $region18: #{tpu_custom_call.1} parent=11 // pred_check_branch
          %363 = sbr.rel (%p361) target = $region20
        $region19: #{tpu_custom_call.1} parent=11 // pred_region
          %365 = vsyncadd [#allocation6], 0
          %s367 = sshll.u32 %s2, 4
          %s368 = int_to_ptr.hbm [resolvable:$true] %s367
          %s369 = sshll.u32 [#allocation7], 4
          %s370 = int_to_ptr.vmem [resolvable:$true] %s369
          %372 = dma.hbm_to_vmem [thread:$0]  %s368, 48, %s370, [#allocation6]
        $region20: #{tpu_custom_call.1} parent=11 // pred_fallthru
          _
        // Predicated region
        $region21: #{tpu_custom_call.1} parent=11 // pred_check
          %p373 = pneg %p117
        $region22: #{tpu_custom_call.1} parent=11 // pred_check_branch
          %375 = sbr.rel (%p373) target = $region24
        $region23: #{tpu_custom_call.1} parent=11 // pred_region
          %377 = vsyncadd [#allocation9], 0
          %s378 = sshll.u32 %s3, 4
          %s379 = int_to_ptr.hbm [resolvable:$true] %s378
          %s380 = sshll.u32 [#allocation8], 4
          %s381 = int_to_ptr.vmem [resolvable:$true] %s380
          %386 = dma.hbm_to_vmem [thread:$0]  %s379, 2048, %s381, [#allocation9], 128, 128, 8
        $region24: #{tpu_custom_call.1} parent=11 // pred_fallthru
          _
        // Predicated region
        $region25: #{tpu_custom_call.1} parent=11 // pred_check
          %p387 = pneg %p138
        $region26: #{tpu_custom_call.1} parent=11 // pred_check_branch
          %389 = sbr.rel (%p387) target = $region28
        $region27: #{tpu_custom_call.1} parent=11 // pred_region
          _
        $region28: #{tpu_custom_call.1} parent=11 // pred_fallthru
          _
        // Predicated region
        $region29: #{tpu_custom_call.1} parent=11 // pred_check
          %p390 = pneg %p159
        $region30: #{tpu_custom_call.1} parent=11 // pred_check_branch
          %392 = sbr.rel (%p390) target = $region32
        $region31: #{tpu_custom_call.1} parent=11 // pred_region
          _
        $region32: #{tpu_custom_call.1} parent=11 // pred_fallthru
          _
        // Predicated region
        $region33: #{tpu_custom_call.1} parent=11 // pred_check
          %p393 = pneg %p180
        $region34: #{tpu_custom_call.1} parent=11 // pred_check_branch
          %395 = sbr.rel (%p393) target = $region36
        $region35: #{tpu_custom_call.1} parent=11 // pred_region
          _
        $region36: #{tpu_custom_call.1} parent=11 // pred_fallthru
          _
        // Predicated region
        $region37: #{tpu_custom_call.1} parent=11 // pred_check
          %p396 = pneg %p201
        $region38: #{tpu_custom_call.1} parent=11 // pred_check_branch
          %398 = sbr.rel (%p396) target = $region40
        $region39: #{tpu_custom_call.1} parent=11 // pred_region
          %400 = vsyncadd [#allocation9], 0
          %s401 = sshll.u32 %s7, 4
          %s402 = int_to_ptr.hbm [resolvable:$true] %s401
          %s403 = sshll.u32 [#allocation10], 4
          %s404 = int_to_ptr.vmem [resolvable:$true] %s403
          %409 = dma.hbm_to_vmem [thread:$0]  %s402, 4096, %s404, [#allocation9], 256, 256, 16
        $region40: #{tpu_custom_call.1} parent=11 // pred_fallthru
          _
        // Predicated region
        $region41: #{tpu_custom_call.1} parent=11 // pred_check
          %p410 = pneg %p222
        $region42: #{tpu_custom_call.1} parent=11 // pred_check_branch
          %412 = sbr.rel (%p410) target = $region44
        $region43: #{tpu_custom_call.1} parent=11 // pred_region
          _
        $region44: #{tpu_custom_call.1} parent=11 // pred_fallthru
          _
        // Predicated region
        $region45: #{tpu_custom_call.1} parent=11 // pred_check
          %p413 = pneg %p243
        $region46: #{tpu_custom_call.1} parent=11 // pred_check_branch
          %415 = sbr.rel (%p413) target = $region48
        $region47: #{tpu_custom_call.1} parent=11 // pred_region
          %417 = vsyncadd [#allocation12], 0
          %s418 = sshll.u32 %s9, 4
          %s419 = int_to_ptr.hbm [resolvable:$true] %s418
          %s420 = sshll.u32 [#allocation11], 4
          %s421 = int_to_ptr.vmem [resolvable:$true] %s420
          %426 = dma.hbm_to_vmem [thread:$0]  %s419, 4096, %s421, [#allocation12], 128, 128, 8
        $region48: #{tpu_custom_call.1} parent=11 // pred_fallthru
          _
        // Predicated region
        $region49: #{tpu_custom_call.1} parent=11 // pred_check
          %p427 = pneg %p264
        $region50: #{tpu_custom_call.1} parent=11 // pred_check_branch
          %429 = sbr.rel (%p427) target = $region52
        $region51: #{tpu_custom_call.1} parent=11 // pred_region
          _
        $region52: #{tpu_custom_call.1} parent=11 // pred_fallthru
          _
        // Predicated region
        $region53: #{tpu_custom_call.1} parent=11 // pred_check
          %p430 = pneg %p285
        $region54: #{tpu_custom_call.1} parent=11 // pred_check_branch
          %432 = sbr.rel (%p430) target = $region56
        $region55: #{tpu_custom_call.1} parent=11 // pred_region
          _
        $region56: #{tpu_custom_call.1} parent=11 // pred_fallthru
          _
        // Predicated region
        $region57: #{tpu_custom_call.1} parent=11 // pred_check
          %p433 = pneg %p306
        $region58: #{tpu_custom_call.1} parent=11 // pred_check_branch
          %435 = sbr.rel (%p433) target = $region60
        $region59: #{tpu_custom_call.1} parent=11 // pred_region
          _
        $region60: #{tpu_custom_call.1} parent=11 // pred_fallthru
          _
      $region12: #{tpu_custom_call.1} parent=5 // pred_fallthru
        _
      %p436 = scmp.lt.s32.totalorder %s28, 2
      // Predicated region
      $region61: #{tpu_custom_call.1} parent=5 // pred_check
        %p437 = pneg %p436
      $region62: #{tpu_custom_call.1} parent=5 // pred_check_branch
        %439 = sbr.rel (%p437) target = $region64
      $region63: #{tpu_custom_call.1} parent=5 // pred_region
        // Predicated region
        $region65: #{tpu_custom_call.1} parent=63 // pred_check
          %p440 = pneg %p48
        $region66: #{tpu_custom_call.1} parent=63 // pred_check_branch
          %442 = sbr.rel (%p440) target = $region68
        $region67: #{tpu_custom_call.1} parent=63 // pred_region
          %s443 = sand.u32 %s38, 1
          %s444 = scalar_lea.sflag [#allocation3], %s443
          %s445 = sand.u32 %s38, 1
          %s446 = smul.addr %s445, 16
          %s447 = scalar_lea.vmem [#allocation2], %s446
          %449 = vsyncadd %s444, 0
          %s450 = smul.addr %s28, 2
          %s451 = smul.addr %s450, 8
          %s452 = scalar_lea.hbm %s0, %s451
          %s453 = sshll.u32 %s452, 4
          %s454 = int_to_ptr.hbm [resolvable:$true] %s453
          %s455 = sshll.u32 %s447, 4
          %s456 = int_to_ptr.vmem [resolvable:$true] %s455
          %461 = dma.hbm_to_vmem [thread:$0]  %s454, 256, %s456, %s444, 128, 128, 8
        $region68: #{tpu_custom_call.1} parent=63 // pred_fallthru
          _
      $region64: #{tpu_custom_call.1} parent=5 // pred_fallthru
        _
      %p462 = scmp.le.s32.totalorder 1, %s28
      %p463 = scmp.lt.s32.totalorder %s28, 3
      %p464 = pnand %p462, %p463
      %p465 = pneg %p464
      // Predicated region
      $region69: #{tpu_custom_call.1} parent=5 // pred_check
        _
      $region70: #{tpu_custom_call.1} parent=5 // pred_check_branch
        %467 = sbr.rel (%p464) target = $region72
      $region71: #{tpu_custom_call.1} parent=5 // pred_region
        %s468 = ssub.s32 %s28, 1
        %s469 = sand.u32 %s41, 1
        %s470 = scalar_lea.sflag [#allocation3], %s469
        %s471 = sand.u32 %s41, 1
        %s472 = smul.addr %s471, 16
        %s473 = scalar_lea.vmem [#allocation2], %s472
        // Predicated region
        $region73: #{tpu_custom_call.1} parent=71 // pred_check
          %p474 = pneg %p54
        $region74: #{tpu_custom_call.1} parent=71 // pred_check_branch
          %476 = sbr.rel (%p474) target = $region76
        $region75: #{tpu_custom_call.1} parent=71 // pred_region
          %478 = dma.done %s470, 256
        $region76: #{tpu_custom_call.1} parent=71 // pred_fallthru
          _
        // Predicated region
        $region77: #{tpu_custom_call.1} parent=71 // pred_check
          %p479 = pneg %p75
        $region78: #{tpu_custom_call.1} parent=71 // pred_check_branch
          %481 = sbr.rel (%p479) target = $region80
        $region79: #{tpu_custom_call.1} parent=71 // pred_region
          %483 = dma.done [#allocation6], 6144
        $region80: #{tpu_custom_call.1} parent=71 // pred_fallthru
          _
        // Predicated region
        $region81: #{tpu_custom_call.1} parent=71 // pred_check
          %p484 = pneg %p96
        $region82: #{tpu_custom_call.1} parent=71 // pred_check_branch
          %486 = sbr.rel (%p484) target = $region84
        $region83: #{tpu_custom_call.1} parent=71 // pred_region
          %488 = dma.done [#allocation6], 48
        $region84: #{tpu_custom_call.1} parent=71 // pred_fallthru
          _
        // Predicated region
        $region85: #{tpu_custom_call.1} parent=71 // pred_check
          %p489 = pneg %p117
        $region86: #{tpu_custom_call.1} parent=71 // pred_check_branch
          %491 = sbr.rel (%p489) target = $region88
        $region87: #{tpu_custom_call.1} parent=71 // pred_region
          %493 = dma.done [#allocation9], 2048
        $region88: #{tpu_custom_call.1} parent=71 // pred_fallthru
          _
        // Predicated region
        $region89: #{tpu_custom_call.1} parent=71 // pred_check
          %p494 = pneg %p201
        $region90: #{tpu_custom_call.1} parent=71 // pred_check_branch
          %496 = sbr.rel (%p494) target = $region92
        $region91: #{tpu_custom_call.1} parent=71 // pred_region
          %498 = dma.done [#allocation9], 4096
        $region92: #{tpu_custom_call.1} parent=71 // pred_fallthru
          _
        // Predicated region
        $region93: #{tpu_custom_call.1} parent=71 // pred_check
          %p499 = pneg %p243
        $region94: #{tpu_custom_call.1} parent=71 // pred_check_branch
          %501 = sbr.rel (%p499) target = $region96
        $region95: #{tpu_custom_call.1} parent=71 // pred_region
          %503 = dma.done [#allocation12], 4096
        $region96: #{tpu_custom_call.1} parent=71 // pred_fallthru
          _
        %s504 = sand.u32 %s41, 1
        %s505 = scalar_lea.sflag [#allocation3], %s504
        %s506 = sand.u32 %s41, 1
        %s507 = smul.addr %s506, 16
        %s508 = scalar_lea.vmem [#allocation2], %s507
        %p509 = pneg %p54
        %p510 = pneg %p51
        %p511 = pneg %p75
        %p512 = pneg %p72
        %p513 = pneg %p96
        %p514 = pneg %p93
        %p515 = pneg %p117
        %p516 = pneg %p114
        %p517 = pneg %p138
        %p518 = pneg %p135
        %p519 = pneg %p159
        %p520 = pneg %p156
        %p521 = pneg %p180
        %p522 = pneg %p177
        %p523 = pneg %p201
        %p524 = pneg %p198
        %p525 = pneg %p222
        %p526 = pneg %p219
        %p527 = pneg %p243
        %p528 = pneg %p240
        %p529 = pneg %p264
        %p530 = pneg %p261
        %p531 = pneg %p285
        %p532 = pneg %p282
        %p533 = pneg %p306
        %p534 = pneg %p303
        %p535 = pneg %p332
        %p536 = pneg %p329
        %s537 = sand.u32 %s319, 1
        %s538 = scalar_lea.sflag [#allocation4], %s537
        %s539 = sand.u32 %s319, 1
        %s540 = smul.addr %s539, 16
        %s541 = scalar_lea.vmem [#allocation13], %s540
        %v542 = vld [vmem:[%s473] sm:$0xff]
        %v543 = vld [vmem:[%s473 + $0x8] sm:$0xff]
        %v544 = vld [vmem:[#allocation5] sm:$0xff]
        %v545 = vld [vmem:[#allocation5 + $0x8] sm:$0xff]
        %v546 = vld [vmem:[#allocation5 + $0x10] sm:$0xff]
        %v547 = vld [vmem:[#allocation5 + $0x18] sm:$0xff]
        %v548 = vld [vmem:[#allocation5 + $0x20] sm:$0xff]
        %v549 = vld [vmem:[#allocation5 + $0x28] sm:$0xff]
        %v550 = vld [vmem:[#allocation5 + $0x30] sm:$0xff]
        %v551 = vld [vmem:[#allocation5 + $0x38] sm:$0xff]
        %v552 = vld [vmem:[#allocation5 + $0x40] sm:$0xff]
        %v553 = vld [vmem:[#allocation5 + $0x48] sm:$0xff]
        %v554 = vld [vmem:[#allocation5 + $0x50] sm:$0xff]
        %v555 = vld [vmem:[#allocation5 + $0x58] sm:$0xff]
        %v556 = vld [vmem:[#allocation5 + $0x60] sm:$0xff]
        %v557 = vld [vmem:[#allocation5 + $0x68] sm:$0xff]
        %v558 = vld [vmem:[#allocation5 + $0x70] sm:$0xff]
        %v559 = vld [vmem:[#allocation5 + $0x78] sm:$0xff]
        %v560 = vld [vmem:[#allocation5 + $0x80] sm:$0xff]
        %v561 = vld [vmem:[#allocation5 + $0x88] sm:$0xff]
        %v562 = vld [vmem:[#allocation5 + $0x90] sm:$0xff]
        %v563 = vld [vmem:[#allocation5 + $0x98] sm:$0xff]
        %v564 = vld [vmem:[#allocation5 + $0xa0] sm:$0xff]
        %v565 = vld [vmem:[#allocation5 + $0xa8] sm:$0xff]
        %v566 = vld [vmem:[#allocation5 + $0xb0] sm:$0xff]
        %v567 = vld [vmem:[#allocation5 + $0xb8] sm:$0xff]
        %v568 = vld [vmem:[#allocation5 + $0xc0] sm:$0xff]
        %v569 = vld [vmem:[#allocation5 + $0xc8] sm:$0xff]
        %v570 = vld [vmem:[#allocation5 + $0xd0] sm:$0xff]
        %v571 = vld [vmem:[#allocation5 + $0xd8] sm:$0xff]
        %v572 = vld [vmem:[#allocation5 + $0xe0] sm:$0xff]
        %v573 = vld [vmem:[#allocation5 + $0xe8] sm:$0xff]
        %v574 = vld [vmem:[#allocation5 + $0xf0] sm:$0xff]
        %v575 = vld [vmem:[#allocation5 + $0xf8] sm:$0xff]
        %v576 = vld [vmem:[#allocation5 + $0x100] sm:$0xff]
        %v577 = vld [vmem:[#allocation5 + $0x108] sm:$0xff]
        %v578 = vld [vmem:[#allocation5 + $0x110] sm:$0xff]
        %v579 = vld [vmem:[#allocation5 + $0x118] sm:$0xff]
        %v580 = vld [vmem:[#allocation5 + $0x120] sm:$0xff]
        %v581 = vld [vmem:[#allocation5 + $0x128] sm:$0xff]
        %v582 = vld [vmem:[#allocation5 + $0x130] sm:$0xff]
        %v583 = vld [vmem:[#allocation5 + $0x138] sm:$0xff]
        %v584 = vld [vmem:[#allocation5 + $0x140] sm:$0xff]
        %v585 = vld [vmem:[#allocation5 + $0x148] sm:$0xff]
        %v586 = vld [vmem:[#allocation5 + $0x150] sm:$0xff]
        %v587 = vld [vmem:[#allocation5 + $0x158] sm:$0xff]
        %v588 = vld [vmem:[#allocation5 + $0x160] sm:$0xff]
        %v589 = vld [vmem:[#allocation5 + $0x168] sm:$0xff]
        %v590 = vld [vmem:[#allocation5 + $0x170] sm:$0xff]
        %v591 = vld [vmem:[#allocation5 + $0x178] sm:$0xff]
        %v592 = vld [vmem:[#allocation7] sm:$0x7]
        %v594 = vperm.slane %v592, 0
        %v595 = vperm.slane %v592, 1
        %v596 = vperm.slane %v592, 2
        %600 = vmatpush.msra.mxu0 %v589
        %601 = vmatpush.msra.mxu0 %v586
        %602 = vmatpush.msra.mxu0 %v583
        %603 = vmatpush.msra.mxu0 %v580
        %604 = vmatpush.msra.mxu0 %v577
        %605 = vmatpush.msra.mxu0 %v574
        %606 = vmatpush.msra.mxu0 %v571
        %607 = vmatpush.msra.mxu0 %v568
        %608 = vmatpush.msra.mxu0 %v565
        %609 = vmatpush.msra.mxu0 %v562
        %610 = vmatpush.msra.mxu0 %v559
        %611 = vmatpush.msra.mxu0 %v556
        %612 = vmatpush.msra.mxu0 %v553
        %613 = vmatpush.msra.mxu0 %v550
        %614 = vmatpush.msra.mxu0 %v547
        %615 = vmatpush.msra.mxu0 %v544
        %616 = vmatmul.f32.gmra.mxu0 %v542
        %v617 = vpop.f32.mrf.mxu0
        %v618 = vadd.f32 %v594, %v617
        %619 = vmatmul.f32.gmra.mxu0 %v543
        %v620 = vpop.f32.mrf.mxu0
        %v621 = vadd.f32 %v594, %v620
        %622 = vdwg.mxu0
        %623 = vmatpush.msra.mxu0 %v590
        %624 = vmatpush.msra.mxu0 %v587
        %625 = vmatpush.msra.mxu0 %v584
        %626 = vmatpush.msra.mxu0 %v581
        %627 = vmatpush.msra.mxu0 %v578
        %628 = vmatpush.msra.mxu0 %v575
        %629 = vmatpush.msra.mxu0 %v572
        %630 = vmatpush.msra.mxu0 %v569
        %631 = vmatpush.msra.mxu0 %v566
        %632 = vmatpush.msra.mxu0 %v563
        %633 = vmatpush.msra.mxu0 %v560
        %634 = vmatpush.msra.mxu0 %v557
        %635 = vmatpush.msra.mxu0 %v554
        %636 = vmatpush.msra.mxu0 %v551
        %637 = vmatpush.msra.mxu0 %v548
        %638 = vmatpush.msra.mxu0 %v545
        %639 = vmatmul.f32.gmra.mxu0 %v542
        %v640 = vpop.f32.mrf.mxu0
        %v641 = vadd.f32 %v595, %v640
        %642 = vmatmul.f32.gmra.mxu0 %v543
        %v643 = vpop.f32.mrf.mxu0
        %v644 = vadd.f32 %v595, %v643
        %645 = vdwg.mxu0
        %646 = vmatpush.msra.mxu0 %v591
        %647 = vmatpush.msra.mxu0 %v588
        %648 = vmatpush.msra.mxu0 %v585
        %649 = vmatpush.msra.mxu0 %v582
        %650 = vmatpush.msra.mxu0 %v579
        %651 = vmatpush.msra.mxu0 %v576
        %652 = vmatpush.msra.mxu0 %v573
        %653 = vmatpush.msra.mxu0 %v570
        %654 = vmatpush.msra.mxu0 %v567
        %655 = vmatpush.msra.mxu0 %v564
        %656 = vmatpush.msra.mxu0 %v561
        %657 = vmatpush.msra.mxu0 %v558
        %658 = vmatpush.msra.mxu0 %v555
        %659 = vmatpush.msra.mxu0 %v552
        %660 = vmatpush.msra.mxu0 %v549
        %661 = vmatpush.msra.mxu0 %v546
        %662 = vmatmul.f32.gmra.mxu0 %v542
        %v663 = vpop.f32.mrf.mxu0
        %v664 = vadd.f32 %v596, %v663
        %665 = vmatmul.f32.gmra.mxu0 %v543
        %v666 = vpop.f32.mrf.mxu0
        %v667 = vadd.f32 %v596, %v666
        %668 = vdwg.mxu0
        %671 = vrot.lane.b32.xlu0 %v641, 96
        %v672 = vpop.permute.xlu0 %671
        %673 = vrot.lane.b32.xlu0 %v644, 96
        %v674 = vpop.permute.xlu0 %673
        %677 = vrot.lane.b32.xlu0 %v641, 64
        %v678 = vpop.permute.xlu0 %677
        %679 = vrot.lane.b32.xlu0 %v644, 64
        %v680 = vpop.permute.xlu0 %679
        %683 = vrot.lane.b32.xlu0 %v641, 32
        %v684 = vpop.permute.xlu0 %683
        %685 = vrot.lane.b32.xlu0 %v644, 32
        %v686 = vpop.permute.xlu0 %685
        %v689 = vrot.slane %v678, 4
        %vm690 = vcmask 1047556
        %v691 = vsel %vm690, %v689, %v641
        %v692 = vrot.slane %v641, 4
        %v693 = vsel %vm690, %v678, %v692
        %v695 = vunpack.c.l.s4 1983009808
        %v696 = vunpack.c.0.s8 %v695
        %v697 = vperm.slane %v691, %v696
        %v699 = vunpack.c.l.s4 1983009808
        %v700 = vunpack.c.0.s8 %v699
        %v701 = vperm.slane %v693, %v700
        %v702 = vrot.slane %v684, 4
        %v703 = vsel %vm690, %v702, %v672
        %v704 = vrot.slane %v672, 4
        %v705 = vsel %vm690, %v684, %v704
        %v707 = vunpack.c.l.s4 1983009808
        %v708 = vunpack.c.0.s8 %v707
        %v709 = vperm.slane %v703, %v708
        %v711 = vunpack.c.l.s4 1983009808
        %v712 = vunpack.c.0.s8 %v711
        %v713 = vperm.slane %v705, %v712
        %v714 = vrot.slane %v709, 4
        %v715 = vsel %vm690, %v714, %v697
        %v716 = vrot.slane %v697, 4
        %v717 = vsel %vm690, %v709, %v716
        %v719 = vunpack.c.l.s4 1934713408
        %v720 = vunpack.c.0.s8 %v719
        %v721 = vperm.slane %v715, %v720
        %v723 = vunpack.c.l.s4 1934713408
        %v724 = vunpack.c.0.s8 %v723
        %v725 = vperm.slane %v717, %v724
        %v726 = vrot.slane %v713, 4
        %v727 = vsel %vm690, %v726, %v701
        %v728 = vrot.slane %v701, 4
        %v729 = vsel %vm690, %v713, %v728
        %v731 = vunpack.c.l.s4 1934713408
        %v732 = vunpack.c.0.s8 %v731
        %v733 = vperm.slane %v727, %v732
        %v735 = vunpack.c.l.s4 1934713408
        %v736 = vunpack.c.0.s8 %v735
        %v737 = vperm.slane %v729, %v736
        %v738 = vrot.slane %v721, 4
        %v739 = vsel %vm690, 0.0, %v738
        %v740 = vrot.slane %v725, 4
        %v741 = vsel %vm690, 0.0, %v740
        %v742 = vrot.slane %v733, 4
        %v743 = vsel %vm690, 0.0, %v742
        %v744 = vrot.slane %v737, 4
        %v745 = vsel %vm690, 0.0, %v744
        %v746 = vrot.slane %v680, 4
        %v747 = vsel %vm690, %v746, %v644
        %v748 = vrot.slane %v644, 4
        %v749 = vsel %vm690, %v680, %v748
        %v751 = vunpack.c.l.s4 1983009808
        %v752 = vunpack.c.0.s8 %v751
        %v753 = vperm.slane %v747, %v752
        %v755 = vunpack.c.l.s4 1983009808
        %v756 = vunpack.c.0.s8 %v755
        %v757 = vperm.slane %v749, %v756
        %v758 = vrot.slane %v686, 4
        %v759 = vsel %vm690, %v758, %v674
        %v760 = vrot.slane %v674, 4
        %v761 = vsel %vm690, %v686, %v760
        %v763 = vunpack.c.l.s4 1983009808
        %v764 = vunpack.c.0.s8 %v763
        %v765 = vperm.slane %v759, %v764
        %v767 = vunpack.c.l.s4 1983009808
        %v768 = vunpack.c.0.s8 %v767
        %v769 = vperm.slane %v761, %v768
        %v770 = vrot.slane %v765, 4
        %v771 = vsel %vm690, %v770, %v753
        %v772 = vrot.slane %v753, 4
        %v773 = vsel %vm690, %v765, %v772
        %v775 = vunpack.c.l.s4 1934713408
        %v776 = vunpack.c.0.s8 %v775
        %v777 = vperm.slane %v771, %v776
        %v779 = vunpack.c.l.s4 1934713408
        %v780 = vunpack.c.0.s8 %v779
        %v781 = vperm.slane %v773, %v780
        %v782 = vrot.slane %v769, 4
        %v783 = vsel %vm690, %v782, %v757
        %v784 = vrot.slane %v757, 4
        %v785 = vsel %vm690, %v769, %v784
        %v787 = vunpack.c.l.s4 1934713408
        %v788 = vunpack.c.0.s8 %v787
        %v789 = vperm.slane %v783, %v788
        %v791 = vunpack.c.l.s4 1934713408
        %v792 = vunpack.c.0.s8 %v791
        %v793 = vperm.slane %v785, %v792
        %v794 = vrot.slane %v777, 4
        %v795 = vsel %vm690, 0.0, %v794
        %v796 = vrot.slane %v781, 4
        %v797 = vsel %vm690, 0.0, %v796
        %v798 = vrot.slane %v789, 4
        %v799 = vsel %vm690, 0.0, %v798
        %v800 = vrot.slane %v793, 4
        %v801 = vsel %vm690, 0.0, %v800
        %v802 = vsel %vm690, %v740, %v721
        %v804 = vunpack.c.l.s4 1983009808
        %v805 = vunpack.c.0.s8 %v804
        %v806 = vperm.slane %v802, %v805
        %v807 = vrot.slane %v741, 4
        %v808 = vsel %vm690, %v807, %v739
        %v810 = vunpack.c.l.s4 1983009808
        %v811 = vunpack.c.0.s8 %v810
        %v812 = vperm.slane %v808, %v811
        %v813 = vsel %vm690, %v744, %v733
        %v815 = vunpack.c.l.s4 1983009808
        %v816 = vunpack.c.0.s8 %v815
        %v817 = vperm.slane %v813, %v816
        %v818 = vrot.slane %v745, 4
        %v819 = vsel %vm690, %v818, %v743
        %v821 = vunpack.c.l.s4 1983009808
        %v822 = vunpack.c.0.s8 %v821
        %v823 = vperm.slane %v819, %v822
        %v824 = vrot.slane %v812, 4
        %v825 = vsel %vm690, %v824, %v806
        %v826 = vrot.slane %v806, 4
        %v827 = vsel %vm690, %v812, %v826
        %v829 = vunpack.c.l.s4 1934713408
        %v830 = vunpack.c.0.s8 %v829
        %v831 = vperm.slane %v825, %v830
        %v833 = vunpack.c.l.s4 1934713408
        %v834 = vunpack.c.0.s8 %v833
        %v835 = vperm.slane %v827, %v834
        %v836 = vrot.slane %v823, 4
        %v837 = vsel %vm690, %v836, %v817
        %v838 = vrot.slane %v817, 4
        %v839 = vsel %vm690, %v823, %v838
        %v841 = vunpack.c.l.s4 1934713408
        %v842 = vunpack.c.0.s8 %v841
        %v843 = vperm.slane %v837, %v842
        %v845 = vunpack.c.l.s4 1934713408
        %v846 = vunpack.c.0.s8 %v845
        %v847 = vperm.slane %v839, %v846
        %v848 = vrot.slane %v843, 4
        %v849 = vsel %vm690, %v848, %v831
        %v850 = vrot.slane %v831, 4
        %v851 = vsel %vm690, %v843, %v850
        %v852 = vrot.slane %v847, 4
        %v853 = vsel %vm690, %v852, %v835
        %v854 = vrot.slane %v835, 4
        %v855 = vsel %vm690, %v847, %v854
        %v856 = vsel %vm690, %v796, %v777
        %v858 = vunpack.c.l.s4 1983009808
        %v859 = vunpack.c.0.s8 %v858
        %v860 = vperm.slane %v856, %v859
        %v861 = vrot.slane %v797, 4
        %v862 = vsel %vm690, %v861, %v795
        %v864 = vunpack.c.l.s4 1983009808
        %v865 = vunpack.c.0.s8 %v864
        %v866 = vperm.slane %v862, %v865
        %v867 = vsel %vm690, %v800, %v789
        %v869 = vunpack.c.l.s4 1983009808
        %v870 = vunpack.c.0.s8 %v869
        %v871 = vperm.slane %v867, %v870
        %v872 = vrot.slane %v801, 4
        %v873 = vsel %vm690, %v872, %v799
        %v875 = vunpack.c.l.s4 1983009808
        %v876 = vunpack.c.0.s8 %v875
        %v877 = vperm.slane %v873, %v876
        %v878 = vrot.slane %v866, 4
        %v879 = vsel %vm690, %v878, %v860
        %v880 = vrot.slane %v860, 4
        %v881 = vsel %vm690, %v866, %v880
        %v883 = vunpack.c.l.s4 1934713408
        %v884 = vunpack.c.0.s8 %v883
        %v885 = vperm.slane %v879, %v884
        %v887 = vunpack.c.l.s4 1934713408
        %v888 = vunpack.c.0.s8 %v887
        %v889 = vperm.slane %v881, %v888
        %v890 = vrot.slane %v877, 4
        %v891 = vsel %vm690, %v890, %v871
        %v892 = vrot.slane %v871, 4
        %v893 = vsel %vm690, %v877, %v892
        %v895 = vunpack.c.l.s4 1934713408
        %v896 = vunpack.c.0.s8 %v895
        %v897 = vperm.slane %v891, %v896
        %v899 = vunpack.c.l.s4 1934713408
        %v900 = vunpack.c.0.s8 %v899
        %v901 = vperm.slane %v893, %v900
        %v902 = vrot.slane %v897, 4
        %v903 = vsel %vm690, %v902, %v885
        %v904 = vrot.slane %v885, 4
        %v905 = vsel %vm690, %v897, %v904
        %v906 = vrot.slane %v901, 4
        %v907 = vsel %vm690, %v906, %v889
        %v908 = vrot.slane %v889, 4
        %v909 = vsel %vm690, %v901, %v908
        %912 = vrot.lane.b32.xlu0 %v664, 96
        %v913 = vpop.permute.xlu0 %912
        %914 = vrot.lane.b32.xlu0 %v667, 96
        %v915 = vpop.permute.xlu0 %914
        %918 = vrot.lane.b32.xlu0 %v664, 64
        %v919 = vpop.permute.xlu0 %918
        %920 = vrot.lane.b32.xlu0 %v667, 64
        %v921 = vpop.permute.xlu0 %920
        %924 = vrot.lane.b32.xlu0 %v664, 32
        %v925 = vpop.permute.xlu0 %924
        %926 = vrot.lane.b32.xlu0 %v667, 32
        %v927 = vpop.permute.xlu0 %926
        %v930 = vrot.slane %v919, 4
        %v931 = vsel %vm690, %v930, %v664
        %v932 = vrot.slane %v664, 4
        %v933 = vsel %vm690, %v919, %v932
        %v935 = vunpack.c.l.s4 1983009808
        %v936 = vunpack.c.0.s8 %v935
        %v937 = vperm.slane %v931, %v936
        %v939 = vunpack.c.l.s4 1983009808
        %v940 = vunpack.c.0.s8 %v939
        %v941 = vperm.slane %v933, %v940
        %v942 = vrot.slane %v925, 4
        %v943 = vsel %vm690, %v942, %v913
        %v944 = vrot.slane %v913, 4
        %v945 = vsel %vm690, %v925, %v944
        %v947 = vunpack.c.l.s4 1983009808
        %v948 = vunpack.c.0.s8 %v947
        %v949 = vperm.slane %v943, %v948
        %v951 = vunpack.c.l.s4 1983009808
        %v952 = vunpack.c.0.s8 %v951
        %v953 = vperm.slane %v945, %v952
        %v954 = vrot.slane %v949, 4
        %v955 = vsel %vm690, %v954, %v937
        %v956 = vrot.slane %v937, 4
        %v957 = vsel %vm690, %v949, %v956
        %v959 = vunpack.c.l.s4 1934713408
        %v960 = vunpack.c.0.s8 %v959
        %v961 = vperm.slane %v955, %v960
        %v963 = vunpack.c.l.s4 1934713408
        %v964 = vunpack.c.0.s8 %v963
        %v965 = vperm.slane %v957, %v964
        %v966 = vrot.slane %v953, 4
        %v967 = vsel %vm690, %v966, %v941
        %v968 = vrot.slane %v941, 4
        %v969 = vsel %vm690, %v953, %v968
        %v971 = vunpack.c.l.s4 1934713408
        %v972 = vunpack.c.0.s8 %v971
        %v973 = vperm.slane %v967, %v972
        %v975 = vunpack.c.l.s4 1934713408
        %v976 = vunpack.c.0.s8 %v975
        %v977 = vperm.slane %v969, %v976
        %v978 = vrot.slane %v961, 4
        %v979 = vsel %vm690, 0.0, %v978
        %v980 = vrot.slane %v965, 4
        %v981 = vsel %vm690, 0.0, %v980
        %v982 = vrot.slane %v973, 4
        %v983 = vsel %vm690, 0.0, %v982
        %v984 = vrot.slane %v977, 4
        %v985 = vsel %vm690, 0.0, %v984
        %v986 = vrot.slane %v921, 4
        %v987 = vsel %vm690, %v986, %v667
        %v988 = vrot.slane %v667, 4
        %v989 = vsel %vm690, %v921, %v988
        %v991 = vunpack.c.l.s4 1983009808
        %v992 = vunpack.c.0.s8 %v991
        %v993 = vperm.slane %v987, %v992
        %v995 = vunpack.c.l.s4 1983009808
        %v996 = vunpack.c.0.s8 %v995
        %v997 = vperm.slane %v989, %v996
        %v998 = vrot.slane %v927, 4
        %v999 = vsel %vm690, %v998, %v915
        %v1000 = vrot.slane %v915, 4
        %v1001 = vsel %vm690, %v927, %v1000
        %v1003 = vunpack.c.l.s4 1983009808
        %v1004 = vunpack.c.0.s8 %v1003
        %v1005 = vperm.slane %v999, %v1004
        %v1007 = vunpack.c.l.s4 1983009808
        %v1008 = vunpack.c.0.s8 %v1007
        %v1009 = vperm.slane %v1001, %v1008
        %v1010 = vrot.slane %v1005, 4
        %v1011 = vsel %vm690, %v1010, %v993
        %v1012 = vrot.slane %v993, 4
        %v1013 = vsel %vm690, %v1005, %v1012
        %v1015 = vunpack.c.l.s4 1934713408
        %v1016 = vunpack.c.0.s8 %v1015
        %v1017 = vperm.slane %v1011, %v1016
        %v1019 = vunpack.c.l.s4 1934713408
        %v1020 = vunpack.c.0.s8 %v1019
        %v1021 = vperm.slane %v1013, %v1020
        %v1022 = vrot.slane %v1009, 4
        %v1023 = vsel %vm690, %v1022, %v997
        %v1024 = vrot.slane %v997, 4
        %v1025 = vsel %vm690, %v1009, %v1024
        %v1027 = vunpack.c.l.s4 1934713408
        %v1028 = vunpack.c.0.s8 %v1027
        %v1029 = vperm.slane %v1023, %v1028
        %v1031 = vunpack.c.l.s4 1934713408
        %v1032 = vunpack.c.0.s8 %v1031
        %v1033 = vperm.slane %v1025, %v1032
        %v1034 = vrot.slane %v1017, 4
        %v1035 = vsel %vm690, 0.0, %v1034
        %v1036 = vrot.slane %v1021, 4
        %v1037 = vsel %vm690, 0.0, %v1036
        %v1038 = vrot.slane %v1029, 4
        %v1039 = vsel %vm690, 0.0, %v1038
        %v1040 = vrot.slane %v1033, 4
        %v1041 = vsel %vm690, 0.0, %v1040
        %v1042 = vsel %vm690, %v980, %v961
        %v1044 = vunpack.c.l.s4 1983009808
        %v1045 = vunpack.c.0.s8 %v1044
        %v1046 = vperm.slane %v1042, %v1045
        %v1047 = vrot.slane %v981, 4
        %v1048 = vsel %vm690, %v1047, %v979
        %v1050 = vunpack.c.l.s4 1983009808
        %v1051 = vunpack.c.0.s8 %v1050
        %v1052 = vperm.slane %v1048, %v1051
        %v1053 = vsel %vm690, %v984, %v973
        %v1055 = vunpack.c.l.s4 1983009808
        %v1056 = vunpack.c.0.s8 %v1055
        %v1057 = vperm.slane %v1053, %v1056
        %v1058 = vrot.slane %v985, 4
        %v1059 = vsel %vm690, %v1058, %v983
        %v1061 = vunpack.c.l.s4 1983009808
        %v1062 = vunpack.c.0.s8 %v1061
        %v1063 = vperm.slane %v1059, %v1062
        %v1064 = vrot.slane %v1052, 4
        %v1065 = vsel %vm690, %v1064, %v1046
        %v1066 = vrot.slane %v1046, 4
        %v1067 = vsel %vm690, %v1052, %v1066
        %v1069 = vunpack.c.l.s4 1934713408
        %v1070 = vunpack.c.0.s8 %v1069
        %v1071 = vperm.slane %v1065, %v1070
        %v1073 = vunpack.c.l.s4 1934713408
        %v1074 = vunpack.c.0.s8 %v1073
        %v1075 = vperm.slane %v1067, %v1074
        %v1076 = vrot.slane %v1063, 4
        %v1077 = vsel %vm690, %v1076, %v1057
        %v1078 = vrot.slane %v1057, 4
        %v1079 = vsel %vm690, %v1063, %v1078
        %v1081 = vunpack.c.l.s4 1934713408
        %v1082 = vunpack.c.0.s8 %v1081
        %v1083 = vperm.slane %v1077, %v1082
        %v1085 = vunpack.c.l.s4 1934713408
        %v1086 = vunpack.c.0.s8 %v1085
        %v1087 = vperm.slane %v1079, %v1086
        %v1088 = vrot.slane %v1083, 4
        %v1089 = vsel %vm690, %v1088, %v1071
        %v1090 = vrot.slane %v1071, 4
        %v1091 = vsel %vm690, %v1083, %v1090
        %v1092 = vrot.slane %v1087, 4
        %v1093 = vsel %vm690, %v1092, %v1075
        %v1094 = vrot.slane %v1075, 4
        %v1095 = vsel %vm690, %v1087, %v1094
        %v1096 = vsel %vm690, %v1036, %v1017
        %v1098 = vunpack.c.l.s4 1983009808
        %v1099 = vunpack.c.0.s8 %v1098
        %v1100 = vperm.slane %v1096, %v1099
        %v1101 = vrot.slane %v1037, 4
        %v1102 = vsel %vm690, %v1101, %v1035
        %v1104 = vunpack.c.l.s4 1983009808
        %v1105 = vunpack.c.0.s8 %v1104
        %v1106 = vperm.slane %v1102, %v1105
        %v1107 = vsel %vm690, %v1040, %v1029
        %v1109 = vunpack.c.l.s4 1983009808
        %v1110 = vunpack.c.0.s8 %v1109
        %v1111 = vperm.slane %v1107, %v1110
        %v1112 = vrot.slane %v1041, 4
        %v1113 = vsel %vm690, %v1112, %v1039
        %v1115 = vunpack.c.l.s4 1983009808
        %v1116 = vunpack.c.0.s8 %v1115
        %v1117 = vperm.slane %v1113, %v1116
        %v1118 = vrot.slane %v1106, 4
        %v1119 = vsel %vm690, %v1118, %v1100
        %v1120 = vrot.slane %v1100, 4
        %v1121 = vsel %vm690, %v1106, %v1120
        %v1123 = vunpack.c.l.s4 1934713408
        %v1124 = vunpack.c.0.s8 %v1123
        %v1125 = vperm.slane %v1119, %v1124
        %v1127 = vunpack.c.l.s4 1934713408
        %v1128 = vunpack.c.0.s8 %v1127
        %v1129 = vperm.slane %v1121, %v1128
        %v1130 = vrot.slane %v1117, 4
        %v1131 = vsel %vm690, %v1130, %v1111
        %v1132 = vrot.slane %v1111, 4
        %v1133 = vsel %vm690, %v1117, %v1132
        %v1135 = vunpack.c.l.s4 1934713408
        %v1136 = vunpack.c.0.s8 %v1135
        %v1137 = vperm.slane %v1131, %v1136
        %v1139 = vunpack.c.l.s4 1934713408
        %v1140 = vunpack.c.0.s8 %v1139
        %v1141 = vperm.slane %v1133, %v1140
        %v1142 = vrot.slane %v1137, 4
        %v1143 = vsel %vm690, %v1142, %v1125
        %v1144 = vrot.slane %v1125, 4
        %v1145 = vsel %vm690, %v1137, %v1144
        %v1146 = vrot.slane %v1141, 4
        %v1147 = vsel %vm690, %v1146, %v1129
        %v1148 = vrot.slane %v1129, 4
        %v1149 = vsel %vm690, %v1141, %v1148
        %1152 = vrot.lane.b32.xlu0 %v618, 96
        %v1153 = vpop.permute.xlu0 %1152
        %1154 = vrot.lane.b32.xlu0 %v621, 96
        %v1155 = vpop.permute.xlu0 %1154
        %1158 = vrot.lane.b32.xlu0 %v618, 64
        %v1159 = vpop.permute.xlu0 %1158
        %1160 = vrot.lane.b32.xlu0 %v621, 64
        %v1161 = vpop.permute.xlu0 %1160
        %1164 = vrot.lane.b32.xlu0 %v618, 32
        %v1165 = vpop.permute.xlu0 %1164
        %1166 = vrot.lane.b32.xlu0 %v621, 32
        %v1167 = vpop.permute.xlu0 %1166
        %v1170 = vrot.slane %v1159, 4
        %v1171 = vsel %vm690, %v1170, %v618
        %v1172 = vrot.slane %v618, 4
        %v1173 = vsel %vm690, %v1159, %v1172
        %v1175 = vunpack.c.l.s4 1983009808
        %v1176 = vunpack.c.0.s8 %v1175
        %v1177 = vperm.slane %v1171, %v1176
        %v1179 = vunpack.c.l.s4 1983009808
        %v1180 = vunpack.c.0.s8 %v1179
        %v1181 = vperm.slane %v1173, %v1180
        %v1182 = vrot.slane %v1165, 4
        %v1183 = vsel %vm690, %v1182, %v1153
        %v1184 = vrot.slane %v1153, 4
        %v1185 = vsel %vm690, %v1165, %v1184
        %v1187 = vunpack.c.l.s4 1983009808
        %v1188 = vunpack.c.0.s8 %v1187
        %v1189 = vperm.slane %v1183, %v1188
        %v1191 = vunpack.c.l.s4 1983009808
        %v1192 = vunpack.c.0.s8 %v1191
        %v1193 = vperm.slane %v1185, %v1192
        %v1194 = vrot.slane %v1189, 4
        %v1195 = vsel %vm690, %v1194, %v1177
        %v1196 = vrot.slane %v1177, 4
        %v1197 = vsel %vm690, %v1189, %v1196
        %v1199 = vunpack.c.l.s4 1934713408
        %v1200 = vunpack.c.0.s8 %v1199
        %v1201 = vperm.slane %v1195, %v1200
        %v1203 = vunpack.c.l.s4 1934713408
        %v1204 = vunpack.c.0.s8 %v1203
        %v1205 = vperm.slane %v1197, %v1204
        %v1206 = vrot.slane %v1193, 4
        %v1207 = vsel %vm690, %v1206, %v1181
        %v1208 = vrot.slane %v1181, 4
        %v1209 = vsel %vm690, %v1193, %v1208
        %v1211 = vunpack.c.l.s4 1934713408
        %v1212 = vunpack.c.0.s8 %v1211
        %v1213 = vperm.slane %v1207, %v1212
        %v1215 = vunpack.c.l.s4 1934713408
        %v1216 = vunpack.c.0.s8 %v1215
        %v1217 = vperm.slane %v1209, %v1216
        %v1218 = vrot.slane %v1201, 4
        %v1219 = vsel %vm690, 0.0, %v1218
        %v1220 = vrot.slane %v1205, 4
        %v1221 = vsel %vm690, 0.0, %v1220
        %v1222 = vrot.slane %v1213, 4
        %v1223 = vsel %vm690, 0.0, %v1222
        %v1224 = vrot.slane %v1217, 4
        %v1225 = vsel %vm690, 0.0, %v1224
        %v1226 = vrot.slane %v1161, 4
        %v1227 = vsel %vm690, %v1226, %v621
        %v1228 = vrot.slane %v621, 4
        %v1229 = vsel %vm690, %v1161, %v1228
        %v1231 = vunpack.c.l.s4 1983009808
        %v1232 = vunpack.c.0.s8 %v1231
        %v1233 = vperm.slane %v1227, %v1232
        %v1235 = vunpack.c.l.s4 1983009808
        %v1236 = vunpack.c.0.s8 %v1235
        %v1237 = vperm.slane %v1229, %v1236
        %v1238 = vrot.slane %v1167, 4
        %v1239 = vsel %vm690, %v1238, %v1155
        %v1240 = vrot.slane %v1155, 4
        %v1241 = vsel %vm690, %v1167, %v1240
        %v1243 = vunpack.c.l.s4 1983009808
        %v1244 = vunpack.c.0.s8 %v1243
        %v1245 = vperm.slane %v1239, %v1244
        %v1247 = vunpack.c.l.s4 1983009808
        %v1248 = vunpack.c.0.s8 %v1247
        %v1249 = vperm.slane %v1241, %v1248
        %v1250 = vrot.slane %v1245, 4
        %v1251 = vsel %vm690, %v1250, %v1233
        %v1252 = vrot.slane %v1233, 4
        %v1253 = vsel %vm690, %v1245, %v1252
        %v1255 = vunpack.c.l.s4 1934713408
        %v1256 = vunpack.c.0.s8 %v1255
        %v1257 = vperm.slane %v1251, %v1256
        %v1259 = vunpack.c.l.s4 1934713408
        %v1260 = vunpack.c.0.s8 %v1259
        %v1261 = vperm.slane %v1253, %v1260
        %v1262 = vrot.slane %v1249, 4
        %v1263 = vsel %vm690, %v1262, %v1237
        %v1264 = vrot.slane %v1237, 4
        %v1265 = vsel %vm690, %v1249, %v1264
        %v1267 = vunpack.c.l.s4 1934713408
        %v1268 = vunpack.c.0.s8 %v1267
        %v1269 = vperm.slane %v1263, %v1268
        %v1271 = vunpack.c.l.s4 1934713408
        %v1272 = vunpack.c.0.s8 %v1271
        %v1273 = vperm.slane %v1265, %v1272
        %v1274 = vrot.slane %v1257, 4
        %v1275 = vsel %vm690, 0.0, %v1274
        %v1276 = vrot.slane %v1261, 4
        %v1277 = vsel %vm690, 0.0, %v1276
        %v1278 = vrot.slane %v1269, 4
        %v1279 = vsel %vm690, 0.0, %v1278
        %v1280 = vrot.slane %v1273, 4
        %v1281 = vsel %vm690, 0.0, %v1280
        %v1282 = vsel %vm690, %v1220, %v1201
        %v1284 = vunpack.c.l.s4 1983009808
        %v1285 = vunpack.c.0.s8 %v1284
        %v1286 = vperm.slane %v1282, %v1285
        %v1287 = vrot.slane %v1221, 4
        %v1288 = vsel %vm690, %v1287, %v1219
        %v1290 = vunpack.c.l.s4 1983009808
        %v1291 = vunpack.c.0.s8 %v1290
        %v1292 = vperm.slane %v1288, %v1291
        %v1293 = vsel %vm690, %v1224, %v1213
        %v1295 = vunpack.c.l.s4 1983009808
        %v1296 = vunpack.c.0.s8 %v1295
        %v1297 = vperm.slane %v1293, %v1296
        %v1298 = vrot.slane %v1225, 4
        %v1299 = vsel %vm690, %v1298, %v1223
        %v1301 = vunpack.c.l.s4 1983009808
        %v1302 = vunpack.c.0.s8 %v1301
        %v1303 = vperm.slane %v1299, %v1302
        %v1304 = vrot.slane %v1292, 4
        %v1305 = vsel %vm690, %v1304, %v1286
        %v1306 = vrot.slane %v1286, 4
        %v1307 = vsel %vm690, %v1292, %v1306
        %v1309 = vunpack.c.l.s4 1934713408
        %v1310 = vunpack.c.0.s8 %v1309
        %v1311 = vperm.slane %v1305, %v1310
        %v1313 = vunpack.c.l.s4 1934713408
        %v1314 = vunpack.c.0.s8 %v1313
        %v1315 = vperm.slane %v1307, %v1314
        %v1316 = vrot.slane %v1303, 4
        %v1317 = vsel %vm690, %v1316, %v1297
        %v1318 = vrot.slane %v1297, 4
        %v1319 = vsel %vm690, %v1303, %v1318
        %v1321 = vunpack.c.l.s4 1934713408
        %v1322 = vunpack.c.0.s8 %v1321
        %v1323 = vperm.slane %v1317, %v1322
        %v1325 = vunpack.c.l.s4 1934713408
        %v1326 = vunpack.c.0.s8 %v1325
        %v1327 = vperm.slane %v1319, %v1326
        %v1328 = vrot.slane %v1323, 4
        %v1329 = vsel %vm690, %v1328, %v1311
        %v1330 = vrot.slane %v1311, 4
        %v1331 = vsel %vm690, %v1323, %v1330
        %v1332 = vrot.slane %v1327, 4
        %v1333 = vsel %vm690, %v1332, %v1315
        %v1334 = vrot.slane %v1315, 4
        %v1335 = vsel %vm690, %v1327, %v1334
        %v1336 = vsel %vm690, %v1276, %v1257
        %v1338 = vunpack.c.l.s4 1983009808
        %v1339 = vunpack.c.0.s8 %v1338
        %v1340 = vperm.slane %v1336, %v1339
        %v1341 = vrot.slane %v1277, 4
        %v1342 = vsel %vm690, %v1341, %v1275
        %v1344 = vunpack.c.l.s4 1983009808
        %v1345 = vunpack.c.0.s8 %v1344
        %v1346 = vperm.slane %v1342, %v1345
        %v1347 = vsel %vm690, %v1280, %v1269
        %v1349 = vunpack.c.l.s4 1983009808
        %v1350 = vunpack.c.0.s8 %v1349
        %v1351 = vperm.slane %v1347, %v1350
        %v1352 = vrot.slane %v1281, 4
        %v1353 = vsel %vm690, %v1352, %v1279
        %v1355 = vunpack.c.l.s4 1983009808
        %v1356 = vunpack.c.0.s8 %v1355
        %v1357 = vperm.slane %v1353, %v1356
        %v1358 = vrot.slane %v1346, 4
        %v1359 = vsel %vm690, %v1358, %v1340
        %v1360 = vrot.slane %v1340, 4
        %v1361 = vsel %vm690, %v1346, %v1360
        %v1363 = vunpack.c.l.s4 1934713408
        %v1364 = vunpack.c.0.s8 %v1363
        %v1365 = vperm.slane %v1359, %v1364
        %v1367 = vunpack.c.l.s4 1934713408
        %v1368 = vunpack.c.0.s8 %v1367
        %v1369 = vperm.slane %v1361, %v1368
        %v1370 = vrot.slane %v1357, 4
        %v1371 = vsel %vm690, %v1370, %v1351
        %v1372 = vrot.slane %v1351, 4
        %v1373 = vsel %vm690, %v1357, %v1372
        %v1375 = vunpack.c.l.s4 1934713408
        %v1376 = vunpack.c.0.s8 %v1375
        %v1377 = vperm.slane %v1371, %v1376
        %v1379 = vunpack.c.l.s4 1934713408
        %v1380 = vunpack.c.0.s8 %v1379
        %v1381 = vperm.slane %v1373, %v1380
        %v1382 = vrot.slane %v1377, 4
        %v1383 = vsel %vm690, %v1382, %v1365
        %v1384 = vrot.slane %v1365, 4
        %v1385 = vsel %vm690, %v1377, %v1384
        %v1386 = vrot.slane %v1381, 4
        %v1387 = vsel %vm690, %v1386, %v1369
        %v1388 = vrot.slane %v1369, 4
        %v1389 = vsel %vm690, %v1381, %v1388
        %vm1390 = vcmask 261120
        %v1392 = vsel %vm1390, %v1329, 0
        %v1395 = vsel %vm1390, %v1383, 0
        %v1398 = vsel %vm1390, %v849, 0
        %v1401 = vsel %vm1390, %v903, 0
        %1403 = vmatpush.xpose.msra.mxu0 0.0
        %1404 = vmatpush.xpose.msra.mxu0 0.0
        %1405 = vmatpush.xpose.msra.mxu0 0.0
        %1406 = vmatpush.xpose.msra.mxu0 0.0
        %1407 = vmatpush.xpose.msra.mxu0 0.0
        %1408 = vmatpush.xpose.msra.mxu0 0.0
        %1409 = vmatpush.xpose.msra.mxu0 0.0
        %1410 = vmatpush.xpose.msra.mxu0 0.0
        %1411 = vmatpush.xpose.msra.mxu0 0.0
        %1412 = vmatpush.xpose.msra.mxu0 0.0
        %1413 = vmatpush.xpose.msra.mxu0 0.0
        %1414 = vmatpush.xpose.msra.mxu0 0.0
        %1415 = vmatpush.xpose.msra.mxu0 0.0
        %1416 = vmatpush.xpose.msra.mxu0 0.0
        %1417 = vmatpush.xpose.msra.mxu0 %v1401
        %1418 = vmatpush.xpose.msra.mxu0 %v1398
        %1419 = vmatmul.f32.gmra.mxu0 %v1392
        %v1420 = vpop.f32.mrf.mxu0
        %v1421 = vadd.f32 0.0, %v1420
        %1422 = vmatmul.f32.gmra.mxu0 %v1395
        %v1423 = vpop.f32.mrf.mxu0
        %v1424 = vadd.f32 0.0, %v1423
        %1425 = vdwg.mxu0
        %v1427 = vsel %vm1390, %v1331, 0
        %v1430 = vsel %vm1390, %v1385, 0
        %v1433 = vsel %vm1390, %v851, 0
        %v1436 = vsel %vm1390, %v905, 0
        %1438 = vmatpush.xpose.msra.mxu0 0.0
        %1439 = vmatpush.xpose.msra.mxu0 0.0
        %1440 = vmatpush.xpose.msra.mxu0 0.0
        %1441 = vmatpush.xpose.msra.mxu0 0.0
        %1442 = vmatpush.xpose.msra.mxu0 0.0
        %1443 = vmatpush.xpose.msra.mxu0 0.0
        %1444 = vmatpush.xpose.msra.mxu0 0.0
        %1445 = vmatpush.xpose.msra.mxu0 0.0
        %1446 = vmatpush.xpose.msra.mxu0 0.0
        %1447 = vmatpush.xpose.msra.mxu0 0.0
        %1448 = vmatpush.xpose.msra.mxu0 0.0
        %1449 = vmatpush.xpose.msra.mxu0 0.0
        %1450 = vmatpush.xpose.msra.mxu0 0.0
        %1451 = vmatpush.xpose.msra.mxu0 0.0
        %1452 = vmatpush.xpose.msra.mxu0 %v1436
        %1453 = vmatpush.xpose.msra.mxu0 %v1433
        %1454 = vmatmul.f32.gmra.mxu0 %v1427
        %v1455 = vpop.f32.mrf.mxu0
        %v1456 = vadd.f32 0.0, %v1455
        %1457 = vmatmul.f32.gmra.mxu0 %v1430
        %v1458 = vpop.f32.mrf.mxu0
        %v1459 = vadd.f32 0.0, %v1458
        %1460 = vdwg.mxu0
        %v1462 = vsel %vm1390, %v1333, 0
        %v1465 = vsel %vm1390, %v1387, 0
        %v1468 = vsel %vm1390, %v853, 0
        %v1471 = vsel %vm1390, %v907, 0
        %1473 = vmatpush.xpose.msra.mxu0 0.0
        %1474 = vmatpush.xpose.msra.mxu0 0.0
        %1475 = vmatpush.xpose.msra.mxu0 0.0
        %1476 = vmatpush.xpose.msra.mxu0 0.0
        %1477 = vmatpush.xpose.msra.mxu0 0.0
        %1478 = vmatpush.xpose.msra.mxu0 0.0
        %1479 = vmatpush.xpose.msra.mxu0 0.0
        %1480 = vmatpush.xpose.msra.mxu0 0.0
        %1481 = vmatpush.xpose.msra.mxu0 0.0
        %1482 = vmatpush.xpose.msra.mxu0 0.0
        %1483 = vmatpush.xpose.msra.mxu0 0.0
        %1484 = vmatpush.xpose.msra.mxu0 0.0
        %1485 = vmatpush.xpose.msra.mxu0 0.0
        %1486 = vmatpush.xpose.msra.mxu0 0.0
        %1487 = vmatpush.xpose.msra.mxu0 %v1471
        %1488 = vmatpush.xpose.msra.mxu0 %v1468
        %1489 = vmatmul.f32.gmra.mxu0 %v1462
        %v1490 = vpop.f32.mrf.mxu0
        %v1491 = vadd.f32 0.0, %v1490
        %1492 = vmatmul.f32.gmra.mxu0 %v1465
        %v1493 = vpop.f32.mrf.mxu0
        %v1494 = vadd.f32 0.0, %v1493
        %1495 = vdwg.mxu0
        %v1497 = vsel %vm1390, %v1335, 0
        %v1500 = vsel %vm1390, %v1389, 0
        %v1503 = vsel %vm1390, %v855, 0
        %v1506 = vsel %vm1390, %v909, 0
        %1508 = vmatpush.xpose.msra.mxu0 0.0
        %1509 = vmatpush.xpose.msra.mxu0 0.0
        %1510 = vmatpush.xpose.msra.mxu0 0.0
        %1511 = vmatpush.xpose.msra.mxu0 0.0
        %1512 = vmatpush.xpose.msra.mxu0 0.0
        %1513 = vmatpush.xpose.msra.mxu0 0.0
        %1514 = vmatpush.xpose.msra.mxu0 0.0
        %1515 = vmatpush.xpose.msra.mxu0 0.0
        %1516 = vmatpush.xpose.msra.mxu0 0.0
        %1517 = vmatpush.xpose.msra.mxu0 0.0
        %1518 = vmatpush.xpose.msra.mxu0 0.0
        %1519 = vmatpush.xpose.msra.mxu0 0.0
        %1520 = vmatpush.xpose.msra.mxu0 0.0
        %1521 = vmatpush.xpose.msra.mxu0 0.0
        %1522 = vmatpush.xpose.msra.mxu0 %v1506
        %1523 = vmatpush.xpose.msra.mxu0 %v1503
        %1524 = vmatmul.f32.gmra.mxu0 %v1497
        %v1525 = vpop.f32.mrf.mxu0
        %v1526 = vadd.f32 0.0, %v1525
        %1527 = vmatmul.f32.gmra.mxu0 %v1500
        %v1528 = vpop.f32.mrf.mxu0
        %v1529 = vadd.f32 0.0, %v1528
        %1530 = vdwg.mxu0
        %vm1531 = vcmask 130048
        %v1532 = vsel %vm1531, %v1421, -inf
        %1533 = vmax.xlane.f32.xlu0 %v1532
        %v1534 = vpop.xlane.xlu0 %1533
        %v1535 = vsel %vm1531, %v1424, -inf
        %1536 = vmax.xlane.f32.xlu0 %v1535
        %v1537 = vpop.xlane.xlu0 %1536
        %v1538 = vsel %vm1531, %v1456, -inf
        %1539 = vmax.xlane.f32.xlu0 %v1538
        %v1540 = vpop.xlane.xlu0 %1539
        %v1541 = vsel %vm1531, %v1459, -inf
        %1542 = vmax.xlane.f32.xlu0 %v1541
        %v1543 = vpop.xlane.xlu0 %1542
        %v1544 = vsel %vm1531, %v1491, -inf
        %1545 = vmax.xlane.f32.xlu0 %v1544
        %v1546 = vpop.xlane.xlu0 %1545
        %v1547 = vsel %vm1531, %v1494, -inf
        %1548 = vmax.xlane.f32.xlu0 %v1547
        %v1549 = vpop.xlane.xlu0 %1548
        %v1550 = vsel %vm1531, %v1526, -inf
        %1551 = vmax.xlane.f32.xlu0 %v1550
        %v1552 = vpop.xlane.xlu0 %1551
        %v1553 = vsel %vm1531, %v1529, -inf
        %1554 = vmax.xlane.f32.xlu0 %v1553
        %v1555 = vpop.xlane.xlu0 %1554
        %v1556 = vsub.f32 %v1421, %v1534
        %v1557 = vsub.f32 %v1424, %v1537
        %v1558 = vsub.f32 %v1456, %v1540
        %v1559 = vsub.f32 %v1459, %v1543
        %v1560 = vsub.f32 %v1491, %v1546
        %v1561 = vsub.f32 %v1494, %v1549
        %v1562 = vsub.f32 %v1526, %v1552
        %v1563 = vsub.f32 %v1529, %v1555
        %v1564 = vmul.f32 %v1556, 1.442695
        %v1565 = vpow.pop %v1564
        %v1566 = vmul.f32 %v1557, 1.442695
        %v1567 = vpow.pop %v1566
        %v1568 = vmul.f32 %v1558, 1.442695
        %v1569 = vpow.pop %v1568
        %v1570 = vmul.f32 %v1559, 1.442695
        %v1571 = vpow.pop %v1570
        %v1572 = vmul.f32 %v1560, 1.442695
        %v1573 = vpow.pop %v1572
        %v1574 = vmul.f32 %v1561, 1.442695
        %v1575 = vpow.pop %v1574
        %v1576 = vmul.f32 %v1562, 1.442695
        %v1577 = vpow.pop %v1576
        %v1578 = vmul.f32 %v1563, 1.442695
        %v1579 = vpow.pop %v1578
        %v1580 = vsel %vm1531, %v1565, 0.0
        %1581 = vadd.xlane.f32.xlu0 %v1580
        %v1582 = vpop.xlane.xlu0 %1581
        %v1583 = vsel %vm1531, %v1567, 0.0
        %1584 = vadd.xlane.f32.xlu0 %v1583
        %v1585 = vpop.xlane.xlu0 %1584
        %v1586 = vsel %vm1531, %v1569, 0.0
        %1587 = vadd.xlane.f32.xlu0 %v1586
        %v1588 = vpop.xlane.xlu0 %1587
        %v1589 = vsel %vm1531, %v1571, 0.0
        %1590 = vadd.xlane.f32.xlu0 %v1589
        %v1591 = vpop.xlane.xlu0 %1590
        %v1592 = vsel %vm1531, %v1573, 0.0
        %1593 = vadd.xlane.f32.xlu0 %v1592
        %v1594 = vpop.xlane.xlu0 %1593
        %v1595 = vsel %vm1531, %v1575, 0.0
        %1596 = vadd.xlane.f32.xlu0 %v1595
        %v1597 = vpop.xlane.xlu0 %1596
        %v1598 = vsel %vm1531, %v1577, 0.0
        %1599 = vadd.xlane.f32.xlu0 %v1598
        %v1600 = vpop.xlane.xlu0 %1599
        %v1601 = vsel %vm1531, %v1579, 0.0
        %1602 = vadd.xlane.f32.xlu0 %v1601
        %v1603 = vpop.xlane.xlu0 %1602
        %v1604 = vrcp.pop %v1582
        %v1605 = vrcp.pop %v1585
        %v1606 = vrcp.pop %v1588
        %v1607 = vrcp.pop %v1591
        %v1608 = vrcp.pop %v1594
        %v1609 = vrcp.pop %v1597
        %v1610 = vrcp.pop %v1600
        %v1611 = vrcp.pop %v1603
        %v1612 = vmul.f32 %v1565, %v1604
        %v1613 = vmul.f32 %v1567, %v1605
        %v1614 = vmul.f32 %v1569, %v1606
        %v1615 = vmul.f32 %v1571, %v1607
        %v1616 = vmul.f32 %v1573, %v1608
        %v1617 = vmul.f32 %v1575, %v1609
        %v1618 = vmul.f32 %v1577, %v1610
        %v1619 = vmul.f32 %v1579, %v1611
        %v1621 = vsel %vm1531, %v1612, 0
        %v1624 = vsel %vm1531, %v1613, 0
        %1626 = vmatpush.msra.mxu0 0.0
        %1627 = vmatpush.msra.mxu0 0.0
        %1628 = vmatpush.msra.mxu0 0.0
        %1629 = vmatpush.msra.mxu0 0.0
        %1630 = vmatpush.msra.mxu0 0.0
        %1631 = vmatpush.msra.mxu0 0.0
        %1632 = vmatpush.msra.mxu0 0.0
        %1633 = vmatpush.msra.mxu0 0.0
        %1634 = vmatpush.msra.mxu0 0.0
        %1635 = vmatpush.msra.mxu0 0.0
        %1636 = vmatpush.msra.mxu0 0.0
        %1637 = vmatpush.msra.mxu0 0.0
        %1638 = vmatpush.msra.mxu0 0.0
        %1639 = vmatpush.msra.mxu0 0.0
        %1640 = vmatpush.msra.mxu0 %v1143
        %1641 = vmatpush.msra.mxu0 %v1089
        %1642 = vmatmul.f32.gmra.mxu0 %v1621
        %v1643 = vpop.f32.mrf.mxu0
        %v1644 = vadd.f32 0.0, %v1643
        %1645 = vmatmul.f32.gmra.mxu0 %v1624
        %v1646 = vpop.f32.mrf.mxu0
        %v1647 = vadd.f32 0.0, %v1646
        %1648 = vdwg.mxu0
        %v1650 = vsel %vm1531, %v1614, 0
        %v1653 = vsel %vm1531, %v1615, 0
        %1655 = vmatpush.msra.mxu0 0.0
        %1656 = vmatpush.msra.mxu0 0.0
        %1657 = vmatpush.msra.mxu0 0.0
        %1658 = vmatpush.msra.mxu0 0.0
        %1659 = vmatpush.msra.mxu0 0.0
        %1660 = vmatpush.msra.mxu0 0.0
        %1661 = vmatpush.msra.mxu0 0.0
        %1662 = vmatpush.msra.mxu0 0.0
        %1663 = vmatpush.msra.mxu0 0.0
        %1664 = vmatpush.msra.mxu0 0.0
        %1665 = vmatpush.msra.mxu0 0.0
        %1666 = vmatpush.msra.mxu0 0.0
        %1667 = vmatpush.msra.mxu0 0.0
        %1668 = vmatpush.msra.mxu0 0.0
        %1669 = vmatpush.msra.mxu0 %v1145
        %1670 = vmatpush.msra.mxu0 %v1091
        %1671 = vmatmul.f32.gmra.mxu0 %v1650
        %v1672 = vpop.f32.mrf.mxu0
        %v1673 = vadd.f32 0.0, %v1672
        %1674 = vmatmul.f32.gmra.mxu0 %v1653
        %v1675 = vpop.f32.mrf.mxu0
        %v1676 = vadd.f32 0.0, %v1675
        %1677 = vdwg.mxu0
        %v1679 = vsel %vm1531, %v1616, 0
        %v1682 = vsel %vm1531, %v1617, 0
        %1684 = vmatpush.msra.mxu0 0.0
        %1685 = vmatpush.msra.mxu0 0.0
        %1686 = vmatpush.msra.mxu0 0.0
        %1687 = vmatpush.msra.mxu0 0.0
        %1688 = vmatpush.msra.mxu0 0.0
        %1689 = vmatpush.msra.mxu0 0.0
        %1690 = vmatpush.msra.mxu0 0.0
        %1691 = vmatpush.msra.mxu0 0.0
        %1692 = vmatpush.msra.mxu0 0.0
        %1693 = vmatpush.msra.mxu0 0.0
        %1694 = vmatpush.msra.mxu0 0.0
        %1695 = vmatpush.msra.mxu0 0.0
        %1696 = vmatpush.msra.mxu0 0.0
        %1697 = vmatpush.msra.mxu0 0.0
        %1698 = vmatpush.msra.mxu0 %v1147
        %1699 = vmatpush.msra.mxu0 %v1093
        %1700 = vmatmul.f32.gmra.mxu0 %v1679
        %v1701 = vpop.f32.mrf.mxu0
        %v1702 = vadd.f32 0.0, %v1701
        %1703 = vmatmul.f32.gmra.mxu0 %v1682
        %v1704 = vpop.f32.mrf.mxu0
        %v1705 = vadd.f32 0.0, %v1704
        %1706 = vdwg.mxu0
        %v1708 = vsel %vm1531, %v1618, 0
        %v1711 = vsel %vm1531, %v1619, 0
        %1713 = vmatpush.msra.mxu0 0.0
        %1714 = vmatpush.msra.mxu0 0.0
        %1715 = vmatpush.msra.mxu0 0.0
        %1716 = vmatpush.msra.mxu0 0.0
        %1717 = vmatpush.msra.mxu0 0.0
        %1718 = vmatpush.msra.mxu0 0.0
        %1719 = vmatpush.msra.mxu0 0.0
        %1720 = vmatpush.msra.mxu0 0.0
        %1721 = vmatpush.msra.mxu0 0.0
        %1722 = vmatpush.msra.mxu0 0.0
        %1723 = vmatpush.msra.mxu0 0.0
        %1724 = vmatpush.msra.mxu0 0.0
        %1725 = vmatpush.msra.mxu0 0.0
        %1726 = vmatpush.msra.mxu0 0.0
        %1727 = vmatpush.msra.mxu0 %v1149
        %1728 = vmatpush.msra.mxu0 %v1095
        %1729 = vmatmul.f32.gmra.mxu0 %v1708
        %v1730 = vpop.f32.mrf.mxu0
        %v1731 = vadd.f32 0.0, %v1730
        %1732 = vmatmul.f32.gmra.mxu0 %v1711
        %v1733 = vpop.f32.mrf.mxu0
        %v1734 = vadd.f32 0.0, %v1733
        %1735 = vdwg.mxu0
        %v1736 = vrot.slane %v1702, 4
        %v1737 = vsel %vm690, %v1736, %v1644
        %v1738 = vrot.slane %v1644, 4
        %v1739 = vsel %vm690, %v1702, %v1738
        %v1741 = vunpack.c.l.s4 1983009808
        %v1742 = vunpack.c.0.s8 %v1741
        %v1743 = vperm.slane %v1737, %v1742
        %v1745 = vunpack.c.l.s4 1983009808
        %v1746 = vunpack.c.0.s8 %v1745
        %v1747 = vperm.slane %v1739, %v1746
        %v1748 = vrot.slane %v1731, 4
        %v1749 = vsel %vm690, %v1748, %v1673
        %v1750 = vrot.slane %v1673, 4
        %v1751 = vsel %vm690, %v1731, %v1750
        %v1753 = vunpack.c.l.s4 1983009808
        %v1754 = vunpack.c.0.s8 %v1753
        %v1755 = vperm.slane %v1749, %v1754
        %v1757 = vunpack.c.l.s4 1983009808
        %v1758 = vunpack.c.0.s8 %v1757
        %v1759 = vperm.slane %v1751, %v1758
        %v1760 = vrot.slane %v1755, 4
        %v1761 = vsel %vm690, %v1760, %v1743
        %v1762 = vrot.slane %v1743, 4
        %v1763 = vsel %vm690, %v1755, %v1762
        %v1765 = vunpack.c.l.s4 1934713408
        %v1766 = vunpack.c.0.s8 %v1765
        %v1767 = vperm.slane %v1761, %v1766
        %v1769 = vunpack.c.l.s4 1934713408
        %v1770 = vunpack.c.0.s8 %v1769
        %v1771 = vperm.slane %v1763, %v1770
        %v1772 = vrot.slane %v1759, 4
        %v1773 = vsel %vm690, %v1772, %v1747
        %v1774 = vrot.slane %v1747, 4
        %v1775 = vsel %vm690, %v1759, %v1774
        %v1777 = vunpack.c.l.s4 1934713408
        %v1778 = vunpack.c.0.s8 %v1777
        %v1779 = vperm.slane %v1773, %v1778
        %v1781 = vunpack.c.l.s4 1934713408
        %v1782 = vunpack.c.0.s8 %v1781
        %v1783 = vperm.slane %v1775, %v1782
        %v1784 = vrot.slane %v1767, 4
        %v1785 = vsel %vm690, 0.0, %v1784
        %v1786 = vrot.slane %v1771, 4
        %v1787 = vsel %vm690, 0.0, %v1786
        %v1788 = vrot.slane %v1779, 4
        %v1789 = vsel %vm690, 0.0, %v1788
        %v1790 = vrot.slane %v1783, 4
        %v1791 = vsel %vm690, 0.0, %v1790
        %v1792 = vrot.slane %v1705, 4
        %v1793 = vsel %vm690, %v1792, %v1647
        %v1794 = vrot.slane %v1647, 4
        %v1795 = vsel %vm690, %v1705, %v1794
        %v1797 = vunpack.c.l.s4 1983009808
        %v1798 = vunpack.c.0.s8 %v1797
        %v1799 = vperm.slane %v1793, %v1798
        %v1801 = vunpack.c.l.s4 1983009808
        %v1802 = vunpack.c.0.s8 %v1801
        %v1803 = vperm.slane %v1795, %v1802
        %v1804 = vrot.slane %v1734, 4
        %v1805 = vsel %vm690, %v1804, %v1676
        %v1806 = vrot.slane %v1676, 4
        %v1807 = vsel %vm690, %v1734, %v1806
        %v1809 = vunpack.c.l.s4 1983009808
        %v1810 = vunpack.c.0.s8 %v1809
        %v1811 = vperm.slane %v1805, %v1810
        %v1813 = vunpack.c.l.s4 1983009808
        %v1814 = vunpack.c.0.s8 %v1813
        %v1815 = vperm.slane %v1807, %v1814
        %v1816 = vrot.slane %v1811, 4
        %v1817 = vsel %vm690, %v1816, %v1799
        %v1818 = vrot.slane %v1799, 4
        %v1819 = vsel %vm690, %v1811, %v1818
        %v1821 = vunpack.c.l.s4 1934713408
        %v1822 = vunpack.c.0.s8 %v1821
        %v1823 = vperm.slane %v1817, %v1822
        %v1825 = vunpack.c.l.s4 1934713408
        %v1826 = vunpack.c.0.s8 %v1825
        %v1827 = vperm.slane %v1819, %v1826
        %v1828 = vrot.slane %v1815, 4
        %v1829 = vsel %vm690, %v1828, %v1803
        %v1830 = vrot.slane %v1803, 4
        %v1831 = vsel %vm690, %v1815, %v1830
        %v1833 = vunpack.c.l.s4 1934713408
        %v1834 = vunpack.c.0.s8 %v1833
        %v1835 = vperm.slane %v1829, %v1834
        %v1837 = vunpack.c.l.s4 1934713408
        %v1838 = vunpack.c.0.s8 %v1837
        %v1839 = vperm.slane %v1831, %v1838
        %v1840 = vrot.slane %v1823, 4
        %v1841 = vsel %vm690, 0.0, %v1840
        %v1842 = vrot.slane %v1827, 4
        %v1843 = vsel %vm690, 0.0, %v1842
        %v1844 = vrot.slane %v1835, 4
        %v1845 = vsel %vm690, 0.0, %v1844
        %v1846 = vrot.slane %v1839, 4
        %v1847 = vsel %vm690, 0.0, %v1846
        %v1848 = vsel %vm690, %v1786, %v1767
        %v1850 = vunpack.c.l.s4 1983009808
        %v1851 = vunpack.c.0.s8 %v1850
        %v1852 = vperm.slane %v1848, %v1851
        %v1853 = vrot.slane %v1787, 4
        %v1854 = vsel %vm690, %v1853, %v1785
        %v1856 = vunpack.c.l.s4 1983009808
        %v1857 = vunpack.c.0.s8 %v1856
        %v1858 = vperm.slane %v1854, %v1857
        %v1859 = vsel %vm690, %v1790, %v1779
        %v1861 = vunpack.c.l.s4 1983009808
        %v1862 = vunpack.c.0.s8 %v1861
        %v1863 = vperm.slane %v1859, %v1862
        %v1864 = vrot.slane %v1791, 4
        %v1865 = vsel %vm690, %v1864, %v1789
        %v1867 = vunpack.c.l.s4 1983009808
        %v1868 = vunpack.c.0.s8 %v1867
        %v1869 = vperm.slane %v1865, %v1868
        %v1870 = vrot.slane %v1858, 4
        %v1871 = vsel %vm690, %v1870, %v1852
        %v1872 = vrot.slane %v1852, 4
        %v1873 = vsel %vm690, %v1858, %v1872
        %v1875 = vunpack.c.l.s4 1934713408
        %v1876 = vunpack.c.0.s8 %v1875
        %v1877 = vperm.slane %v1871, %v1876
        %v1879 = vunpack.c.l.s4 1934713408
        %v1880 = vunpack.c.0.s8 %v1879
        %v1881 = vperm.slane %v1873, %v1880
        %v1882 = vrot.slane %v1869, 4
        %v1883 = vsel %vm690, %v1882, %v1863
        %v1884 = vrot.slane %v1863, 4
        %v1885 = vsel %vm690, %v1869, %v1884
        %v1887 = vunpack.c.l.s4 1934713408
        %v1888 = vunpack.c.0.s8 %v1887
        %v1889 = vperm.slane %v1883, %v1888
        %v1891 = vunpack.c.l.s4 1934713408
        %v1892 = vunpack.c.0.s8 %v1891
        %v1893 = vperm.slane %v1885, %v1892
        %v1894 = vrot.slane %v1889, 4
        %v1895 = vsel %vm690, %v1894, %v1877
        %v1896 = vrot.slane %v1877, 4
        %v1897 = vsel %vm690, %v1889, %v1896
        %v1898 = vrot.slane %v1893, 4
        %v1899 = vsel %vm690, %v1898, %v1881
        %v1900 = vrot.slane %v1881, 4
        %v1901 = vsel %vm690, %v1893, %v1900
        %v1902 = vsel %vm690, %v1842, %v1823
        %v1904 = vunpack.c.l.s4 1983009808
        %v1905 = vunpack.c.0.s8 %v1904
        %v1906 = vperm.slane %v1902, %v1905
        %v1907 = vrot.slane %v1843, 4
        %v1908 = vsel %vm690, %v1907, %v1841
        %v1910 = vunpack.c.l.s4 1983009808
        %v1911 = vunpack.c.0.s8 %v1910
        %v1912 = vperm.slane %v1908, %v1911
        %v1913 = vsel %vm690, %v1846, %v1835
        %v1915 = vunpack.c.l.s4 1983009808
        %v1916 = vunpack.c.0.s8 %v1915
        %v1917 = vperm.slane %v1913, %v1916
        %v1918 = vrot.slane %v1847, 4
        %v1919 = vsel %vm690, %v1918, %v1845
        %v1921 = vunpack.c.l.s4 1983009808
        %v1922 = vunpack.c.0.s8 %v1921
        %v1923 = vperm.slane %v1919, %v1922
        %v1924 = vrot.slane %v1912, 4
        %v1925 = vsel %vm690, %v1924, %v1906
        %v1926 = vrot.slane %v1906, 4
        %v1927 = vsel %vm690, %v1912, %v1926
        %v1929 = vunpack.c.l.s4 1934713408
        %v1930 = vunpack.c.0.s8 %v1929
        %v1931 = vperm.slane %v1925, %v1930
        %v1933 = vunpack.c.l.s4 1934713408
        %v1934 = vunpack.c.0.s8 %v1933
        %v1935 = vperm.slane %v1927, %v1934
        %v1936 = vrot.slane %v1923, 4
        %v1937 = vsel %vm690, %v1936, %v1917
        %v1938 = vrot.slane %v1917, 4
        %v1939 = vsel %vm690, %v1923, %v1938
        %v1941 = vunpack.c.l.s4 1934713408
        %v1942 = vunpack.c.0.s8 %v1941
        %v1943 = vperm.slane %v1937, %v1942
        %v1945 = vunpack.c.l.s4 1934713408
        %v1946 = vunpack.c.0.s8 %v1945
        %v1947 = vperm.slane %v1939, %v1946
        %v1948 = vrot.slane %v1943, 4
        %v1949 = vsel %vm690, %v1948, %v1931
        %v1950 = vrot.slane %v1931, 4
        %v1951 = vsel %vm690, %v1943, %v1950
        %v1952 = vrot.slane %v1947, 4
        %v1953 = vsel %vm690, %v1952, %v1935
        %v1954 = vrot.slane %v1935, 4
        %v1955 = vsel %vm690, %v1947, %v1954
        %1958 = vrot.lane.b32.xlu0 %v1897, 32
        %v1959 = vpop.permute.xlu0 %1958
        %1960 = vrot.lane.b32.xlu0 %v1951, 32
        %v1961 = vpop.permute.xlu0 %1960
        %1966 = vrot.lane.b32.xlu0 %v1899, 64
        %v1967 = vpop.permute.xlu0 %1966
        %1968 = vrot.lane.b32.xlu0 %v1953, 64
        %v1969 = vpop.permute.xlu0 %1968
        %1974 = vrot.lane.b32.xlu0 %v1901, 96
        %v1975 = vpop.permute.xlu0 %1974
        %1976 = vrot.lane.b32.xlu0 %v1955, 96
        %v1977 = vpop.permute.xlu0 %1976
        %v1980 = vsel %vm1390, %v1895, %v1959
        %v1981 = vsel %vm1390, %v1949, %v1961
        %vm1982 = vcmask 523264
        %v1983 = vsel %vm1982, %v1980, %v1967
        %v1984 = vsel %vm1982, %v1981, %v1969
        %vm1985 = vcmask 785408
        %v1986 = vsel %vm1985, %v1983, %v1975
        %v1987 = vsel %vm1985, %v1984, %v1977
        %v1988 = vld [vmem:[#allocation8] sm:$0xff]
        %v1989 = vld [vmem:[#allocation8 + $0x8] sm:$0xff]
        %v1990 = vld [vmem:[#allocation8 + $0x10] sm:$0xff]
        %v1991 = vld [vmem:[#allocation8 + $0x18] sm:$0xff]
        %v1992 = vld [vmem:[#allocation8 + $0x20] sm:$0xff]
        %v1993 = vld [vmem:[#allocation8 + $0x28] sm:$0xff]
        %v1994 = vld [vmem:[#allocation8 + $0x30] sm:$0xff]
        %v1995 = vld [vmem:[#allocation8 + $0x38] sm:$0xff]
        %v1996 = vld [vmem:[#allocation8 + $0x40] sm:$0xff]
        %v1997 = vld [vmem:[#allocation8 + $0x48] sm:$0xff]
        %v1998 = vld [vmem:[#allocation8 + $0x50] sm:$0xff]
        %v1999 = vld [vmem:[#allocation8 + $0x58] sm:$0xff]
        %v2000 = vld [vmem:[#allocation8 + $0x60] sm:$0xff]
        %v2001 = vld [vmem:[#allocation8 + $0x68] sm:$0xff]
        %v2002 = vld [vmem:[#allocation8 + $0x70] sm:$0xff]
        %v2003 = vld [vmem:[#allocation8 + $0x78] sm:$0xff]
        %v2004 = vld [vmem:[%s4] sm:$0x1]
        %v2006 = vperm.slane %v2004, 0
        %2008 = vmatpush.msra.mxu0 %v2003
        %2009 = vmatpush.msra.mxu0 %v2002
        %2010 = vmatpush.msra.mxu0 %v2001
        %2011 = vmatpush.msra.mxu0 %v2000
        %2012 = vmatpush.msra.mxu0 %v1999
        %2013 = vmatpush.msra.mxu0 %v1998
        %2014 = vmatpush.msra.mxu0 %v1997
        %2015 = vmatpush.msra.mxu0 %v1996
        %2016 = vmatpush.msra.mxu0 %v1995
        %2017 = vmatpush.msra.mxu0 %v1994
        %2018 = vmatpush.msra.mxu0 %v1993
        %2019 = vmatpush.msra.mxu0 %v1992
        %2020 = vmatpush.msra.mxu0 %v1991
        %2021 = vmatpush.msra.mxu0 %v1990
        %2022 = vmatpush.msra.mxu0 %v1989
        %2023 = vmatpush.msra.mxu0 %v1988
        %2024 = vmatmul.f32.gmra.mxu0 %v1986
        %v2025 = vpop.f32.mrf.mxu0
        %v2026 = vadd.f32 %v2006, %v2025
        %2027 = vmatmul.f32.gmra.mxu0 %v1987
        %v2028 = vpop.f32.mrf.mxu0
        %v2029 = vadd.f32 %v2006, %v2028
        %2030 = vdwg.mxu0
        %v2031 = vadd.f32 %v542, %v2026
        %v2032 = vadd.f32 %v543, %v2029
        %v2033 = vld [vmem:[%s5] sm:$0x1]
        %v2034 = vld [vmem:[%s6] sm:$0x1]
        %2035 = vadd.xlane.f32.xlu0 %v2031
        %v2036 = vpop.xlane.xlu0 %2035
        %2037 = vadd.xlane.f32.xlu0 %v2032
        %v2038 = vpop.xlane.xlu0 %2037
        %v2039 = vrcp.pop 128.0
        %v2040 = vmul.f32 128.0, %v2039
        %v2041 = vsub.f32 1.0, %v2040
        %v2042 = vmul.f32 %v2039, %v2041
        %v2043 = vadd.f32 %v2039, %v2042
        %vm2044 = vweird.f32 %v2039
        %v2045 = vsel %vm2044, %v2039, %v2043
        %v2046 = vmul.f32 %v2036, %v2045
        %v2047 = vmul.f32 %v2038, %v2045
        %v2048 = vsub.f32 %v2031, %v2046
        %v2049 = vsub.f32 %v2032, %v2047
        %v2050 = vmul.f32 %v2048, %v2048
        %v2051 = vmul.f32 %v2049, %v2049
        %2052 = vadd.xlane.f32.xlu0 %v2050
        %v2053 = vpop.xlane.xlu0 %2052
        %2054 = vadd.xlane.f32.xlu0 %v2051
        %v2055 = vpop.xlane.xlu0 %2054
        %v2056 = vmul.f32 %v2053, %v2045
        %v2057 = vmul.f32 %v2055, %v2045
        %v2058 = vadd.f32 %v2056, 1e-05
        %v2059 = vadd.f32 %v2057, 1e-05
        %v2060 = vrsqrt.pop %v2058
        %v2061 = vmul.f32 %v2060, %v2058
        %v2062 = vmul.f32 %v2061, %v2060
        %v2063 = vmul.f32 0.5, %v2062
        %v2064 = vsub.f32 1.5, %v2063
        %v2065 = vmul.f32 %v2060, %v2064
        %vm2066 = vweird.f32 %v2058
        %vm2067 = vweird.f32 %v2060
        %vm2068 = vmor %vm2066, %vm2067
        %v2069 = vsel %vm2068, %v2060, %v2065
        %v2070 = vrsqrt.pop %v2059
        %v2071 = vmul.f32 %v2070, %v2059
        %v2072 = vmul.f32 %v2071, %v2070
        %v2073 = vmul.f32 0.5, %v2072
        %v2074 = vsub.f32 1.5, %v2073
        %v2075 = vmul.f32 %v2070, %v2074
        %vm2076 = vweird.f32 %v2059
        %vm2077 = vweird.f32 %v2070
        %vm2078 = vmor %vm2076, %vm2077
        %v2079 = vsel %vm2078, %v2070, %v2075
        %v2080 = vmul.f32 %v2048, %v2069
        %v2081 = vmul.f32 %v2049, %v2079
        %v2083 = vperm.slane %v2033, 0
        %v2085 = vmul.f32 %v2080, %v2083
        %v2086 = vmul.f32 %v2081, %v2083
        %v2088 = vperm.slane %v2034, 0
        %v2090 = vadd.f32 %v2085, %v2088
        %v2091 = vadd.f32 %v2086, %v2088
        %v2092 = vld [vmem:[#allocation10] sm:$0xff]
        %v2093 = vld [vmem:[#allocation10 + $0x8] sm:$0xff]
        %v2094 = vld [vmem:[#allocation10 + $0x10] sm:$0xff]
        %v2095 = vld [vmem:[#allocation10 + $0x18] sm:$0xff]
        %v2096 = vld [vmem:[#allocation10 + $0x20] sm:$0xff]
        %v2097 = vld [vmem:[#allocation10 + $0x28] sm:$0xff]
        %v2098 = vld [vmem:[#allocation10 + $0x30] sm:$0xff]
        %v2099 = vld [vmem:[#allocation10 + $0x38] sm:$0xff]
        %v2100 = vld [vmem:[#allocation10 + $0x40] sm:$0xff]
        %v2101 = vld [vmem:[#allocation10 + $0x48] sm:$0xff]
        %v2102 = vld [vmem:[#allocation10 + $0x50] sm:$0xff]
        %v2103 = vld [vmem:[#allocation10 + $0x58] sm:$0xff]
        %v2104 = vld [vmem:[#allocation10 + $0x60] sm:$0xff]
        %v2105 = vld [vmem:[#allocation10 + $0x68] sm:$0xff]
        %v2106 = vld [vmem:[#allocation10 + $0x70] sm:$0xff]
        %v2107 = vld [vmem:[#allocation10 + $0x78] sm:$0xff]
        %v2108 = vld [vmem:[#allocation10 + $0x80] sm:$0xff]
        %v2109 = vld [vmem:[#allocation10 + $0x88] sm:$0xff]
        %v2110 = vld [vmem:[#allocation10 + $0x90] sm:$0xff]
        %v2111 = vld [vmem:[#allocation10 + $0x98] sm:$0xff]
        %v2112 = vld [vmem:[#allocation10 + $0xa0] sm:$0xff]
        %v2113 = vld [vmem:[#allocation10 + $0xa8] sm:$0xff]
        %v2114 = vld [vmem:[#allocation10 + $0xb0] sm:$0xff]
        %v2115 = vld [vmem:[#allocation10 + $0xb8] sm:$0xff]
        %v2116 = vld [vmem:[#allocation10 + $0xc0] sm:$0xff]
        %v2117 = vld [vmem:[#allocation10 + $0xc8] sm:$0xff]
        %v2118 = vld [vmem:[#allocation10 + $0xd0] sm:$0xff]
        %v2119 = vld [vmem:[#allocation10 + $0xd8] sm:$0xff]
        %v2120 = vld [vmem:[#allocation10 + $0xe0] sm:$0xff]
        %v2121 = vld [vmem:[#allocation10 + $0xe8] sm:$0xff]
        %v2122 = vld [vmem:[#allocation10 + $0xf0] sm:$0xff]
        %v2123 = vld [vmem:[#allocation10 + $0xf8] sm:$0xff]
        %v2124 = vld [vmem:[%s8] sm:$0x3]
        %v2126 = vperm.slane %v2124, 0
        %v2127 = vperm.slane %v2124, 1
        %2130 = vmatpush.msra.mxu0 %v2122
        %2131 = vmatpush.msra.mxu0 %v2120
        %2132 = vmatpush.msra.mxu0 %v2118
        %2133 = vmatpush.msra.mxu0 %v2116
        %2134 = vmatpush.msra.mxu0 %v2114
        %2135 = vmatpush.msra.mxu0 %v2112
        %2136 = vmatpush.msra.mxu0 %v2110
        %2137 = vmatpush.msra.mxu0 %v2108
        %2138 = vmatpush.msra.mxu0 %v2106
        %2139 = vmatpush.msra.mxu0 %v2104
        %2140 = vmatpush.msra.mxu0 %v2102
        %2141 = vmatpush.msra.mxu0 %v2100
        %2142 = vmatpush.msra.mxu0 %v2098
        %2143 = vmatpush.msra.mxu0 %v2096
        %2144 = vmatpush.msra.mxu0 %v2094
        %2145 = vmatpush.msra.mxu0 %v2092
        %2146 = vmatmul.f32.gmra.mxu0 %v2090
        %v2147 = vpop.f32.mrf.mxu0
        %v2148 = vadd.f32 %v2126, %v2147
        %2149 = vmatmul.f32.gmra.mxu0 %v2091
        %v2150 = vpop.f32.mrf.mxu0
        %v2151 = vadd.f32 %v2126, %v2150
        %2152 = vdwg.mxu0
        %2153 = vmatpush.msra.mxu0 %v2123
        %2154 = vmatpush.msra.mxu0 %v2121
        %2155 = vmatpush.msra.mxu0 %v2119
        %2156 = vmatpush.msra.mxu0 %v2117
        %2157 = vmatpush.msra.mxu0 %v2115
        %2158 = vmatpush.msra.mxu0 %v2113
        %2159 = vmatpush.msra.mxu0 %v2111
        %2160 = vmatpush.msra.mxu0 %v2109
        %2161 = vmatpush.msra.mxu0 %v2107
        %2162 = vmatpush.msra.mxu0 %v2105
        %2163 = vmatpush.msra.mxu0 %v2103
        %2164 = vmatpush.msra.mxu0 %v2101
        %2165 = vmatpush.msra.mxu0 %v2099
        %2166 = vmatpush.msra.mxu0 %v2097
        %2167 = vmatpush.msra.mxu0 %v2095
        %2168 = vmatpush.msra.mxu0 %v2093
        %2169 = vmatmul.f32.gmra.mxu0 %v2090
        %v2170 = vpop.f32.mrf.mxu0
        %v2171 = vadd.f32 %v2127, %v2170
        %2172 = vmatmul.f32.gmra.mxu0 %v2091
        %v2173 = vpop.f32.mrf.mxu0
        %v2174 = vadd.f32 %v2127, %v2173
        %2175 = vdwg.mxu0
        %v2176 = vmax.f32 %v2148, 0.0
        %v2177 = vmax.f32 %v2171, 0.0
        %v2178 = vmax.f32 %v2151, 0.0
        %v2179 = vmax.f32 %v2174, 0.0
        %v2180 = vld [vmem:[#allocation11] sm:$0xff]
        %v2181 = vld [vmem:[#allocation11 + $0x8] sm:$0xff]
        %v2182 = vld [vmem:[#allocation11 + $0x10] sm:$0xff]
        %v2183 = vld [vmem:[#allocation11 + $0x18] sm:$0xff]
        %v2184 = vld [vmem:[#allocation11 + $0x20] sm:$0xff]
        %v2185 = vld [vmem:[#allocation11 + $0x28] sm:$0xff]
        %v2186 = vld [vmem:[#allocation11 + $0x30] sm:$0xff]
        %v2187 = vld [vmem:[#allocation11 + $0x38] sm:$0xff]
        %v2188 = vld [vmem:[#allocation11 + $0x40] sm:$0xff]
        %v2189 = vld [vmem:[#allocation11 + $0x48] sm:$0xff]
        %v2190 = vld [vmem:[#allocation11 + $0x50] sm:$0xff]
        %v2191 = vld [vmem:[#allocation11 + $0x58] sm:$0xff]
        %v2192 = vld [vmem:[#allocation11 + $0x60] sm:$0xff]
        %v2193 = vld [vmem:[#allocation11 + $0x68] sm:$0xff]
        %v2194 = vld [vmem:[#allocation11 + $0x70] sm:$0xff]
        %v2195 = vld [vmem:[#allocation11 + $0x78] sm:$0xff]
        %v2196 = vld [vmem:[#allocation11 + $0x80] sm:$0xff]
        %v2197 = vld [vmem:[#allocation11 + $0x88] sm:$0xff]
        %v2198 = vld [vmem:[#allocation11 + $0x90] sm:$0xff]
        %v2199 = vld [vmem:[#allocation11 + $0x98] sm:$0xff]
        %v2200 = vld [vmem:[#allocation11 + $0xa0] sm:$0xff]
        %v2201 = vld [vmem:[#allocation11 + $0xa8] sm:$0xff]
        %v2202 = vld [vmem:[#allocation11 + $0xb0] sm:$0xff]
        %v2203 = vld [vmem:[#allocation11 + $0xb8] sm:$0xff]
        %v2204 = vld [vmem:[#allocation11 + $0xc0] sm:$0xff]
        %v2205 = vld [vmem:[#allocation11 + $0xc8] sm:$0xff]
        %v2206 = vld [vmem:[#allocation11 + $0xd0] sm:$0xff]
        %v2207 = vld [vmem:[#allocation11 + $0xd8] sm:$0xff]
        %v2208 = vld [vmem:[#allocation11 + $0xe0] sm:$0xff]
        %v2209 = vld [vmem:[#allocation11 + $0xe8] sm:$0xff]
        %v2210 = vld [vmem:[#allocation11 + $0xf0] sm:$0xff]
        %v2211 = vld [vmem:[#allocation11 + $0xf8] sm:$0xff]
        %v2212 = vld [vmem:[%s10] sm:$0x1]
        %v2214 = vperm.slane %v2212, 0
        %2216 = vmatpush.msra.mxu0 %v2195
        %2217 = vmatpush.msra.mxu0 %v2194
        %2218 = vmatpush.msra.mxu0 %v2193
        %2219 = vmatpush.msra.mxu0 %v2192
        %2220 = vmatpush.msra.mxu0 %v2191
        %2221 = vmatpush.msra.mxu0 %v2190
        %2222 = vmatpush.msra.mxu0 %v2189
        %2223 = vmatpush.msra.mxu0 %v2188
        %2224 = vmatpush.msra.mxu0 %v2187
        %2225 = vmatpush.msra.mxu0 %v2186
        %2226 = vmatpush.msra.mxu0 %v2185
        %2227 = vmatpush.msra.mxu0 %v2184
        %2228 = vmatpush.msra.mxu0 %v2183
        %2229 = vmatpush.msra.mxu0 %v2182
        %2230 = vmatpush.msra.mxu0 %v2181
        %2231 = vmatpush.msra.mxu0 %v2180
        %2232 = vmatmul.f32.gmra.mxu0 %v2176
        %v2233 = vpop.f32.mrf.mxu0
        %v2234 = vadd.f32 %v2214, %v2233
        %2235 = vmatmul.f32.gmra.mxu0 %v2178
        %v2236 = vpop.f32.mrf.mxu0
        %v2237 = vadd.f32 %v2214, %v2236
        %2238 = vdwg.mxu0
        %2239 = vmatpush.msra.mxu0 %v2211
        %2240 = vmatpush.msra.mxu0 %v2210
        %2241 = vmatpush.msra.mxu0 %v2209
        %2242 = vmatpush.msra.mxu0 %v2208
        %2243 = vmatpush.msra.mxu0 %v2207
        %2244 = vmatpush.msra.mxu0 %v2206
        %2245 = vmatpush.msra.mxu0 %v2205
        %2246 = vmatpush.msra.mxu0 %v2204
        %2247 = vmatpush.msra.mxu0 %v2203
        %2248 = vmatpush.msra.mxu0 %v2202
        %2249 = vmatpush.msra.mxu0 %v2201
        %2250 = vmatpush.msra.mxu0 %v2200
        %2251 = vmatpush.msra.mxu0 %v2199
        %2252 = vmatpush.msra.mxu0 %v2198
        %2253 = vmatpush.msra.mxu0 %v2197
        %2254 = vmatpush.msra.mxu0 %v2196
        %2255 = vmatmul.f32.gmra.mxu0 %v2177
        %v2256 = vpop.f32.mrf.mxu0
        %v2257 = vadd.f32 %v2234, %v2256
        %2258 = vmatmul.f32.gmra.mxu0 %v2179
        %v2259 = vpop.f32.mrf.mxu0
        %v2260 = vadd.f32 %v2237, %v2259
        %2261 = vdwg.mxu0
        %v2262 = vadd.f32 %v2090, %v2257
        %v2263 = vadd.f32 %v2091, %v2260
        %v2264 = vld [vmem:[%s11] sm:$0x1]
        %v2265 = vld [vmem:[%s12] sm:$0x1]
        %2266 = vadd.xlane.f32.xlu0 %v2262
        %v2267 = vpop.xlane.xlu0 %2266
        %2268 = vadd.xlane.f32.xlu0 %v2263
        %v2269 = vpop.xlane.xlu0 %2268
        %v2270 = vmul.f32 %v2267, %v2045
        %v2271 = vmul.f32 %v2269, %v2045
        %v2272 = vsub.f32 %v2262, %v2270
        %v2273 = vsub.f32 %v2263, %v2271
        %v2274 = vmul.f32 %v2272, %v2272
        %v2275 = vmul.f32 %v2273, %v2273
        %2276 = vadd.xlane.f32.xlu0 %v2274
        %v2277 = vpop.xlane.xlu0 %2276
        %2278 = vadd.xlane.f32.xlu0 %v2275
        %v2279 = vpop.xlane.xlu0 %2278
        %v2280 = vmul.f32 %v2277, %v2045
        %v2281 = vmul.f32 %v2279, %v2045
        %v2282 = vadd.f32 %v2280, 1e-05
        %v2283 = vadd.f32 %v2281, 1e-05
        %v2284 = vrsqrt.pop %v2282
        %v2285 = vmul.f32 %v2284, %v2282
        %v2286 = vmul.f32 %v2285, %v2284
        %v2287 = vmul.f32 0.5, %v2286
        %v2288 = vsub.f32 1.5, %v2287
        %v2289 = vmul.f32 %v2284, %v2288
        %vm2290 = vweird.f32 %v2282
        %vm2291 = vweird.f32 %v2284
        %vm2292 = vmor %vm2290, %vm2291
        %v2293 = vsel %vm2292, %v2284, %v2289
        %v2294 = vrsqrt.pop %v2283
        %v2295 = vmul.f32 %v2294, %v2283
        %v2296 = vmul.f32 %v2295, %v2294
        %v2297 = vmul.f32 0.5, %v2296
        %v2298 = vsub.f32 1.5, %v2297
        %v2299 = vmul.f32 %v2294, %v2298
        %vm2300 = vweird.f32 %v2283
        %vm2301 = vweird.f32 %v2294
        %vm2302 = vmor %vm2300, %vm2301
        %v2303 = vsel %vm2302, %v2294, %v2299
        %v2304 = vmul.f32 %v2272, %v2293
        %v2305 = vmul.f32 %v2273, %v2303
        %v2307 = vperm.slane %v2264, 0
        %v2309 = vmul.f32 %v2304, %v2307
        %v2310 = vmul.f32 %v2305, %v2307
        %v2312 = vperm.slane %v2265, 0
        %v2314 = vadd.f32 %v2309, %v2312
        %v2315 = vadd.f32 %v2310, %v2312
        %2316 = vst [vmem:[%s541] sm:$0xff] %v2314
        %2317 = vst [vmem:[%s541 + $0x8] sm:$0xff] %v2315
        %s2318 = sand.u32 %s319, 1
        %s2319 = scalar_lea.sflag [#allocation4], %s2318
        %s2320 = sand.u32 %s319, 1
        %s2321 = smul.addr %s2320, 16
        %s2322 = scalar_lea.vmem [#allocation13], %s2321
        // Predicated region
        $region97: #{tpu_custom_call.1} parent=71 // pred_check
          %p2323 = pneg %p329
        $region98: #{tpu_custom_call.1} parent=71 // pred_check_branch
          %2325 = sbr.rel (%p2323) target = $region100
        $region99: #{tpu_custom_call.1} parent=71 // pred_region
          %2327 = vsyncadd %s2319, 0
          %s2328 = smul.addr %s33, 2
          %s2329 = smul.addr %s2328, 8
          %s2330 = scalar_lea.hbm %s13, %s2329
          %s2331 = sshll.u32 %s2322, 4
          %s2332 = int_to_ptr.vmem [resolvable:$true] %s2331
          %s2333 = sshll.u32 %s2330, 4
          %s2334 = int_to_ptr.hbm [resolvable:$true] %s2333
          %2339 = dma.vmem_to_hbm [thread:$0]  %s2332, 256, %s2334, %s2319, 128, 128, 8
        $region100: #{tpu_custom_call.1} parent=71 // pred_fallthru
          _
      $region72: #{tpu_custom_call.1} parent=5 // pred_fallthru
        _
      %p2340 = scmp.le.s32.totalorder 2, %s28
      // Predicated region
      $region101: #{tpu_custom_call.1} parent=5 // pred_check
        %p2341 = pneg %p2340
      $region102: #{tpu_custom_call.1} parent=5 // pred_check_branch
        %2343 = sbr.rel (%p2341) target = $region104
      $region103: #{tpu_custom_call.1} parent=5 // pred_region
        %s2344 = ssub.s32 %s28, 2
        // Predicated region
        $region105: #{tpu_custom_call.1} parent=103 // pred_check
          %p2345 = pneg %p335
        $region106: #{tpu_custom_call.1} parent=103 // pred_check_branch
          %2347 = sbr.rel (%p2345) target = $region108
        $region107: #{tpu_custom_call.1} parent=103 // pred_region
          %s2348 = sand.u32 %s320, 1
          %s2349 = scalar_lea.sflag [#allocation4], %s2348
          %s2350 = sand.u32 %s320, 1
          %s2351 = smul.addr %s2350, 16
          %s2352 = scalar_lea.vmem [#allocation13], %s2351
          %2354 = dma.done %s2349, 256
        $region108: #{tpu_custom_call.1} parent=103 // pred_fallthru
          _
      $region104: #{tpu_custom_call.1} parent=5 // pred_fallthru
        _
    $region6: #{tpu_custom_call.1} parent=1 // loop_footer
      %s32 = sadd.s32 1, %s28
    $region7: #{tpu_custom_call.1} parent=1 // loop_footer_branch
      %27 = sbr.rel target = $region3
    $region8: #{tpu_custom_call.1} parent=1 // loop_exit
      _
    %2355 = vsyncpa [#allocation3], 1
    %s2356 = scalar_lea.sflag [#allocation3], 1
    %2357 = vsyncpa %s2356, 1
    %2358 = vsyncpa [#allocation6], 1
    %2359 = vsyncpa [#allocation9], 1
    %2360 = vsyncpa [#allocation12], 1
    %2361 = vsyncpa [#allocation4], 1
    %s2362 = scalar_lea.sflag [#allocation4], 1
    %2363 = vsyncpa %s2362, 1

// kernel: tpu_custom_call.1
$region0: #{tpu_custom_call.1}
  #allocation0 [shape = 'u32[]', space=smem, size = 0x4, offset = 0x4, fixed_abs, tag = 'smem constant byte address 0x4 - core index']
  #allocation1 [shape = 'u32[72,128]{1,0:T(1,128)}', space=vmem, size = 0x9000, scoped, tag = 'internal scratch']
  %s0 = inlined_call_operand.hbm [shape: f32[2,16,128], index: 0, kind: input, shape index: {}]
  %s1 = inlined_call_operand.hbm [shape: f32[128,384], index: 1, kind: input, shape index: {}]
  %s2 = inlined_call_operand.hbm [shape: f32[1,384], index: 2, kind: input, shape index: {}]
  %s3 = inlined_call_operand.hbm [shape: f32[128,128], index: 3, kind: input, shape index: {}]
  %s4 = inlined_call_operand.vmem [shape: f32[1,128], index: 4, kind: input, shape index: {}]
  %s5 = inlined_call_operand.vmem [shape: f32[1,128], index: 5, kind: input, shape index: {}]
  %s6 = inlined_call_operand.vmem [shape: f32[1,128], index: 6, kind: input, shape index: {}]
  %s7 = inlined_call_operand.hbm [shape: f32[128,256], index: 7, kind: input, shape index: {}]
  %s8 = inlined_call_operand.vmem [shape: f32[1,256], index: 8, kind: input, shape index: {}]
  %s9 = inlined_call_operand.hbm [shape: f32[256,128], index: 9, kind: input, shape index: {}]
  %s10 = inlined_call_operand.vmem [shape: f32[1,128], index: 10, kind: input, shape index: {}]
  %s11 = inlined_call_operand.vmem [shape: f32[1,128], index: 11, kind: input, shape index: {}]
  %s12 = inlined_call_operand.vmem [shape: f32[1,128], index: 12, kind: input, shape index: {}]
  %s13 = inlined_call_operand.hbm [shape: f32[2,16,128], index: 13, kind: output, shape index: {}]
  %s14 = sld [smem:[#allocation0]]
  $region109: #{tpu_custom_call.1} parent=0
    _
  %s16 = ssub.s32 1, %s14
  %s17 = scalar_select 0, %s16, %s14
  $region1: #{tpu_custom_call.1} parent=0
    #allocation2 [shape = 'u8[16384]{0}', space=vmem, size = 0x4000, scoped, tag = 'input window, operand 0']
    #allocation3 [shape = 's32[2]{0}', space=sflag, size = 0x8, scoped, tag = 'scoped memory for tpu_custom_call.1']
    #allocation4 [shape = 's32[2]{0}', space=sflag, size = 0x8, scoped, tag = 'scoped memory for tpu_custom_call.1']
    #allocation5 [shape = 'u8[196608]{0}', space=vmem, size = 0x30000, scoped, tag = 'input window, operand 1, single buffered']
    #allocation6 [shape = 's32[1]{0}', space=sflag, size = 0x4, scoped, tag = 'scoped memory for tpu_custom_call.1']
    #allocation7 [shape = 'u8[1536]{0}', space=vmem, size = 0x800, scoped, tag = 'input window, operand 2, single buffered']
    #allocation8 [shape = 'u8[65536]{0}', space=vmem, size = 0x10000, scoped, tag = 'input window, operand 3, single buffered']
    #allocation9 [shape = 's32[1]{0}', space=sflag, size = 0x4, scoped, tag = 'scoped memory for tpu_custom_call.1']
    #allocation10 [shape = 'u8[131072]{0}', space=vmem, size = 0x20000, scoped, tag = 'input window, operand 7, single buffered']
    #allocation11 [shape = 'u8[131072]{0}', space=vmem, size = 0x20000, scoped, tag = 'input window, operand 9, single buffered']
    #allocation12 [shape = 's32[1]{0}', space=sflag, size = 0x4, scoped, tag = 'scoped memory for tpu_custom_call.1']
    #allocation13 [shape = 'u8[16384]{0}', space=vmem, size = 0x4000, scoped, tag = 'output window, operand 0']
    %18 = vsyncpa [#allocation3], 0
    %s19 = scalar_lea.sflag [#allocation3], 1
    %20 = vsyncpa %s19, 0
    %21 = vsyncpa [#allocation6], 0
    %22 = vsyncpa [#allocation9], 0
    %23 = vsyncpa [#allocation12], 0
    %24 = vsyncpa [#allocation4], 0
    %s25 = scalar_lea.sflag [#allocation4], 1
    %26 = vsyncpa %s25, 0
    loop: start=0, step=1, limit=4
    $region2: #{tpu_custom_call.1} parent=1 // loop_pre_header
      _
    $region3: #{tpu_custom_call.1} parent=1 // loop_header
      %s28 = sphi 0, %s32
      %p29 = scmp.ge.s32.totalorder %s28, 4
      %s38 = sphi 0, %s40
      %s41 = sphi 0, %s38
      %s42 = sphi 0, %s41
      %s58 = sphi 0, %s42
      %s62 = sphi 0, %s62
      %s64 = sphi 0, %s62
      %s65 = sphi 0, %s64
      %s79 = sphi 0, %s65
      %s83 = sphi 0, %s83
      %s85 = sphi 0, %s83
      %s86 = sphi 0, %s85
      %s100 = sphi 0, %s86
      %s104 = sphi 0, %s104
      %s106 = sphi 0, %s104
      %s107 = sphi 0, %s106
      %s121 = sphi 0, %s107
      %s125 = sphi 0, %s125
      %s127 = sphi 0, %s125
      %s128 = sphi 0, %s127
      %s142 = sphi 0, %s128
      %s146 = sphi 0, %s146
      %s148 = sphi 0, %s146
      %s149 = sphi 0, %s148
      %s163 = sphi 0, %s149
      %s167 = sphi 0, %s167
      %s169 = sphi 0, %s167
      %s170 = sphi 0, %s169
      %s184 = sphi 0, %s170
      %s188 = sphi 0, %s188
      %s190 = sphi 0, %s188
      %s191 = sphi 0, %s190
      %s205 = sphi 0, %s191
      %s209 = sphi 0, %s209
      %s211 = sphi 0, %s209
      %s212 = sphi 0, %s211
      %s226 = sphi 0, %s212
      %s230 = sphi 0, %s230
      %s232 = sphi 0, %s230
      %s233 = sphi 0, %s232
      %s247 = sphi 0, %s233
      %s251 = sphi 0, %s251
      %s253 = sphi 0, %s251
      %s254 = sphi 0, %s253
      %s268 = sphi 0, %s254
      %s272 = sphi 0, %s272
      %s274 = sphi 0, %s272
      %s275 = sphi 0, %s274
      %s289 = sphi 0, %s275
      %s293 = sphi 0, %s293
      %s295 = sphi 0, %s293
      %s296 = sphi 0, %s295
      %s310 = sphi 0, %s296
      %s316 = sphi 0, %s318
      %s319 = sphi 0, %s316
      %s320 = sphi 0, %s319
      %s336 = sphi 0, %s320
    $region4: #{tpu_custom_call.1} parent=1 // loop_header_branch
      %31 = sbr.rel (%p29) target = $region8
    $region5: #{tpu_custom_call.1} parent=1 // loop_body
      %s33 = ssub.s32 %s28, 1
      %s34 = ssub.s32 %s28, 2
      %s35 = sadd.s32 %s28, 1
      %s36 = ssub.s32 %s28, %s35
      %p37 = scmp.eq.s32.totalorder %s36, 0
      %s39 = sadd.s32 %s38, 1
      %s40 = scalar_select %p37, %s38, %s39
      %p43 = pneg %p37
      %p44 = scmp.eq.s32.totalorder %s28, 1
      %p45 = por %p43, %p44
      %p46 = scmp.ne.s32.totalorder %s38, %s41
      %p47 = scmp.eq.s32.totalorder %s28, 0
      %p48 = por %p46, %p47
      %p49 = scmp.ne.s32.totalorder %s38, %s41
      %p50 = scmp.eq.s32.totalorder %s33, 1
      %p51 = por %p49, %p50
      %p52 = scmp.ne.s32.totalorder %s41, %s42
      %p53 = scmp.eq.s32.totalorder %s33, 0
      %p54 = por %p52, %p53
      %p55 = scmp.ne.s32.totalorder %s41, %s42
      %p56 = scmp.eq.s32.totalorder %s34, 1
      %p57 = por %p55, %p56
      %p59 = scmp.ne.s32.totalorder %s42, %s58
      %p60 = scmp.eq.s32.totalorder %s34, 0
      %p61 = por %p59, %p60
      %s63 = sadd.s32 %s62, 1
      %p66 = scmp.eq.s32.totalorder %s28, 1
      %p67 = scmp.ne.s32.totalorder %s62, %s64
      %p68 = scmp.eq.s32.totalorder %s28, 0
      %p69 = por %p67, %p68
      %p70 = scmp.ne.s32.totalorder %s62, %s64
      %p71 = scmp.eq.s32.totalorder %s33, 1
      %p72 = por %p70, %p71
      %p73 = scmp.ne.s32.totalorder %s64, %s65
      %p74 = scmp.eq.s32.totalorder %s33, 0
      %p75 = por %p73, %p74
      %p76 = scmp.ne.s32.totalorder %s64, %s65
      %p77 = scmp.eq.s32.totalorder %s34, 1
      %p78 = por %p76, %p77
      %p80 = scmp.ne.s32.totalorder %s65, %s79
      %p81 = scmp.eq.s32.totalorder %s34, 0
      %p82 = por %p80, %p81
      %s84 = sadd.s32 %s83, 1
      %p87 = scmp.eq.s32.totalorder %s28, 1
      %p88 = scmp.ne.s32.totalorder %s83, %s85
      %p89 = scmp.eq.s32.totalorder %s28, 0
      %p90 = por %p88, %p89
      %p91 = scmp.ne.s32.totalorder %s83, %s85
      %p92 = scmp.eq.s32.totalorder %s33, 1
      %p93 = por %p91, %p92
      %p94 = scmp.ne.s32.totalorder %s85, %s86
      %p95 = scmp.eq.s32.totalorder %s33, 0
      %p96 = por %p94, %p95
      %p97 = scmp.ne.s32.totalorder %s85, %s86
      %p98 = scmp.eq.s32.totalorder %s34, 1
      %p99 = por %p97, %p98
      %p101 = scmp.ne.s32.totalorder %s86, %s100
      %p102 = scmp.eq.s32.totalorder %s34, 0
      %p103 = por %p101, %p102
      %s105 = sadd.s32 %s104, 1
      %p108 = scmp.eq.s32.totalorder %s28, 1
      %p109 = scmp.ne.s32.totalorder %s104, %s106
      %p110 = scmp.eq.s32.totalorder %s28, 0
      %p111 = por %p109, %p110
      %p112 = scmp.ne.s32.totalorder %s104, %s106
      %p113 = scmp.eq.s32.totalorder %s33, 1
      %p114 = por %p112, %p113
      %p115 = scmp.ne.s32.totalorder %s106, %s107
      %p116 = scmp.eq.s32.totalorder %s33, 0
      %p117 = por %p115, %p116
      %p118 = scmp.ne.s32.totalorder %s106, %s107
      %p119 = scmp.eq.s32.totalorder %s34, 1
      %p120 = por %p118, %p119
      %p122 = scmp.ne.s32.totalorder %s107, %s121
      %p123 = scmp.eq.s32.totalorder %s34, 0
      %p124 = por %p122, %p123
      %s126 = sadd.s32 %s125, 1
      %p129 = scmp.eq.s32.totalorder %s28, 1
      %p130 = scmp.ne.s32.totalorder %s125, %s127
      %p131 = scmp.eq.s32.totalorder %s28, 0
      %p132 = por %p130, %p131
      %p133 = scmp.ne.s32.totalorder %s125, %s127
      %p134 = scmp.eq.s32.totalorder %s33, 1
      %p135 = por %p133, %p134
      %p136 = scmp.ne.s32.totalorder %s127, %s128
      %p137 = scmp.eq.s32.totalorder %s33, 0
      %p138 = por %p136, %p137
      %p139 = scmp.ne.s32.totalorder %s127, %s128
      %p140 = scmp.eq.s32.totalorder %s34, 1
      %p141 = por %p139, %p140
      %p143 = scmp.ne.s32.totalorder %s128, %s142
      %p144 = scmp.eq.s32.totalorder %s34, 0
      %p145 = por %p143, %p144
      %s147 = sadd.s32 %s146, 1
      %p150 = scmp.eq.s32.totalorder %s28, 1
      %p151 = scmp.ne.s32.totalorder %s146, %s148
      %p152 = scmp.eq.s32.totalorder %s28, 0
      %p153 = por %p151, %p152
      %p154 = scmp.ne.s32.totalorder %s146, %s148
      %p155 = scmp.eq.s32.totalorder %s33, 1
      %p156 = por %p154, %p155
      %p157 = scmp.ne.s32.totalorder %s148, %s149
      %p158 = scmp.eq.s32.totalorder %s33, 0
      %p159 = por %p157, %p158
      %p160 = scmp.ne.s32.totalorder %s148, %s149
      %p161 = scmp.eq.s32.totalorder %s34, 1
      %p162 = por %p160, %p161
      %p164 = scmp.ne.s32.totalorder %s149, %s163
      %p165 = scmp.eq.s32.totalorder %s34, 0
      %p166 = por %p164, %p165
      %s168 = sadd.s32 %s167, 1
      %p171 = scmp.eq.s32.totalorder %s28, 1
      %p172 = scmp.ne.s32.totalorder %s167, %s169
      %p173 = scmp.eq.s32.totalorder %s28, 0
      %p174 = por %p172, %p173
      %p175 = scmp.ne.s32.totalorder %s167, %s169
      %p176 = scmp.eq.s32.totalorder %s33, 1
      %p177 = por %p175, %p176
      %p178 = scmp.ne.s32.totalorder %s169, %s170
      %p179 = scmp.eq.s32.totalorder %s33, 0
      %p180 = por %p178, %p179
      %p181 = scmp.ne.s32.totalorder %s169, %s170
      %p182 = scmp.eq.s32.totalorder %s34, 1
      %p183 = por %p181, %p182
      %p185 = scmp.ne.s32.totalorder %s170, %s184
      %p186 = scmp.eq.s32.totalorder %s34, 0
      %p187 = por %p185, %p186
      %s189 = sadd.s32 %s188, 1
      %p192 = scmp.eq.s32.totalorder %s28, 1
      %p193 = scmp.ne.s32.totalorder %s188, %s190
      %p194 = scmp.eq.s32.totalorder %s28, 0
      %p195 = por %p193, %p194
      %p196 = scmp.ne.s32.totalorder %s188, %s190
      %p197 = scmp.eq.s32.totalorder %s33, 1
      %p198 = por %p196, %p197
      %p199 = scmp.ne.s32.totalorder %s190, %s191
      %p200 = scmp.eq.s32.totalorder %s33, 0
      %p201 = por %p199, %p200
      %p202 = scmp.ne.s32.totalorder %s190, %s191
      %p203 = scmp.eq.s32.totalorder %s34, 1
      %p204 = por %p202, %p203
      %p206 = scmp.ne.s32.totalorder %s191, %s205
      %p207 = scmp.eq.s32.totalorder %s34, 0
      %p208 = por %p206, %p207
      %s210 = sadd.s32 %s209, 1
      %p213 = scmp.eq.s32.totalorder %s28, 1
      %p214 = scmp.ne.s32.totalorder %s209, %s211
      %p215 = scmp.eq.s32.totalorder %s28, 0
      %p216 = por %p214, %p215
      %p217 = scmp.ne.s32.totalorder %s209, %s211
      %p218 = scmp.eq.s32.totalorder %s33, 1
      %p219 = por %p217, %p218
      %p220 = scmp.ne.s32.totalorder %s211, %s212
      %p221 = scmp.eq.s32.totalorder %s33, 0
      %p222 = por %p220, %p221
      %p223 = scmp.ne.s32.totalorder %s211, %s212
      %p224 = scmp.eq.s32.totalorder %s34, 1
      %p225 = por %p223, %p224
      %p227 = scmp.ne.s32.totalorder %s212, %s226
      %p228 = scmp.eq.s32.totalorder %s34, 0
      %p229 = por %p227, %p228
      %s231 = sadd.s32 %s230, 1
      %p234 = scmp.eq.s32.totalorder %s28, 1
      %p235 = scmp.ne.s32.totalorder %s230, %s232
      %p236 = scmp.eq.s32.totalorder %s28, 0
      %p237 = por %p235, %p236
      %p238 = scmp.ne.s32.totalorder %s230, %s232
      %p239 = scmp.eq.s32.totalorder %s33, 1
      %p240 = por %p238, %p239
      %p241 = scmp.ne.s32.totalorder %s232, %s233
      %p242 = scmp.eq.s32.totalorder %s33, 0
      %p243 = por %p241, %p242
      %p244 = scmp.ne.s32.totalorder %s232, %s233
      %p245 = scmp.eq.s32.totalorder %s34, 1
      %p246 = por %p244, %p245
      %p248 = scmp.ne.s32.totalorder %s233, %s247
      %p249 = scmp.eq.s32.totalorder %s34, 0
      %p250 = por %p248, %p249
      %s252 = sadd.s32 %s251, 1
      %p255 = scmp.eq.s32.totalorder %s28, 1
      %p256 = scmp.ne.s32.totalorder %s251, %s253
      %p257 = scmp.eq.s32.totalorder %s28, 0
      %p258 = por %p256, %p257
      %p259 = scmp.ne.s32.totalorder %s251, %s253
      %p260 = scmp.eq.s32.totalorder %s33, 1
      %p261 = por %p259, %p260
      %p262 = scmp.ne.s32.totalorder %s253, %s254
      %p263 = scmp.eq.s32.totalorder %s33, 0
      %p264 = por %p262, %p263
      %p265 = scmp.ne.s32.totalorder %s253, %s254
      %p266 = scmp.eq.s32.totalorder %s34, 1
      %p267 = por %p265, %p266
      %p269 = scmp.ne.s32.totalorder %s254, %s268
      %p270 = scmp.eq.s32.totalorder %s34, 0
      %p271 = por %p269, %p270
      %s273 = sadd.s32 %s272, 1
      %p276 = scmp.eq.s32.totalorder %s28, 1
      %p277 = scmp.ne.s32.totalorder %s272, %s274
      %p278 = scmp.eq.s32.totalorder %s28, 0
      %p279 = por %p277, %p278
      %p280 = scmp.ne.s32.totalorder %s272, %s274
      %p281 = scmp.eq.s32.totalorder %s33, 1
      %p282 = por %p280, %p281
      %p283 = scmp.ne.s32.totalorder %s274, %s275
      %p284 = scmp.eq.s32.totalorder %s33, 0
      %p285 = por %p283, %p284
      %p286 = scmp.ne.s32.totalorder %s274, %s275
      %p287 = scmp.eq.s32.totalorder %s34, 1
      %p288 = por %p286, %p287
      %p290 = scmp.ne.s32.totalorder %s275, %s289
      %p291 = scmp.eq.s32.totalorder %s34, 0
      %p292 = por %p290, %p291
      %s294 = sadd.s32 %s293, 1
      %p297 = scmp.eq.s32.totalorder %s28, 1
      %p298 = scmp.ne.s32.totalorder %s293, %s295
      %p299 = scmp.eq.s32.totalorder %s28, 0
      %p300 = por %p298, %p299
      %p301 = scmp.ne.s32.totalorder %s293, %s295
      %p302 = scmp.eq.s32.totalorder %s33, 1
      %p303 = por %p301, %p302
      %p304 = scmp.ne.s32.totalorder %s295, %s296
      %p305 = scmp.eq.s32.totalorder %s33, 0
      %p306 = por %p304, %p305
      %p307 = scmp.ne.s32.totalorder %s295, %s296
      %p308 = scmp.eq.s32.totalorder %s34, 1
      %p309 = por %p307, %p308
      %p311 = scmp.ne.s32.totalorder %s296, %s310
      %p312 = scmp.eq.s32.totalorder %s34, 0
      %p313 = por %p311, %p312
      %s314 = ssub.s32 %s28, %s35
      %p315 = scmp.eq.s32.totalorder %s314, 0
      %s317 = sadd.s32 %s316, 1
      %s318 = scalar_select %p315, %s316, %s317
      %p321 = pneg %p315
      %p322 = scmp.eq.s32.totalorder %s28, 1
      %p323 = por %p321, %p322
      %p324 = scmp.ne.s32.totalorder %s316, %s319
      %p325 = scmp.eq.s32.totalorder %s28, 0
      %p326 = por %p324, %p325
      %p327 = scmp.ne.s32.totalorder %s316, %s319
      %p328 = scmp.eq.s32.totalorder %s33, 1
      %p329 = por %p327, %p328
      %p330 = scmp.ne.s32.totalorder %s319, %s320
      %p331 = scmp.eq.s32.totalorder %s33, 0
      %p332 = por %p330, %p331
      %p333 = scmp.ne.s32.totalorder %s319, %s320
      %p334 = scmp.eq.s32.totalorder %s34, 1
      %p335 = por %p333, %p334
      %p337 = scmp.ne.s32.totalorder %s320, %s336
      %p338 = scmp.eq.s32.totalorder %s34, 0
      %p339 = por %p337, %p338
      %p340 = scmp.le.s32.totalorder 1, %s28
      %p341 = scmp.lt.s32.totalorder %s28, 3
      %p342 = pnand %p340, %p341
      %p343 = pneg %p342
      // Predicated region
      $region9: #{tpu_custom_call.1} parent=5 // pred_check
        _
      $region10: #{tpu_custom_call.1} parent=5 // pred_check_branch
        %345 = sbr.rel (%p342) target = $region12
      $region11: #{tpu_custom_call.1} parent=5 // pred_region
        %s346 = ssub.s32 %s28, 1
        // Predicated region
        $region13: #{tpu_custom_call.1} parent=11 // pred_check
          %p347 = pneg %p75
        $region14: #{tpu_custom_call.1} parent=11 // pred_check_branch
          %349 = sbr.rel (%p347) target = $region16
        $region15: #{tpu_custom_call.1} parent=11 // pred_region
          %351 = vsyncadd [#allocation6], 0
          %s352 = sshll.u32 %s1, 4
          %s353 = int_to_ptr.hbm [resolvable:$true] %s352
          %s354 = sshll.u32 [#allocation5], 4
          %s355 = int_to_ptr.vmem [resolvable:$true] %s354
          %360 = dma.hbm_to_vmem [thread:$0]  %s353, 6144, %s355, [#allocation6], 384, 384, 24
        $region16: #{tpu_custom_call.1} parent=11 // pred_fallthru
          _
        // Predicated region
        $region17: #{tpu_custom_call.1} parent=11 // pred_check
          %p361 = pneg %p96
        $region18: #{tpu_custom_call.1} parent=11 // pred_check_branch
          %363 = sbr.rel (%p361) target = $region20
        $region19: #{tpu_custom_call.1} parent=11 // pred_region
          %365 = vsyncadd [#allocation6], 0
          %s367 = sshll.u32 %s2, 4
          %s368 = int_to_ptr.hbm [resolvable:$true] %s367
          %s369 = sshll.u32 [#allocation7], 4
          %s370 = int_to_ptr.vmem [resolvable:$true] %s369
          %372 = dma.hbm_to_vmem [thread:$0]  %s368, 48, %s370, [#allocation6]
        $region20: #{tpu_custom_call.1} parent=11 // pred_fallthru
          _
        // Predicated region
        $region21: #{tpu_custom_call.1} parent=11 // pred_check
          %p373 = pneg %p117
        $region22: #{tpu_custom_call.1} parent=11 // pred_check_branch
          %375 = sbr.rel (%p373) target = $region24
        $region23: #{tpu_custom_call.1} parent=11 // pred_region
          %377 = vsyncadd [#allocation9], 0
          %s378 = sshll.u32 %s3, 4
          %s379 = int_to_ptr.hbm [resolvable:$true] %s378
          %s380 = sshll.u32 [#allocation8], 4
          %s381 = int_to_ptr.vmem [resolvable:$true] %s380
          %386 = dma.hbm_to_vmem [thread:$0]  %s379, 2048, %s381, [#allocation9], 128, 128, 8
        $region24: #{tpu_custom_call.1} parent=11 // pred_fallthru
          _
        // Predicated region
        $region25: #{tpu_custom_call.1} parent=11 // pred_check
          %p387 = pneg %p138
        $region26: #{tpu_custom_call.1} parent=11 // pred_check_branch
          %389 = sbr.rel (%p387) target = $region28
        $region27: #{tpu_custom_call.1} parent=11 // pred_region
          _
        $region28: #{tpu_custom_call.1} parent=11 // pred_fallthru
          _
        // Predicated region
        $region29: #{tpu_custom_call.1} parent=11 // pred_check
          %p390 = pneg %p159
        $region30: #{tpu_custom_call.1} parent=11 // pred_check_branch
          %392 = sbr.rel (%p390) target = $region32
        $region31: #{tpu_custom_call.1} parent=11 // pred_region
          _
        $region32: #{tpu_custom_call.1} parent=11 // pred_fallthru
          _
        // Predicated region
        $region33: #{tpu_custom_call.1} parent=11 // pred_check
          %p393 = pneg %p180
        $region34: #{tpu_custom_call.1} parent=11 // pred_check_branch
          %395 = sbr.rel (%p393) target = $region36
        $region35: #{tpu_custom_call.1} parent=11 // pred_region
          _
        $region36: #{tpu_custom_call.1} parent=11 // pred_fallthru
          _
        // Predicated region
        $region37: #{tpu_custom_call.1} parent=11 // pred_check
          %p396 = pneg %p201
        $region38: #{tpu_custom_call.1} parent=11 // pred_check_branch
          %398 = sbr.rel (%p396) target = $region40
        $region39: #{tpu_custom_call.1} parent=11 // pred_region
          %400 = vsyncadd [#allocation9], 0
          %s401 = sshll.u32 %s7, 4
          %s402 = int_to_ptr.hbm [resolvable:$true] %s401
          %s403 = sshll.u32 [#allocation10], 4
          %s404 = int_to_ptr.vmem [resolvable:$true] %s403
          %409 = dma.hbm_to_vmem [thread:$0]  %s402, 4096, %s404, [#allocation9], 256, 256, 16
        $region40: #{tpu_custom_call.1} parent=11 // pred_fallthru
          _
        // Predicated region
        $region41: #{tpu_custom_call.1} parent=11 // pred_check
          %p410 = pneg %p222
        $region42: #{tpu_custom_call.1} parent=11 // pred_check_branch
          %412 = sbr.rel (%p410) target = $region44
        $region43: #{tpu_custom_call.1} parent=11 // pred_region
          _
        $region44: #{tpu_custom_call.1} parent=11 // pred_fallthru
          _
        // Predicated region
        $region45: #{tpu_custom_call.1} parent=11 // pred_check
          %p413 = pneg %p243
        $region46: #{tpu_custom_call.1} parent=11 // pred_check_branch
          %415 = sbr.rel (%p413) target = $region48
        $region47: #{tpu_custom_call.1} parent=11 // pred_region
          %417 = vsyncadd [#allocation12], 0
          %s418 = sshll.u32 %s9, 4
          %s419 = int_to_ptr.hbm [resolvable:$true] %s418
          %s420 = sshll.u32 [#allocation11], 4
          %s421 = int_to_ptr.vmem [resolvable:$true] %s420
          %426 = dma.hbm_to_vmem [thread:$0]  %s419, 4096, %s421, [#allocation12], 128, 128, 8
        $region48: #{tpu_custom_call.1} parent=11 // pred_fallthru
          _
        // Predicated region
        $region49: #{tpu_custom_call.1} parent=11 // pred_check
          %p427 = pneg %p264
        $region50: #{tpu_custom_call.1} parent=11 // pred_check_branch
          %429 = sbr.rel (%p427) target = $region52
        $region51: #{tpu_custom_call.1} parent=11 // pred_region
          _
        $region52: #{tpu_custom_call.1} parent=11 // pred_fallthru
          _
        // Predicated region
        $region53: #{tpu_custom_call.1} parent=11 // pred_check
          %p430 = pneg %p285
        $region54: #{tpu_custom_call.1} parent=11 // pred_check_branch
          %432 = sbr.rel (%p430) target = $region56
        $region55: #{tpu_custom_call.1} parent=11 // pred_region
          _
        $region56: #{tpu_custom_call.1} parent=11 // pred_fallthru
          _
        // Predicated region
        $region57: #{tpu_custom_call.1} parent=11 // pred_check
          %p433 = pneg %p306
        $region58: #{tpu_custom_call.1} parent=11 // pred_check_branch
          %435 = sbr.rel (%p433) target = $region60
        $region59: #{tpu_custom_call.1} parent=11 // pred_region
          _
        $region60: #{tpu_custom_call.1} parent=11 // pred_fallthru
          _
      $region12: #{tpu_custom_call.1} parent=5 // pred_fallthru
        _
      %p436 = scmp.lt.s32.totalorder %s28, 2
      // Predicated region
      $region61: #{tpu_custom_call.1} parent=5 // pred_check
        %p437 = pneg %p436
      $region62: #{tpu_custom_call.1} parent=5 // pred_check_branch
        %439 = sbr.rel (%p437) target = $region64
      $region63: #{tpu_custom_call.1} parent=5 // pred_region
        // Predicated region
        $region65: #{tpu_custom_call.1} parent=63 // pred_check
          %p440 = pneg %p48
        $region66: #{tpu_custom_call.1} parent=63 // pred_check_branch
          %442 = sbr.rel (%p440) target = $region68
        $region67: #{tpu_custom_call.1} parent=63 // pred_region
          %s443 = sand.u32 %s38, 1
          %s444 = scalar_lea.sflag [#allocation3], %s443
          %s445 = sand.u32 %s38, 1
          %s446 = smul.addr %s445, 16
          %s447 = scalar_lea.vmem [#allocation2], %s446
          %449 = vsyncadd %s444, 0
          %s450 = smul.addr %s28, 2
          %s451 = smul.addr %s450, 8
          %s452 = scalar_lea.hbm %s0, %s451
          %s453 = sshll.u32 %s452, 4
          %s454 = int_to_ptr.hbm [resolvable:$true] %s453
          %s455 = sshll.u32 %s447, 4
          %s456 = int_to_ptr.vmem [resolvable:$true] %s455
          %461 = dma.hbm_to_vmem [thread:$0]  %s454, 256, %s456, %s444, 128, 128, 8
        $region68: #{tpu_custom_call.1} parent=63 // pred_fallthru
          _
      $region64: #{tpu_custom_call.1} parent=5 // pred_fallthru
        _
      %p462 = scmp.le.s32.totalorder 1, %s28
      %p463 = scmp.lt.s32.totalorder %s28, 3
      %p464 = pnand %p462, %p463
      %p465 = pneg %p464
      // Predicated region
      $region69: #{tpu_custom_call.1} parent=5 // pred_check
        _
      $region70: #{tpu_custom_call.1} parent=5 // pred_check_branch
        %467 = sbr.rel (%p464) target = $region72
      $region71: #{tpu_custom_call.1} parent=5 // pred_region
        %s468 = ssub.s32 %s28, 1
        %s469 = sand.u32 %s41, 1
        %s470 = scalar_lea.sflag [#allocation3], %s469
        %s471 = sand.u32 %s41, 1
        %s472 = smul.addr %s471, 16
        %s473 = scalar_lea.vmem [#allocation2], %s472
        // Predicated region
        $region73: #{tpu_custom_call.1} parent=71 // pred_check
          %p474 = pneg %p54
        $region74: #{tpu_custom_call.1} parent=71 // pred_check_branch
          %476 = sbr.rel (%p474) target = $region76
        $region75: #{tpu_custom_call.1} parent=71 // pred_region
          %478 = dma.done %s470, 256
        $region76: #{tpu_custom_call.1} parent=71 // pred_fallthru
          _
        // Predicated region
        $region77: #{tpu_custom_call.1} parent=71 // pred_check
          %p479 = pneg %p75
        $region78: #{tpu_custom_call.1} parent=71 // pred_check_branch
          %481 = sbr.rel (%p479) target = $region80
        $region79: #{tpu_custom_call.1} parent=71 // pred_region
          %483 = dma.done [#allocation6], 6144
        $region80: #{tpu_custom_call.1} parent=71 // pred_fallthru
          _
        // Predicated region
        $region81: #{tpu_custom_call.1} parent=71 // pred_check
          %p484 = pneg %p96
        $region82: #{tpu_custom_call.1} parent=71 // pred_check_branch
          %486 = sbr.rel (%p484) target = $region84
        $region83: #{tpu_custom_call.1} parent=71 // pred_region
          %488 = dma.done [#allocation6], 48
        $region84: #{tpu_custom_call.1} parent=71 // pred_fallthru
          _
        // Predicated region
        $region85: #{tpu_custom_call.1} parent=71 // pred_check
          %p489 = pneg %p117
        $region86: #{tpu_custom_call.1} parent=71 // pred_check_branch
          %491 = sbr.rel (%p489) target = $region88
        $region87: #{tpu_custom_call.1} parent=71 // pred_region
          %493 = dma.done [#allocation9], 2048
        $region88: #{tpu_custom_call.1} parent=71 // pred_fallthru
          _
        // Predicated region
        $region89: #{tpu_custom_call.1} parent=71 // pred_check
          %p494 = pneg %p201
        $region90: #{tpu_custom_call.1} parent=71 // pred_check_branch
          %496 = sbr.rel (%p494) target = $region92
        $region91: #{tpu_custom_call.1} parent=71 // pred_region
          %498 = dma.done [#allocation9], 4096
        $region92: #{tpu_custom_call.1} parent=71 // pred_fallthru
          _
        // Predicated region
        $region93: #{tpu_custom_call.1} parent=71 // pred_check
          %p499 = pneg %p243
        $region94: #{tpu_custom_call.1} parent=71 // pred_check_branch
          %501 = sbr.rel (%p499) target = $region96
        $region95: #{tpu_custom_call.1} parent=71 // pred_region
          %503 = dma.done [#allocation12], 4096
        $region96: #{tpu_custom_call.1} parent=71 // pred_fallthru
          _
        %s504 = sand.u32 %s41, 1
        %s505 = scalar_lea.sflag [#allocation3], %s504
        %s506 = sand.u32 %s41, 1
        %s507 = smul.addr %s506, 16
        %s508 = scalar_lea.vmem [#allocation2], %s507
        %p509 = pneg %p54
        %p510 = pneg %p51
        %p511 = pneg %p75
        %p512 = pneg %p72
        %p513 = pneg %p96
        %p514 = pneg %p93
        %p515 = pneg %p117
        %p516 = pneg %p114
        %p517 = pneg %p138
        %p518 = pneg %p135
        %p519 = pneg %p159
        %p520 = pneg %p156
        %p521 = pneg %p180
        %p522 = pneg %p177
        %p523 = pneg %p201
        %p524 = pneg %p198
        %p525 = pneg %p222
        %p526 = pneg %p219
        %p527 = pneg %p243
        %p528 = pneg %p240
        %p529 = pneg %p264
        %p530 = pneg %p261
        %p531 = pneg %p285
        %p532 = pneg %p282
        %p533 = pneg %p306
        %p534 = pneg %p303
        %p535 = pneg %p332
        %p536 = pneg %p329
        %s537 = sand.u32 %s319, 1
        %s538 = scalar_lea.sflag [#allocation4], %s537
        %s539 = sand.u32 %s319, 1
        %s540 = smul.addr %s539, 16
        %s541 = scalar_lea.vmem [#allocation13], %s540
        %v542 = vld [vmem:[%s473] sm:$0xff]
        %v543 = vld [vmem:[%s473 + $0x8] sm:$0xff]
        %v544 = vld [vmem:[#allocation5] sm:$0xff]
        %v545 = vld [vmem:[#allocation5 + $0x8] sm:$0xff]
        %v546 = vld [vmem:[#allocation5 + $0x10] sm:$0xff]
        %v547 = vld [vmem:[#allocation5 + $0x18] sm:$0xff]
        %v548 = vld [vmem:[#allocation5 + $0x20] sm:$0xff]
        %v549 = vld [vmem:[#allocation5 + $0x28] sm:$0xff]
        %v550 = vld [vmem:[#allocation5 + $0x30] sm:$0xff]
        %v551 = vld [vmem:[#allocation5 + $0x38] sm:$0xff]
        %v552 = vld [vmem:[#allocation5 + $0x40] sm:$0xff]
        %v553 = vld [vmem:[#allocation5 + $0x48] sm:$0xff]
        %v554 = vld [vmem:[#allocation5 + $0x50] sm:$0xff]
        %v555 = vld [vmem:[#allocation5 + $0x58] sm:$0xff]
        %v556 = vld [vmem:[#allocation5 + $0x60] sm:$0xff]
        %v557 = vld [vmem:[#allocation5 + $0x68] sm:$0xff]
        %v558 = vld [vmem:[#allocation5 + $0x70] sm:$0xff]
        %v559 = vld [vmem:[#allocation5 + $0x78] sm:$0xff]
        %v560 = vld [vmem:[#allocation5 + $0x80] sm:$0xff]
        %v561 = vld [vmem:[#allocation5 + $0x88] sm:$0xff]
        %v562 = vld [vmem:[#allocation5 + $0x90] sm:$0xff]
        %v563 = vld [vmem:[#allocation5 + $0x98] sm:$0xff]
        %v564 = vld [vmem:[#allocation5 + $0xa0] sm:$0xff]
        %v565 = vld [vmem:[#allocation5 + $0xa8] sm:$0xff]
        %v566 = vld [vmem:[#allocation5 + $0xb0] sm:$0xff]
        %v567 = vld [vmem:[#allocation5 + $0xb8] sm:$0xff]
        %v568 = vld [vmem:[#allocation5 + $0xc0] sm:$0xff]
        %v569 = vld [vmem:[#allocation5 + $0xc8] sm:$0xff]
        %v570 = vld [vmem:[#allocation5 + $0xd0] sm:$0xff]
        %v571 = vld [vmem:[#allocation5 + $0xd8] sm:$0xff]
        %v572 = vld [vmem:[#allocation5 + $0xe0] sm:$0xff]
        %v573 = vld [vmem:[#allocation5 + $0xe8] sm:$0xff]
        %v574 = vld [vmem:[#allocation5 + $0xf0] sm:$0xff]
        %v575 = vld [vmem:[#allocation5 + $0xf8] sm:$0xff]
        %v576 = vld [vmem:[#allocation5 + $0x100] sm:$0xff]
        %v577 = vld [vmem:[#allocation5 + $0x108] sm:$0xff]
        %v578 = vld [vmem:[#allocation5 + $0x110] sm:$0xff]
        %v579 = vld [vmem:[#allocation5 + $0x118] sm:$0xff]
        %v580 = vld [vmem:[#allocation5 + $0x120] sm:$0xff]
        %v581 = vld [vmem:[#allocation5 + $0x128] sm:$0xff]
        %v582 = vld [vmem:[#allocation5 + $0x130] sm:$0xff]
        %v583 = vld [vmem:[#allocation5 + $0x138] sm:$0xff]
        %v584 = vld [vmem:[#allocation5 + $0x140] sm:$0xff]
        %v585 = vld [vmem:[#allocation5 + $0x148] sm:$0xff]
        %v586 = vld [vmem:[#allocation5 + $0x150] sm:$0xff]
        %v587 = vld [vmem:[#allocation5 + $0x158] sm:$0xff]
        %v588 = vld [vmem:[#allocation5 + $0x160] sm:$0xff]
        %v589 = vld [vmem:[#allocation5 + $0x168] sm:$0xff]
        %v590 = vld [vmem:[#allocation5 + $0x170] sm:$0xff]
        %v591 = vld [vmem:[#allocation5 + $0x178] sm:$0xff]
        %v592 = vld [vmem:[#allocation7] sm:$0x7]
        %v594 = vperm.slane %v592, 0
        %v595 = vperm.slane %v592, 1
        %v596 = vperm.slane %v592, 2
        %600 = vmatpush.msra.mxu0 %v589
        %601 = vmatpush.msra.mxu0 %v586
        %602 = vmatpush.msra.mxu0 %v583
        %603 = vmatpush.msra.mxu0 %v580
        %604 = vmatpush.msra.mxu0 %v577
        %605 = vmatpush.msra.mxu0 %v574
        %606 = vmatpush.msra.mxu0 %v571
        %607 = vmatpush.msra.mxu0 %v568
        %608 = vmatpush.msra.mxu0 %v565
        %609 = vmatpush.msra.mxu0 %v562
        %610 = vmatpush.msra.mxu0 %v559
        %611 = vmatpush.msra.mxu0 %v556
        %612 = vmatpush.msra.mxu0 %v553
        %613 = vmatpush.msra.mxu0 %v550
        %614 = vmatpush.msra.mxu0 %v547
        %615 = vmatpush.msra.mxu0 %v544
        %616 = vmatmul.f32.gmra.mxu0 %v542
        %v617 = vpop.f32.mrf.mxu0
        %v618 = vadd.f32 %v594, %v617
        %619 = vmatmul.f32.gmra.mxu0 %v543
        %v620 = vpop.f32.mrf.mxu0
        %v621 = vadd.f32 %v594, %v620
        %622 = vdwg.mxu0
        %623 = vmatpush.msra.mxu0 %v590
        %624 = vmatpush.msra.mxu0 %v587
        %625 = vmatpush.msra.mxu0 %v584
        %626 = vmatpush.msra.mxu0 %v581
        %627 = vmatpush.msra.mxu0 %v578
        %628 = vmatpush.msra.mxu0 %v575
        %629 = vmatpush.msra.mxu0 %v572
        %630 = vmatpush.msra.mxu0 %v569
        %631 = vmatpush.msra.mxu0 %v566
        %632 = vmatpush.msra.mxu0 %v563
        %633 = vmatpush.msra.mxu0 %v560
        %634 = vmatpush.msra.mxu0 %v557
        %635 = vmatpush.msra.mxu0 %v554
        %636 = vmatpush.msra.mxu0 %v551
        %637 = vmatpush.msra.mxu0 %v548
        %638 = vmatpush.msra.mxu0 %v545
        %639 = vmatmul.f32.gmra.mxu0 %v542
        %v640 = vpop.f32.mrf.mxu0
        %v641 = vadd.f32 %v595, %v640
        %642 = vmatmul.f32.gmra.mxu0 %v543
        %v643 = vpop.f32.mrf.mxu0
        %v644 = vadd.f32 %v595, %v643
        %645 = vdwg.mxu0
        %646 = vmatpush.msra.mxu0 %v591
        %647 = vmatpush.msra.mxu0 %v588
        %648 = vmatpush.msra.mxu0 %v585
        %649 = vmatpush.msra.mxu0 %v582
        %650 = vmatpush.msra.mxu0 %v579
        %651 = vmatpush.msra.mxu0 %v576
        %652 = vmatpush.msra.mxu0 %v573
        %653 = vmatpush.msra.mxu0 %v570
        %654 = vmatpush.msra.mxu0 %v567
        %655 = vmatpush.msra.mxu0 %v564
        %656 = vmatpush.msra.mxu0 %v561
        %657 = vmatpush.msra.mxu0 %v558
        %658 = vmatpush.msra.mxu0 %v555
        %659 = vmatpush.msra.mxu0 %v552
        %660 = vmatpush.msra.mxu0 %v549
        %661 = vmatpush.msra.mxu0 %v546
        %662 = vmatmul.f32.gmra.mxu0 %v542
        %v663 = vpop.f32.mrf.mxu0
        %v664 = vadd.f32 %v596, %v663
        %665 = vmatmul.f32.gmra.mxu0 %v543
        %v666 = vpop.f32.mrf.mxu0
        %v667 = vadd.f32 %v596, %v666
        %668 = vdwg.mxu0
        %671 = vrot.lane.b32.xlu0 %v641, 96
        %v672 = vpop.permute.xlu0 %671
        %673 = vrot.lane.b32.xlu0 %v644, 96
        %v674 = vpop.permute.xlu0 %673
        %677 = vrot.lane.b32.xlu0 %v641, 64
        %v678 = vpop.permute.xlu0 %677
        %679 = vrot.lane.b32.xlu0 %v644, 64
        %v680 = vpop.permute.xlu0 %679
        %683 = vrot.lane.b32.xlu0 %v641, 32
        %v684 = vpop.permute.xlu0 %683
        %685 = vrot.lane.b32.xlu0 %v644, 32
        %v686 = vpop.permute.xlu0 %685
        %v689 = vrot.slane %v678, 4
        %vm690 = vcmask 1047556
        %v691 = vsel %vm690, %v689, %v641
        %v692 = vrot.slane %v641, 4
        %v693 = vsel %vm690, %v678, %v692
        %v695 = vunpack.c.l.s4 1983009808
        %v696 = vunpack.c.0.s8 %v695
        %v697 = vperm.slane %v691, %v696
        %v699 = vunpack.c.l.s4 1983009808
        %v700 = vunpack.c.0.s8 %v699
        %v701 = vperm.slane %v693, %v700
        %v702 = vrot.slane %v684, 4
        %v703 = vsel %vm690, %v702, %v672
        %v704 = vrot.slane %v672, 4
        %v705 = vsel %vm690, %v684, %v704
        %v707 = vunpack.c.l.s4 1983009808
        %v708 = vunpack.c.0.s8 %v707
        %v709 = vperm.slane %v703, %v708
        %v711 = vunpack.c.l.s4 1983009808
        %v712 = vunpack.c.0.s8 %v711
        %v713 = vperm.slane %v705, %v712
        %v714 = vrot.slane %v709, 4
        %v715 = vsel %vm690, %v714, %v697
        %v716 = vrot.slane %v697, 4
        %v717 = vsel %vm690, %v709, %v716
        %v719 = vunpack.c.l.s4 1934713408
        %v720 = vunpack.c.0.s8 %v719
        %v721 = vperm.slane %v715, %v720
        %v723 = vunpack.c.l.s4 1934713408
        %v724 = vunpack.c.0.s8 %v723
        %v725 = vperm.slane %v717, %v724
        %v726 = vrot.slane %v713, 4
        %v727 = vsel %vm690, %v726, %v701
        %v728 = vrot.slane %v701, 4
        %v729 = vsel %vm690, %v713, %v728
        %v731 = vunpack.c.l.s4 1934713408
        %v732 = vunpack.c.0.s8 %v731
        %v733 = vperm.slane %v727, %v732
        %v735 = vunpack.c.l.s4 1934713408
        %v736 = vunpack.c.0.s8 %v735
        %v737 = vperm.slane %v729, %v736
        %v738 = vrot.slane %v721, 4
        %v739 = vsel %vm690, 0.0, %v738
        %v740 = vrot.slane %v725, 4
        %v741 = vsel %vm690, 0.0, %v740
        %v742 = vrot.slane %v733, 4
        %v743 = vsel %vm690, 0.0, %v742
        %v744 = vrot.slane %v737, 4
        %v745 = vsel %vm690, 0.0, %v744
        %v746 = vrot.slane %v680, 4
        %v747 = vsel %vm690, %v746, %v644
        %v748 = vrot.slane %v644, 4
        %v749 = vsel %vm690, %v680, %v748
        %v751 = vunpack.c.l.s4 1983009808
        %v752 = vunpack.c.0.s8 %v751
        %v753 = vperm.slane %v747, %v752
        %v755 = vunpack.c.l.s4 1983009808
        %v756 = vunpack.c.0.s8 %v755
        %v757 = vperm.slane %v749, %v756
        %v758 = vrot.slane %v686, 4
        %v759 = vsel %vm690, %v758, %v674
        %v760 = vrot.slane %v674, 4
        %v761 = vsel %vm690, %v686, %v760
        %v763 = vunpack.c.l.s4 1983009808
        %v764 = vunpack.c.0.s8 %v763
        %v765 = vperm.slane %v759, %v764
        %v767 = vunpack.c.l.s4 1983009808
        %v768 = vunpack.c.0.s8 %v767
        %v769 = vperm.slane %v761, %v768
        %v770 = vrot.slane %v765, 4
        %v771 = vsel %vm690, %v770, %v753
        %v772 = vrot.slane %v753, 4
        %v773 = vsel %vm690, %v765, %v772
        %v775 = vunpack.c.l.s4 1934713408
        %v776 = vunpack.c.0.s8 %v775
        %v777 = vperm.slane %v771, %v776
        %v779 = vunpack.c.l.s4 1934713408
        %v780 = vunpack.c.0.s8 %v779
        %v781 = vperm.slane %v773, %v780
        %v782 = vrot.slane %v769, 4
        %v783 = vsel %vm690, %v782, %v757
        %v784 = vrot.slane %v757, 4
        %v785 = vsel %vm690, %v769, %v784
        %v787 = vunpack.c.l.s4 1934713408
        %v788 = vunpack.c.0.s8 %v787
        %v789 = vperm.slane %v783, %v788
        %v791 = vunpack.c.l.s4 1934713408
        %v792 = vunpack.c.0.s8 %v791
        %v793 = vperm.slane %v785, %v792
        %v794 = vrot.slane %v777, 4
        %v795 = vsel %vm690, 0.0, %v794
        %v796 = vrot.slane %v781, 4
        %v797 = vsel %vm690, 0.0, %v796
        %v798 = vrot.slane %v789, 4
        %v799 = vsel %vm690, 0.0, %v798
        %v800 = vrot.slane %v793, 4
        %v801 = vsel %vm690, 0.0, %v800
        %v802 = vsel %vm690, %v740, %v721
        %v804 = vunpack.c.l.s4 1983009808
        %v805 = vunpack.c.0.s8 %v804
        %v806 = vperm.slane %v802, %v805
        %v807 = vrot.slane %v741, 4
        %v808 = vsel %vm690, %v807, %v739
        %v810 = vunpack.c.l.s4 1983009808
        %v811 = vunpack.c.0.s8 %v810
        %v812 = vperm.slane %v808, %v811
        %v813 = vsel %vm690, %v744, %v733
        %v815 = vunpack.c.l.s4 1983009808
        %v816 = vunpack.c.0.s8 %v815
        %v817 = vperm.slane %v813, %v816
        %v818 = vrot.slane %v745, 4
        %v819 = vsel %vm690, %v818, %v743
        %v821 = vunpack.c.l.s4 1983009808
        %v822 = vunpack.c.0.s8 %v821
        %v823 = vperm.slane %v819, %v822
        %v824 = vrot.slane %v812, 4
        %v825 = vsel %vm690, %v824, %v806
        %v826 = vrot.slane %v806, 4
        %v827 = vsel %vm690, %v812, %v826
        %v829 = vunpack.c.l.s4 1934713408
        %v830 = vunpack.c.0.s8 %v829
        %v831 = vperm.slane %v825, %v830
        %v833 = vunpack.c.l.s4 1934713408
        %v834 = vunpack.c.0.s8 %v833
        %v835 = vperm.slane %v827, %v834
        %v836 = vrot.slane %v823, 4
        %v837 = vsel %vm690, %v836, %v817
        %v838 = vrot.slane %v817, 4
        %v839 = vsel %vm690, %v823, %v838
        %v841 = vunpack.c.l.s4 1934713408
        %v842 = vunpack.c.0.s8 %v841
        %v843 = vperm.slane %v837, %v842
        %v845 = vunpack.c.l.s4 1934713408
        %v846 = vunpack.c.0.s8 %v845
        %v847 = vperm.slane %v839, %v846
        %v848 = vrot.slane %v843, 4
        %v849 = vsel %vm690, %v848, %v831
        %v850 = vrot.slane %v831, 4
        %v851 = vsel %vm690, %v843, %v850
        %v852 = vrot.slane %v847, 4
        %v853 = vsel %vm690, %v852, %v835
        %v854 = vrot.slane %v835, 4
        %v855 = vsel %vm690, %v847, %v854
        %v856 = vsel %vm690, %v796, %v777
        %v858 = vunpack.c.l.s4 1983009808
        %v859 = vunpack.c.0.s8 %v858
        %v860 = vperm.slane %v856, %v859
        %v861 = vrot.slane %v797, 4
        %v862 = vsel %vm690, %v861, %v795
        %v864 = vunpack.c.l.s4 1983009808
        %v865 = vunpack.c.0.s8 %v864
        %v866 = vperm.slane %v862, %v865
        %v867 = vsel %vm690, %v800, %v789
        %v869 = vunpack.c.l.s4 1983009808
        %v870 = vunpack.c.0.s8 %v869
        %v871 = vperm.slane %v867, %v870
        %v872 = vrot.slane %v801, 4
        %v873 = vsel %vm690, %v872, %v799
        %v875 = vunpack.c.l.s4 1983009808
        %v876 = vunpack.c.0.s8 %v875
        %v877 = vperm.slane %v873, %v876
        %v878 = vrot.slane %v866, 4
        %v879 = vsel %vm690, %v878, %v860
        %v880 = vrot.slane %v860, 4
        %v881 = vsel %vm690, %v866, %v880
        %v883 = vunpack.c.l.s4 1934713408
        %v884 = vunpack.c.0.s8 %v883
        %v885 = vperm.slane %v879, %v884
        %v887 = vunpack.c.l.s4 1934713408
        %v888 = vunpack.c.0.s8 %v887
        %v889 = vperm.slane %v881, %v888
        %v890 = vrot.slane %v877, 4
        %v891 = vsel %vm690, %v890, %v871
        %v892 = vrot.slane %v871, 4
        %v893 = vsel %vm690, %v877, %v892
        %v895 = vunpack.c.l.s4 1934713408
        %v896 = vunpack.c.0.s8 %v895
        %v897 = vperm.slane %v891, %v896
        %v899 = vunpack.c.l.s4 1934713408
        %v900 = vunpack.c.0.s8 %v899
        %v901 = vperm.slane %v893, %v900
        %v902 = vrot.slane %v897, 4
        %v903 = vsel %vm690, %v902, %v885
        %v904 = vrot.slane %v885, 4
        %v905 = vsel %vm690, %v897, %v904
        %v906 = vrot.slane %v901, 4
        %v907 = vsel %vm690, %v906, %v889
        %v908 = vrot.slane %v889, 4
        %v909 = vsel %vm690, %v901, %v908
        %912 = vrot.lane.b32.xlu0 %v664, 96
        %v913 = vpop.permute.xlu0 %912
        %914 = vrot.lane.b32.xlu0 %v667, 96
        %v915 = vpop.permute.xlu0 %914
        %918 = vrot.lane.b32.xlu0 %v664, 64
        %v919 = vpop.permute.xlu0 %918
        %920 = vrot.lane.b32.xlu0 %v667, 64
        %v921 = vpop.permute.xlu0 %920
        %924 = vrot.lane.b32.xlu0 %v664, 32
        %v925 = vpop.permute.xlu0 %924
        %926 = vrot.lane.b32.xlu0 %v667, 32
        %v927 = vpop.permute.xlu0 %926
        %v930 = vrot.slane %v919, 4
        %v931 = vsel %vm690, %v930, %v664
        %v932 = vrot.slane %v664, 4
        %v933 = vsel %vm690, %v919, %v932
        %v935 = vunpack.c.l.s4 1983009808
        %v936 = vunpack.c.0.s8 %v935
        %v937 = vperm.slane %v931, %v936
        %v939 = vunpack.c.l.s4 1983009808
        %v940 = vunpack.c.0.s8 %v939
        %v941 = vperm.slane %v933, %v940
        %v942 = vrot.slane %v925, 4
        %v943 = vsel %vm690, %v942, %v913
        %v944 = vrot.slane %v913, 4
        %v945 = vsel %vm690, %v925, %v944
        %v947 = vunpack.c.l.s4 1983009808
        %v948 = vunpack.c.0.s8 %v947
        %v949 = vperm.slane %v943, %v948
        %v951 = vunpack.c.l.s4 1983009808
        %v952 = vunpack.c.0.s8 %v951
        %v953 = vperm.slane %v945, %v952
        %v954 = vrot.slane %v949, 4
        %v955 = vsel %vm690, %v954, %v937
        %v956 = vrot.slane %v937, 4
        %v957 = vsel %vm690, %v949, %v956
        %v959 = vunpack.c.l.s4 1934713408
        %v960 = vunpack.c.0.s8 %v959
        %v961 = vperm.slane %v955, %v960
        %v963 = vunpack.c.l.s4 1934713408
        %v964 = vunpack.c.0.s8 %v963
        %v965 = vperm.slane %v957, %v964
        %v966 = vrot.slane %v953, 4
        %v967 = vsel %vm690, %v966, %v941
        %v968 = vrot.slane %v941, 4
        %v969 = vsel %vm690, %v953, %v968
        %v971 = vunpack.c.l.s4 1934713408
        %v972 = vunpack.c.0.s8 %v971
        %v973 = vperm.slane %v967, %v972
        %v975 = vunpack.c.l.s4 1934713408
        %v976 = vunpack.c.0.s8 %v975
        %v977 = vperm.slane %v969, %v976
        %v978 = vrot.slane %v961, 4
        %v979 = vsel %vm690, 0.0, %v978
        %v980 = vrot.slane %v965, 4
        %v981 = vsel %vm690, 0.0, %v980
        %v982 = vrot.slane %v973, 4
        %v983 = vsel %vm690, 0.0, %v982
        %v984 = vrot.slane %v977, 4
        %v985 = vsel %vm690, 0.0, %v984
        %v986 = vrot.slane %v921, 4
        %v987 = vsel %vm690, %v986, %v667
        %v988 = vrot.slane %v667, 4
        %v989 = vsel %vm690, %v921, %v988
        %v991 = vunpack.c.l.s4 1983009808
        %v992 = vunpack.c.0.s8 %v991
        %v993 = vperm.slane %v987, %v992
        %v995 = vunpack.c.l.s4 1983009808
        %v996 = vunpack.c.0.s8 %v995
        %v997 = vperm.slane %v989, %v996
        %v998 = vrot.slane %v927, 4
        %v999 = vsel %vm690, %v998, %v915
        %v1000 = vrot.slane %v915, 4
        %v1001 = vsel %vm690, %v927, %v1000
        %v1003 = vunpack.c.l.s4 1983009808
        %v1004 = vunpack.c.0.s8 %v1003
        %v1005 = vperm.slane %v999, %v1004
        %v1007 = vunpack.c.l.s4 1983009808
        %v1008 = vunpack.c.0.s8 %v1007
        %v1009 = vperm.slane %v1001, %v1008
        %v1010 = vrot.slane %v1005, 4
        %v1011 = vsel %vm690, %v1010, %v993
        %v1012 = vrot.slane %v993, 4
        %v1013 = vsel %vm690, %v1005, %v1012
        %v1015 = vunpack.c.l.s4 1934713408
        %v1016 = vunpack.c.0.s8 %v1015
        %v1017 = vperm.slane %v1011, %v1016
        %v1019 = vunpack.c.l.s4 1934713408
        %v1020 = vunpack.c.0.s8 %v1019
        %v1021 = vperm.slane %v1013, %v1020
        %v1022 = vrot.slane %v1009, 4
        %v1023 = vsel %vm690, %v1022, %v997
        %v1024 = vrot.slane %v997, 4
        %v1025 = vsel %vm690, %v1009, %v1024
        %v1027 = vunpack.c.l.s4 1934713408
        %v1028 = vunpack.c.0.s8 %v1027
        %v1029 = vperm.slane %v1023, %v1028
        %v1031 = vunpack.c.l.s4 1934713408
        %v1032 = vunpack.c.0.s8 %v1031
        %v1033 = vperm.slane %v1025, %v1032
        %v1034 = vrot.slane %v1017, 4
        %v1035 = vsel %vm690, 0.0, %v1034
        %v1036 = vrot.slane %v1021, 4
        %v1037 = vsel %vm690, 0.0, %v1036
        %v1038 = vrot.slane %v1029, 4
        %v1039 = vsel %vm690, 0.0, %v1038
        %v1040 = vrot.slane %v1033, 4
        %v1041 = vsel %vm690, 0.0, %v1040
        %v1042 = vsel %vm690, %v980, %v961
        %v1044 = vunpack.c.l.s4 1983009808
        %v1045 = vunpack.c.0.s8 %v1044
        %v1046 = vperm.slane %v1042, %v1045
        %v1047 = vrot.slane %v981, 4
        %v1048 = vsel %vm690, %v1047, %v979
        %v1050 = vunpack.c.l.s4 1983009808
        %v1051 = vunpack.c.0.s8 %v1050
        %v1052 = vperm.slane %v1048, %v1051
        %v1053 = vsel %vm690, %v984, %v973
        %v1055 = vunpack.c.l.s4 1983009808
        %v1056 = vunpack.c.0.s8 %v1055
        %v1057 = vperm.slane %v1053, %v1056
        %v1058 = vrot.slane %v985, 4
        %v1059 = vsel %vm690, %v1058, %v983
        %v1061 = vunpack.c.l.s4 1983009808
        %v1062 = vunpack.c.0.s8 %v1061
        %v1063 = vperm.slane %v1059, %v1062
        %v1064 = vrot.slane %v1052, 4
        %v1065 = vsel %vm690, %v1064, %v1046
        %v1066 = vrot.slane %v1046, 4
        %v1067 = vsel %vm690, %v1052, %v1066
        %v1069 = vunpack.c.l.s4 1934713408
        %v1070 = vunpack.c.0.s8 %v1069
        %v1071 = vperm.slane %v1065, %v1070
        %v1073 = vunpack.c.l.s4 1934713408
        %v1074 = vunpack.c.0.s8 %v1073
        %v1075 = vperm.slane %v1067, %v1074
        %v1076 = vrot.slane %v1063, 4
        %v1077 = vsel %vm690, %v1076, %v1057
        %v1078 = vrot.slane %v1057, 4
        %v1079 = vsel %vm690, %v1063, %v1078
        %v1081 = vunpack.c.l.s4 1934713408
        %v1082 = vunpack.c.0.s8 %v1081
        %v1083 = vperm.slane %v1077, %v1082
        %v1085 = vunpack.c.l.s4 1934713408
        %v1086 = vunpack.c.0.s8 %v1085
        %v1087 = vperm.slane %v1079, %v1086
        %v1088 = vrot.slane %v1083, 4
        %v1089 = vsel %vm690, %v1088, %v1071
        %v1090 = vrot.slane %v1071, 4
        %v1091 = vsel %vm690, %v1083, %v1090
        %v1092 = vrot.slane %v1087, 4
        %v1093 = vsel %vm690, %v1092, %v1075
        %v1094 = vrot.slane %v1075, 4
        %v1095 = vsel %vm690, %v1087, %v1094
        %v1096 = vsel %vm690, %v1036, %v1017
        %v1098 = vunpack.c.l.s4 1983009808
        %v1099 = vunpack.c.0.s8 %v1098
        %v1100 = vperm.slane %v1096, %v1099
        %v1101 = vrot.slane %v1037, 4
        %v1102 = vsel %vm690, %v1101, %v1035
        %v1104 = vunpack.c.l.s4 1983009808
        %v1105 = vunpack.c.0.s8 %v1104
        %v1106 = vperm.slane %v1102, %v1105
        %v1107 = vsel %vm690, %v1040, %v1029
        %v1109 = vunpack.c.l.s4 1983009808
        %v1110 = vunpack.c.0.s8 %v1109
        %v1111 = vperm.slane %v1107, %v1110
        %v1112 = vrot.slane %v1041, 4
        %v1113 = vsel %vm690, %v1112, %v1039
        %v1115 = vunpack.c.l.s4 1983009808
        %v1116 = vunpack.c.0.s8 %v1115
        %v1117 = vperm.slane %v1113, %v1116
        %v1118 = vrot.slane %v1106, 4
        %v1119 = vsel %vm690, %v1118, %v1100
        %v1120 = vrot.slane %v1100, 4
        %v1121 = vsel %vm690, %v1106, %v1120
        %v1123 = vunpack.c.l.s4 1934713408
        %v1124 = vunpack.c.0.s8 %v1123
        %v1125 = vperm.slane %v1119, %v1124
        %v1127 = vunpack.c.l.s4 1934713408
        %v1128 = vunpack.c.0.s8 %v1127
        %v1129 = vperm.slane %v1121, %v1128
        %v1130 = vrot.slane %v1117, 4
        %v1131 = vsel %vm690, %v1130, %v1111
        %v1132 = vrot.slane %v1111, 4
        %v1133 = vsel %vm690, %v1117, %v1132
        %v1135 = vunpack.c.l.s4 1934713408
        %v1136 = vunpack.c.0.s8 %v1135
        %v1137 = vperm.slane %v1131, %v1136
        %v1139 = vunpack.c.l.s4 1934713408
        %v1140 = vunpack.c.0.s8 %v1139
        %v1141 = vperm.slane %v1133, %v1140
        %v1142 = vrot.slane %v1137, 4
        %v1143 = vsel %vm690, %v1142, %v1125
        %v1144 = vrot.slane %v1125, 4
        %v1145 = vsel %vm690, %v1137, %v1144
        %v1146 = vrot.slane %v1141, 4
        %v1147 = vsel %vm690, %v1146, %v1129
        %v1148 = vrot.slane %v1129, 4
        %v1149 = vsel %vm690, %v1141, %v1148
        %1152 = vrot.lane.b32.xlu0 %v618, 96
        %v1153 = vpop.permute.xlu0 %1152
        %1154 = vrot.lane.b32.xlu0 %v621, 96
        %v1155 = vpop.permute.xlu0 %1154
        %1158 = vrot.lane.b32.xlu0 %v618, 64
        %v1159 = vpop.permute.xlu0 %1158
        %1160 = vrot.lane.b32.xlu0 %v621, 64
        %v1161 = vpop.permute.xlu0 %1160
        %1164 = vrot.lane.b32.xlu0 %v618, 32
        %v1165 = vpop.permute.xlu0 %1164
        %1166 = vrot.lane.b32.xlu0 %v621, 32
        %v1167 = vpop.permute.xlu0 %1166
        %v1170 = vrot.slane %v1159, 4
        %v1171 = vsel %vm690, %v1170, %v618
        %v1172 = vrot.slane %v618, 4
        %v1173 = vsel %vm690, %v1159, %v1172
        %v1175 = vunpack.c.l.s4 1983009808
        %v1176 = vunpack.c.0.s8 %v1175
        %v1177 = vperm.slane %v1171, %v1176
        %v1179 = vunpack.c.l.s4 1983009808
        %v1180 = vunpack.c.0.s8 %v1179
        %v1181 = vperm.slane %v1173, %v1180
        %v1182 = vrot.slane %v1165, 4
        %v1183 = vsel %vm690, %v1182, %v1153
        %v1184 = vrot.slane %v1153, 4
        %v1185 = vsel %vm690, %v1165, %v1184
        %v1187 = vunpack.c.l.s4 1983009808
        %v1188 = vunpack.c.0.s8 %v1187
        %v1189 = vperm.slane %v1183, %v1188
        %v1191 = vunpack.c.l.s4 1983009808
        %v1192 = vunpack.c.0.s8 %v1191
        %v1193 = vperm.slane %v1185, %v1192
        %v1194 = vrot.slane %v1189, 4
        %v1195 = vsel %vm690, %v1194, %v1177
        %v1196 = vrot.slane %v1177, 4
        %v1197 = vsel %vm690, %v1189, %v1196
        %v1199 = vunpack.c.l.s4 1934713408
        %v1200 = vunpack.c.0.s8 %v1199
        %v1201 = vperm.slane %v1195, %v1200
        %v1203 = vunpack.c.l.s4 1934713408
        %v1204 = vunpack.c.0.s8 %v1203
        %v1205 = vperm.slane %v1197, %v1204
        %v1206 = vrot.slane %v1193, 4
        %v1207 = vsel %vm690, %v1206, %v1181
        %v1208 = vrot.slane %v1181, 4
        %v1209 = vsel %vm690, %v1193, %v1208
        %v1211 = vunpack.c.l.s4 1934713408
        %v1212 = vunpack.c.0.s8 %v1211
        %v1213 = vperm.slane %v1207, %v1212
        %v1215 = vunpack.c.l.s4 1934713408
        %v1216 = vunpack.c.0.s8 %v1215
        %v1217 = vperm.slane %v1209, %v1216
        %v1218 = vrot.slane %v1201, 4
        %v1219 = vsel %vm690, 0.0, %v1218
        %v1220 = vrot.slane %v1205, 4
        %v1221 = vsel %vm690, 0.0, %v1220
        %v1222 = vrot.slane %v1213, 4
        %v1223 = vsel %vm690, 0.0, %v1222
        %v1224 = vrot.slane %v1217, 4
        %v1225 = vsel %vm690, 0.0, %v1224
        %v1226 = vrot.slane %v1161, 4
        %v1227 = vsel %vm690, %v1226, %v621
        %v1228 = vrot.slane %v621, 4
        %v1229 = vsel %vm690, %v1161, %v1228
        %v1231 = vunpack.c.l.s4 1983009808
        %v1232 = vunpack.c.0.s8 %v1231
        %v1233 = vperm.slane %v1227, %v1232
        %v1235 = vunpack.c.l.s4 1983009808
        %v1236 = vunpack.c.0.s8 %v1235
        %v1237 = vperm.slane %v1229, %v1236
        %v1238 = vrot.slane %v1167, 4
        %v1239 = vsel %vm690, %v1238, %v1155
        %v1240 = vrot.slane %v1155, 4
        %v1241 = vsel %vm690, %v1167, %v1240
        %v1243 = vunpack.c.l.s4 1983009808
        %v1244 = vunpack.c.0.s8 %v1243
        %v1245 = vperm.slane %v1239, %v1244
        %v1247 = vunpack.c.l.s4 1983009808
        %v1248 = vunpack.c.0.s8 %v1247
        %v1249 = vperm.slane %v1241, %v1248
        %v1250 = vrot.slane %v1245, 4
        %v1251 = vsel %vm690, %v1250, %v1233
        %v1252 = vrot.slane %v1233, 4
        %v1253 = vsel %vm690, %v1245, %v1252
        %v1255 = vunpack.c.l.s4 1934713408
        %v1256 = vunpack.c.0.s8 %v1255
        %v1257 = vperm.slane %v1251, %v1256
        %v1259 = vunpack.c.l.s4 1934713408
        %v1260 = vunpack.c.0.s8 %v1259
        %v1261 = vperm.slane %v1253, %v1260
        %v1262 = vrot.slane %v1249, 4
        %v1263 = vsel %vm690, %v1262, %v1237
        %v1264 = vrot.slane %v1237, 4
        %v1265 = vsel %vm690, %v1249, %v1264
        %v1267 = vunpack.c.l.s4 1934713408
        %v1268 = vunpack.c.0.s8 %v1267
        %v1269 = vperm.slane %v1263, %v1268
        %v1271 = vunpack.c.l.s4 1934713408
        %v1272 = vunpack.c.0.s8 %v1271
        %v1273 = vperm.slane %v1265, %v1272
        %v1274 = vrot.slane %v1257, 4
        %v1275 = vsel %vm690, 0.0, %v1274
        %v1276 = vrot.slane %v1261, 4
        %v1277 = vsel %vm690, 0.0, %v1276
        %v1278 = vrot.slane %v1269, 4
        %v1279 = vsel %vm690, 0.0, %v1278
        %v1280 = vrot.slane %v1273, 4
        %v1281 = vsel %vm690, 0.0, %v1280
        %v1282 = vsel %vm690, %v1220, %v1201
        %v1284 = vunpack.c.l.s4 1983009808
        %v1285 = vunpack.c.0.s8 %v1284
        %v1286 = vperm.slane %v1282, %v1285
        %v1287 = vrot.slane %v1221, 4
        %v1288 = vsel %vm690, %v1287, %v1219
        %v1290 = vunpack.c.l.s4 1983009808
        %v1291 = vunpack.c.0.s8 %v1290
        %v1292 = vperm.slane %v1288, %v1291
        %v1293 = vsel %vm690, %v1224, %v1213
        %v1295 = vunpack.c.l.s4 1983009808
        %v1296 = vunpack.c.0.s8 %v1295
        %v1297 = vperm.slane %v1293, %v1296
        %v1298 = vrot.slane %v1225, 4
        %v1299 = vsel %vm690, %v1298, %v1223
        %v1301 = vunpack.c.l.s4 1983009808
        %v1302 = vunpack.c.0.s8 %v1301
        %v1303 = vperm.slane %v1299, %v1302
        %v1304 = vrot.slane %v1292, 4
        %v1305 = vsel %vm690, %v1304, %v1286
        %v1306 = vrot.slane %v1286, 4
        %v1307 = vsel %vm690, %v1292, %v1306
        %v1309 = vunpack.c.l.s4 1934713408
        %v1310 = vunpack.c.0.s8 %v1309
        %v1311 = vperm.slane %v1305, %v1310
        %v1313 = vunpack.c.l.s4 1934713408
        %v1314 = vunpack.c.0.s8 %v1313
        %v1315 = vperm.slane %v1307, %v1314
        %v1316 = vrot.slane %v1303, 4
        %v1317 = vsel %vm690, %v1316, %v1297
        %v1318 = vrot.slane %v1297, 4
        %v1319 = vsel %vm690, %v1303, %v1318
        %v1321 = vunpack.c.l.s4 1934713408
        %v1322 = vunpack.c.0.s8 %v1321
        %v1323 = vperm.slane %v1317, %v1322
        %v1325 = vunpack.c.l.s4 1934713408
        %v1326 = vunpack.c.0.s8 %v1325
        %v1327 = vperm.slane %v1319, %v1326
        %v1328 = vrot.slane %v1323, 4
        %v1329 = vsel %vm690, %v1328, %v1311
        %v1330 = vrot.slane %v1311, 4
        %v1331 = vsel %vm690, %v1323, %v1330
        %v1332 = vrot.slane %v1327, 4
        %v1333 = vsel %vm690, %v1332, %v1315
        %v1334 = vrot.slane %v1315, 4
        %v1335 = vsel %vm690, %v1327, %v1334
        %v1336 = vsel %vm690, %v1276, %v1257
        %v1338 = vunpack.c.l.s4 1983009808
        %v1339 = vunpack.c.0.s8 %v1338
        %v1340 = vperm.slane %v1336, %v1339
        %v1341 = vrot.slane %v1277, 4
        %v1342 = vsel %vm690, %v1341, %v1275
        %v1344 = vunpack.c.l.s4 1983009808
        %v1345 = vunpack.c.0.s8 %v1344
        %v1346 = vperm.slane %v1342, %v1345
        %v1347 = vsel %vm690, %v1280, %v1269
        %v1349 = vunpack.c.l.s4 1983009808
        %v1350 = vunpack.c.0.s8 %v1349
        %v1351 = vperm.slane %v1347, %v1350
        %v1352 = vrot.slane %v1281, 4
        %v1353 = vsel %vm690, %v1352, %v1279
        %v1355 = vunpack.c.l.s4 1983009808
        %v1356 = vunpack.c.0.s8 %v1355
        %v1357 = vperm.slane %v1353, %v1356
        %v1358 = vrot.slane %v1346, 4
        %v1359 = vsel %vm690, %v1358, %v1340
        %v1360 = vrot.slane %v1340, 4
        %v1361 = vsel %vm690, %v1346, %v1360
        %v1363 = vunpack.c.l.s4 1934713408
        %v1364 = vunpack.c.0.s8 %v1363
        %v1365 = vperm.slane %v1359, %v1364
        %v1367 = vunpack.c.l.s4 1934713408
        %v1368 = vunpack.c.0.s8 %v1367
        %v1369 = vperm.slane %v1361, %v1368
        %v1370 = vrot.slane %v1357, 4
        %v1371 = vsel %vm690, %v1370, %v1351
        %v1372 = vrot.slane %v1351, 4
        %v1373 = vsel %vm690, %v1357, %v1372
        %v1375 = vunpack.c.l.s4 1934713408
        %v1376 = vunpack.c.0.s8 %v1375
        %v1377 = vperm.slane %v1371, %v1376
        %v1379 = vunpack.c.l.s4 1934713408
        %v1380 = vunpack.c.0.s8 %v1379
        %v1381 = vperm.slane %v1373, %v1380
        %v1382 = vrot.slane %v1377, 4
        %v1383 = vsel %vm690, %v1382, %v1365
        %v1384 = vrot.slane %v1365, 4
        %v1385 = vsel %vm690, %v1377, %v1384
        %v1386 = vrot.slane %v1381, 4
        %v1387 = vsel %vm690, %v1386, %v1369
        %v1388 = vrot.slane %v1369, 4
        %v1389 = vsel %vm690, %v1381, %v1388
        %vm1390 = vcmask 261120
        %v1392 = vsel %vm1390, %v1329, 0
        %v1395 = vsel %vm1390, %v1383, 0
        %v1398 = vsel %vm1390, %v849, 0
        %v1401 = vsel %vm1390, %v903, 0
        %1403 = vmatpush.xpose.msra.mxu0 0.0
        %1404 = vmatpush.xpose.msra.mxu0 0.0
        %1405 = vmatpush.xpose.msra.mxu0 0.0
        %1406 = vmatpush.xpose.msra.mxu0 0.0
        %1407 = vmatpush.xpose.msra.mxu0 0.0
        %1408 = vmatpush.xpose.msra.mxu0 0.0
        %1409 = vmatpush.xpose.msra.mxu0 0.0
        %1410 = vmatpush.xpose.msra.mxu0 0.0
        %1411 = vmatpush.xpose.msra.mxu0 0.0
        %1412 = vmatpush.xpose.msra.mxu0 0.0
        %1413 = vmatpush.xpose.msra.mxu0 0.0
        %1414 = vmatpush.xpose.msra.mxu0 0.0
        %1415 = vmatpush.xpose.msra.mxu0 0.0
        %1416 = vmatpush.xpose.msra.mxu0 0.0
        %1417 = vmatpush.xpose.msra.mxu0 %v1401
        %1418 = vmatpush.xpose.msra.mxu0 %v1398
        %1419 = vmatmul.f32.gmra.mxu0 %v1392
        %v1420 = vpop.f32.mrf.mxu0
        %v1421 = vadd.f32 0.0, %v1420
        %1422 = vmatmul.f32.gmra.mxu0 %v1395
        %v1423 = vpop.f32.mrf.mxu0
        %v1424 = vadd.f32 0.0, %v1423
        %1425 = vdwg.mxu0
        %v1427 = vsel %vm1390, %v1331, 0
        %v1430 = vsel %vm1390, %v1385, 0
        %v1433 = vsel %vm1390, %v851, 0
        %v1436 = vsel %vm1390, %v905, 0
        %1438 = vmatpush.xpose.msra.mxu0 0.0
        %1439 = vmatpush.xpose.msra.mxu0 0.0
        %1440 = vmatpush.xpose.msra.mxu0 0.0
        %1441 = vmatpush.xpose.msra.mxu0 0.0
        %1442 = vmatpush.xpose.msra.mxu0 0.0
        %1443 = vmatpush.xpose.msra.mxu0 0.0
        %1444 = vmatpush.xpose.msra.mxu0 0.0
        %1445 = vmatpush.xpose.msra.mxu0 0.0
        %1446 = vmatpush.xpose.msra.mxu0 0.0
        %1447 = vmatpush.xpose.msra.mxu0 0.0
        %1448 = vmatpush.xpose.msra.mxu0 0.0
        %1449 = vmatpush.xpose.msra.mxu0 0.0
        %1450 = vmatpush.xpose.msra.mxu0 0.0
        %1451 = vmatpush.xpose.msra.mxu0 0.0
        %1452 = vmatpush.xpose.msra.mxu0 %v1436
        %1453 = vmatpush.xpose.msra.mxu0 %v1433
        %1454 = vmatmul.f32.gmra.mxu0 %v1427
        %v1455 = vpop.f32.mrf.mxu0
        %v1456 = vadd.f32 0.0, %v1455
        %1457 = vmatmul.f32.gmra.mxu0 %v1430
        %v1458 = vpop.f32.mrf.mxu0
        %v1459 = vadd.f32 0.0, %v1458
        %1460 = vdwg.mxu0
        %v1462 = vsel %vm1390, %v1333, 0
        %v1465 = vsel %vm1390, %v1387, 0
        %v1468 = vsel %vm1390, %v853, 0
        %v1471 = vsel %vm1390, %v907, 0
        %1473 = vmatpush.xpose.msra.mxu0 0.0
        %1474 = vmatpush.xpose.msra.mxu0 0.0
        %1475 = vmatpush.xpose.msra.mxu0 0.0
        %1476 = vmatpush.xpose.msra.mxu0 0.0
        %1477 = vmatpush.xpose.msra.mxu0 0.0
        %1478 = vmatpush.xpose.msra.mxu0 0.0
        %1479 = vmatpush.xpose.msra.mxu0 0.0
        %1480 = vmatpush.xpose.msra.mxu0 0.0
        %1481 = vmatpush.xpose.msra.mxu0 0.0
        %1482 = vmatpush.xpose.msra.mxu0 0.0
        %1483 = vmatpush.xpose.msra.mxu0 0.0
        %1484 = vmatpush.xpose.msra.mxu0 0.0
        %1485 = vmatpush.xpose.msra.mxu0 0.0
        %1486 = vmatpush.xpose.msra.mxu0 0.0
        %1487 = vmatpush.xpose.msra.mxu0 %v1471
        %1488 = vmatpush.xpose.msra.mxu0 %v1468
        %1489 = vmatmul.f32.gmra.mxu0 %v1462
        %v1490 = vpop.f32.mrf.mxu0
        %v1491 = vadd.f32 0.0, %v1490
        %1492 = vmatmul.f32.gmra.mxu0 %v1465
        %v1493 = vpop.f32.mrf.mxu0
        %v1494 = vadd.f32 0.0, %v1493
        %1495 = vdwg.mxu0
        %v1497 = vsel %vm1390, %v1335, 0
        %v1500 = vsel %vm1390, %v1389, 0
        %v1503 = vsel %vm1390, %v855, 0
        %v1506 = vsel %vm1390, %v909, 0
        %1508 = vmatpush.xpose.msra.mxu0 0.0
        %1509 = vmatpush.xpose.msra.mxu0 0.0
        %1510 = vmatpush.xpose.msra.mxu0 0.0
        %1511 = vmatpush.xpose.msra.mxu0 0.0
        %1512 = vmatpush.xpose.msra.mxu0 0.0
        %1513 = vmatpush.xpose.msra.mxu0 0.0
        %1514 = vmatpush.xpose.msra.mxu0 0.0
        %1515 = vmatpush.xpose.msra.mxu0 0.0
        %1516 = vmatpush.xpose.msra.mxu0 0.0
        %1517 = vmatpush.xpose.msra.mxu0 0.0
        %1518 = vmatpush.xpose.msra.mxu0 0.0
        %1519 = vmatpush.xpose.msra.mxu0 0.0
        %1520 = vmatpush.xpose.msra.mxu0 0.0
        %1521 = vmatpush.xpose.msra.mxu0 0.0
        %1522 = vmatpush.xpose.msra.mxu0 %v1506
        %1523 = vmatpush.xpose.msra.mxu0 %v1503
        %1524 = vmatmul.f32.gmra.mxu0 %v1497
        %v1525 = vpop.f32.mrf.mxu0
        %v1526 = vadd.f32 0.0, %v1525
        %1527 = vmatmul.f32.gmra.mxu0 %v1500
        %v1528 = vpop.f32.mrf.mxu0
        %v1529 = vadd.f32 0.0, %v1528
        %1530 = vdwg.mxu0
        %vm1531 = vcmask 130048
        %v1532 = vsel %vm1531, %v1421, -inf
        %1533 = vmax.xlane.f32.xlu0 %v1532
        %v1534 = vpop.xlane.xlu0 %1533
        %v1535 = vsel %vm1531, %v1424, -inf
        %1536 = vmax.xlane.f32.xlu0 %v1535
        %v1537 = vpop.xlane.xlu0 %1536
        %v1538 = vsel %vm1531, %v1456, -inf
        %1539 = vmax.xlane.f32.xlu0 %v1538
        %v1540 = vpop.xlane.xlu0 %1539
        %v1541 = vsel %vm1531, %v1459, -inf
        %1542 = vmax.xlane.f32.xlu0 %v1541
        %v1543 = vpop.xlane.xlu0 %1542
        %v1544 = vsel %vm1531, %v1491, -inf
        %1545 = vmax.xlane.f32.xlu0 %v1544
        %v1546 = vpop.xlane.xlu0 %1545
        %v1547 = vsel %vm1531, %v1494, -inf
        %1548 = vmax.xlane.f32.xlu0 %v1547
        %v1549 = vpop.xlane.xlu0 %1548
        %v1550 = vsel %vm1531, %v1526, -inf
        %1551 = vmax.xlane.f32.xlu0 %v1550
        %v1552 = vpop.xlane.xlu0 %1551
        %v1553 = vsel %vm1531, %v1529, -inf
        %1554 = vmax.xlane.f32.xlu0 %v1553
        %v1555 = vpop.xlane.xlu0 %1554
        %v1556 = vsub.f32 %v1421, %v1534
        %v1557 = vsub.f32 %v1424, %v1537
        %v1558 = vsub.f32 %v1456, %v1540
        %v1559 = vsub.f32 %v1459, %v1543
        %v1560 = vsub.f32 %v1491, %v1546
        %v1561 = vsub.f32 %v1494, %v1549
        %v1562 = vsub.f32 %v1526, %v1552
        %v1563 = vsub.f32 %v1529, %v1555
        %v1564 = vmul.f32 %v1556, 1.442695
        %v1565 = vpow.pop %v1564
        %v1566 = vmul.f32 %v1557, 1.442695
        %v1567 = vpow.pop %v1566
        %v1568 = vmul.f32 %v1558, 1.442695
        %v1569 = vpow.pop %v1568
        %v1570 = vmul.f32 %v1559, 1.442695
        %v1571 = vpow.pop %v1570
        %v1572 = vmul.f32 %v1560, 1.442695
        %v1573 = vpow.pop %v1572
        %v1574 = vmul.f32 %v1561, 1.442695
        %v1575 = vpow.pop %v1574
        %v1576 = vmul.f32 %v1562, 1.442695
        %v1577 = vpow.pop %v1576
        %v1578 = vmul.f32 %v1563, 1.442695
        %v1579 = vpow.pop %v1578
        %v1580 = vsel %vm1531, %v1565, 0.0
        %1581 = vadd.xlane.f32.xlu0 %v1580
        %v1582 = vpop.xlane.xlu0 %1581
        %v1583 = vsel %vm1531, %v1567, 0.0
        %1584 = vadd.xlane.f32.xlu0 %v1583
        %v1585 = vpop.xlane.xlu0 %1584
        %v1586 = vsel %vm1531, %v1569, 0.0
        %1587 = vadd.xlane.f32.xlu0 %v1586
        %v1588 = vpop.xlane.xlu0 %1587
        %v1589 = vsel %vm1531, %v1571, 0.0
        %1590 = vadd.xlane.f32.xlu0 %v1589
        %v1591 = vpop.xlane.xlu0 %1590
        %v1592 = vsel %vm1531, %v1573, 0.0
        %1593 = vadd.xlane.f32.xlu0 %v1592
        %v1594 = vpop.xlane.xlu0 %1593
        %v1595 = vsel %vm1531, %v1575, 0.0
        %1596 = vadd.xlane.f32.xlu0 %v1595
        %v1597 = vpop.xlane.xlu0 %1596
        %v1598 = vsel %vm1531, %v1577, 0.0
        %1599 = vadd.xlane.f32.xlu0 %v1598
        %v1600 = vpop.xlane.xlu0 %1599
        %v1601 = vsel %vm1531, %v1579, 0.0
        %1602 = vadd.xlane.f32.xlu0 %v1601
        %v1603 = vpop.xlane.xlu0 %1602
        %v1604 = vrcp.pop %v1582
        %v1605 = vrcp.pop %v1585
        %v1606 = vrcp.pop %v1588
        %v1607 = vrcp.pop %v1591
        %v1608 = vrcp.pop %v1594
        %v1609 = vrcp.pop %v1597
        %v1610 = vrcp.pop %v1600
        %v1611 = vrcp.pop %v1603
        %v1612 = vmul.f32 %v1565, %v1604
        %v1613 = vmul.f32 %v1567, %v1605
        %v1614 = vmul.f32 %v1569, %v1606
        %v1615 = vmul.f32 %v1571, %v1607
        %v1616 = vmul.f32 %v1573, %v1608
        %v1617 = vmul.f32 %v1575, %v1609
        %v1618 = vmul.f32 %v1577, %v1610
        %v1619 = vmul.f32 %v1579, %v1611
        %v1621 = vsel %vm1531, %v1612, 0
        %v1624 = vsel %vm1531, %v1613, 0
        %1626 = vmatpush.msra.mxu0 0.0
        %1627 = vmatpush.msra.mxu0 0.0
        %1628 = vmatpush.msra.mxu0 0.0
        %1629 = vmatpush.msra.mxu0 0.0
        %1630 = vmatpush.msra.mxu0 0.0
        %1631 = vmatpush.msra.mxu0 0.0
        %1632 = vmatpush.msra.mxu0 0.0
        %1633 = vmatpush.msra.mxu0 0.0
        %1634 = vmatpush.msra.mxu0 0.0
        %1635 = vmatpush.msra.mxu0 0.0
        %1636 = vmatpush.msra.mxu0 0.0
        %1637 = vmatpush.msra.mxu0 0.0
        %1638 = vmatpush.msra.mxu0 0.0
        %1639 = vmatpush.msra.mxu0 0.0
        %1640 = vmatpush.msra.mxu0 %v1143
        %1641 = vmatpush.msra.mxu0 %v1089
        %1642 = vmatmul.f32.gmra.mxu0 %v1621
        %v1643 = vpop.f32.mrf.mxu0
        %v1644 = vadd.f32 0.0, %v1643
        %1645 = vmatmul.f32.gmra.mxu0 %v1624
        %v1646 = vpop.f32.mrf.mxu0
        %v1647 = vadd.f32 0.0, %v1646
        %1648 = vdwg.mxu0
        %v1650 = vsel %vm1531, %v1614, 0
        %v1653 = vsel %vm1531, %v1615, 0
        %1655 = vmatpush.msra.mxu0 0.0
        %1656 = vmatpush.msra.mxu0 0.0
        %1657 = vmatpush.msra.mxu0 0.0
        %1658 = vmatpush.msra.mxu0 0.0
        %1659 = vmatpush.msra.mxu0 0.0
        %1660 = vmatpush.msra.mxu0 0.0
        %1661 = vmatpush.msra.mxu0 0.0
        %1662 = vmatpush.msra.mxu0 0.0
        %1663 = vmatpush.msra.mxu0 0.0
        %1664 = vmatpush.msra.mxu0 0.0
        %1665 = vmatpush.msra.mxu0 0.0
        %1666 = vmatpush.msra.mxu0 0.0
        %1667 = vmatpush.msra.mxu0 0.0
        %1668 = vmatpush.msra.mxu0 0.0
        %1669 = vmatpush.msra.mxu0 %v1145
        %1670 = vmatpush.msra.mxu0 %v1091
        %1671 = vmatmul.f32.gmra.mxu0 %v1650
        %v1672 = vpop.f32.mrf.mxu0
        %v1673 = vadd.f32 0.0, %v1672
        %1674 = vmatmul.f32.gmra.mxu0 %v1653
        %v1675 = vpop.f32.mrf.mxu0
        %v1676 = vadd.f32 0.0, %v1675
        %1677 = vdwg.mxu0
        %v1679 = vsel %vm1531, %v1616, 0
        %v1682 = vsel %vm1531, %v1617, 0
        %1684 = vmatpush.msra.mxu0 0.0
        %1685 = vmatpush.msra.mxu0 0.0
        %1686 = vmatpush.msra.mxu0 0.0
        %1687 = vmatpush.msra.mxu0 0.0
        %1688 = vmatpush.msra.mxu0 0.0
        %1689 = vmatpush.msra.mxu0 0.0
        %1690 = vmatpush.msra.mxu0 0.0
        %1691 = vmatpush.msra.mxu0 0.0
        %1692 = vmatpush.msra.mxu0 0.0
        %1693 = vmatpush.msra.mxu0 0.0
        %1694 = vmatpush.msra.mxu0 0.0
        %1695 = vmatpush.msra.mxu0 0.0
        %1696 = vmatpush.msra.mxu0 0.0
        %1697 = vmatpush.msra.mxu0 0.0
        %1698 = vmatpush.msra.mxu0 %v1147
        %1699 = vmatpush.msra.mxu0 %v1093
        %1700 = vmatmul.f32.gmra.mxu0 %v1679
        %v1701 = vpop.f32.mrf.mxu0
        %v1702 = vadd.f32 0.0, %v1701
        %1703 = vmatmul.f32.gmra.mxu0 %v1682
        %v1704 = vpop.f32.mrf.mxu0
        %v1705 = vadd.f32 0.0, %v1704
        %1706 = vdwg.mxu0
        %v1708 = vsel %vm1531, %v1618, 0
        %v1711 = vsel %vm1531, %v1619, 0
        %1713 = vmatpush.msra.mxu0 0.0
        %1714 = vmatpush.msra.mxu0 0.0
        %1715 = vmatpush.msra.mxu0 0.0
        %1716 = vmatpush.msra.mxu0 0.0
        %1717 = vmatpush.msra.mxu0 0.0
        %1718 = vmatpush.msra.mxu0 0.0
        %1719 = vmatpush.msra.mxu0 0.0
        %1720 = vmatpush.msra.mxu0 0.0
        %1721 = vmatpush.msra.mxu0 0.0
        %1722 = vmatpush.msra.mxu0 0.0
        %1723 = vmatpush.msra.mxu0 0.0
        %1724 = vmatpush.msra.mxu0 0.0
        %1725 = vmatpush.msra.mxu0 0.0
        %1726 = vmatpush.msra.mxu0 0.0
        %1727 = vmatpush.msra.mxu0 %v1149
        %1728 = vmatpush.msra.mxu0 %v1095
        %1729 = vmatmul.f32.gmra.mxu0 %v1708
        %v1730 = vpop.f32.mrf.mxu0
        %v1731 = vadd.f32 0.0, %v1730
        %1732 = vmatmul.f32.gmra.mxu0 %v1711
        %v1733 = vpop.f32.mrf.mxu0
        %v1734 = vadd.f32 0.0, %v1733
        %1735 = vdwg.mxu0
        %v1736 = vrot.slane %v1702, 4
        %v1737 = vsel %vm690, %v1736, %v1644
        %v1738 = vrot.slane %v1644, 4
        %v1739 = vsel %vm690, %v1702, %v1738
        %v1741 = vunpack.c.l.s4 1983009808
        %v1742 = vunpack.c.0.s8 %v1741
        %v1743 = vperm.slane %v1737, %v1742
        %v1745 = vunpack.c.l.s4 1983009808
        %v1746 = vunpack.c.0.s8 %v1745
        %v1747 = vperm.slane %v1739, %v1746
        %v1748 = vrot.slane %v1731, 4
        %v1749 = vsel %vm690, %v1748, %v1673
        %v1750 = vrot.slane %v1673, 4
        %v1751 = vsel %vm690, %v1731, %v1750
        %v1753 = vunpack.c.l.s4 1983009808
        %v1754 = vunpack.c.0.s8 %v1753
        %v1755 = vperm.slane %v1749, %v1754
        %v1757 = vunpack.c.l.s4 1983009808
        %v1758 = vunpack.c.0.s8 %v1757
        %v1759 = vperm.slane %v1751, %v1758
        %v1760 = vrot.slane %v1755, 4
        %v1761 = vsel %vm690, %v1760, %v1743
        %v1762 = vrot.slane %v1743, 4
        %v1763 = vsel %vm690, %v1755, %v1762
        %v1765 = vunpack.c.l.s4 1934713408
        %v1766 = vunpack.c.0.s8 %v1765
        %v1767 = vperm.slane %v1761, %v1766
        %v1769 = vunpack.c.l.s4 1934713408
        %v1770 = vunpack.c.0.s8 %v1769
        %v1771 = vperm.slane %v1763, %v1770
        %v1772 = vrot.slane %v1759, 4
        %v1773 = vsel %vm690, %v1772, %v1747
        %v1774 = vrot.slane %v1747, 4
        %v1775 = vsel %vm690, %v1759, %v1774
        %v1777 = vunpack.c.l.s4 1934713408
        %v1778 = vunpack.c.0.s8 %v1777
        %v1779 = vperm.slane %v1773, %v1778
        %v1781 = vunpack.c.l.s4 1934713408
        %v1782 = vunpack.c.0.s8 %v1781
        %v1783 = vperm.slane %v1775, %v1782
        %v1784 = vrot.slane %v1767, 4
        %v1785 = vsel %vm690, 0.0, %v1784
        %v1786 = vrot.slane %v1771, 4
        %v1787 = vsel %vm690, 0.0, %v1786
        %v1788 = vrot.slane %v1779, 4
        %v1789 = vsel %vm690, 0.0, %v1788
        %v1790 = vrot.slane %v1783, 4
        %v1791 = vsel %vm690, 0.0, %v1790
        %v1792 = vrot.slane %v1705, 4
        %v1793 = vsel %vm690, %v1792, %v1647
        %v1794 = vrot.slane %v1647, 4
        %v1795 = vsel %vm690, %v1705, %v1794
        %v1797 = vunpack.c.l.s4 1983009808
        %v1798 = vunpack.c.0.s8 %v1797
        %v1799 = vperm.slane %v1793, %v1798
        %v1801 = vunpack.c.l.s4 1983009808
        %v1802 = vunpack.c.0.s8 %v1801
        %v1803 = vperm.slane %v1795, %v1802
        %v1804 = vrot.slane %v1734, 4
        %v1805 = vsel %vm690, %v1804, %v1676
        %v1806 = vrot.slane %v1676, 4
        %v1807 = vsel %vm690, %v1734, %v1806
        %v1809 = vunpack.c.l.s4 1983009808
        %v1810 = vunpack.c.0.s8 %v1809
        %v1811 = vperm.slane %v1805, %v1810
        %v1813 = vunpack.c.l.s4 1983009808
        %v1814 = vunpack.c.0.s8 %v1813
        %v1815 = vperm.slane %v1807, %v1814
        %v1816 = vrot.slane %v1811, 4
        %v1817 = vsel %vm690, %v1816, %v1799
        %v1818 = vrot.slane %v1799, 4
        %v1819 = vsel %vm690, %v1811, %v1818
        %v1821 = vunpack.c.l.s4 1934713408
        %v1822 = vunpack.c.0.s8 %v1821
        %v1823 = vperm.slane %v1817, %v1822
        %v1825 = vunpack.c.l.s4 1934713408
        %v1826 = vunpack.c.0.s8 %v1825
        %v1827 = vperm.slane %v1819, %v1826
        %v1828 = vrot.slane %v1815, 4
        %v1829 = vsel %vm690, %v1828, %v1803
        %v1830 = vrot.slane %v1803, 4
        %v1831 = vsel %vm690, %v1815, %v1830
        %v1833 = vunpack.c.l.s4 1934713408
        %v1834 = vunpack.c.0.s8 %v1833
        %v1835 = vperm.slane %v1829, %v1834
        %v1837 = vunpack.c.l.s4 1934713408
        %v1838 = vunpack.c.0.s8 %v1837
        %v1839 = vperm.slane %v1831, %v1838
        %v1840 = vrot.slane %v1823, 4
        %v1841 = vsel %vm690, 0.0, %v1840
        %v1842 = vrot.slane %v1827, 4
        %v1843 = vsel %vm690, 0.0, %v1842
        %v1844 = vrot.slane %v1835, 4
        %v1845 = vsel %vm690, 0.0, %v1844
        %v1846 = vrot.slane %v1839, 4
        %v1847 = vsel %vm690, 0.0, %v1846
        %v1848 = vsel %vm690, %v1786, %v1767
        %v1850 = vunpack.c.l.s4 1983009808
        %v1851 = vunpack.c.0.s8 %v1850
        %v1852 = vperm.slane %v1848, %v1851
        %v1853 = vrot.slane %v1787, 4
        %v1854 = vsel %vm690, %v1853, %v1785
        %v1856 = vunpack.c.l.s4 1983009808
        %v1857 = vunpack.c.0.s8 %v1856
        %v1858 = vperm.slane %v1854, %v1857
        %v1859 = vsel %vm690, %v1790, %v1779
        %v1861 = vunpack.c.l.s4 1983009808
        %v1862 = vunpack.c.0.s8 %v1861
        %v1863 = vperm.slane %v1859, %v1862
        %v1864 = vrot.slane %v1791, 4
        %v1865 = vsel %vm690, %v1864, %v1789
        %v1867 = vunpack.c.l.s4 1983009808
        %v1868 = vunpack.c.0.s8 %v1867
        %v1869 = vperm.slane %v1865, %v1868
        %v1870 = vrot.slane %v1858, 4
        %v1871 = vsel %vm690, %v1870, %v1852
        %v1872 = vrot.slane %v1852, 4
        %v1873 = vsel %vm690, %v1858, %v1872
        %v1875 = vunpack.c.l.s4 1934713408
        %v1876 = vunpack.c.0.s8 %v1875
        %v1877 = vperm.slane %v1871, %v1876
        %v1879 = vunpack.c.l.s4 1934713408
        %v1880 = vunpack.c.0.s8 %v1879
        %v1881 = vperm.slane %v1873, %v1880
        %v1882 = vrot.slane %v1869, 4
        %v1883 = vsel %vm690, %v1882, %v1863
        %v1884 = vrot.slane %v1863, 4
        %v1885 = vsel %vm690, %v1869, %v1884
        %v1887 = vunpack.c.l.s4 1934713408
        %v1888 = vunpack.c.0.s8 %v1887
        %v1889 = vperm.slane %v1883, %v1888
        %v1891 = vunpack.c.l.s4 1934713408
        %v1892 = vunpack.c.0.s8 %v1891
        %v1893 = vperm.slane %v1885, %v1892
        %v1894 = vrot.slane %v1889, 4
        %v1895 = vsel %vm690, %v1894, %v1877
        %v1896 = vrot.slane %v1877, 4
        %v1897 = vsel %vm690, %v1889, %v1896
        %v1898 = vrot.slane %v1893, 4
        %v1899 = vsel %vm690, %v1898, %v1881
        %v1900 = vrot.slane %v1881, 4
        %v1901 = vsel %vm690, %v1893, %v1900
        %v1902 = vsel %vm690, %v1842, %v1823
        %v1904 = vunpack.c.l.s4 1983009808
        %v1905 = vunpack.c.0.s8 %v1904
        %v1906 = vperm.slane %v1902, %v1905
        %v1907 = vrot.slane %v1843, 4
        %v1908 = vsel %vm690, %v1907, %v1841
        %v1910 = vunpack.c.l.s4 1983009808
        %v1911 = vunpack.c.0.s8 %v1910
        %v1912 = vperm.slane %v1908, %v1911
        %v1913 = vsel %vm690, %v1846, %v1835
        %v1915 = vunpack.c.l.s4 1983009808
        %v1916 = vunpack.c.0.s8 %v1915
        %v1917 = vperm.slane %v1913, %v1916
        %v1918 = vrot.slane %v1847, 4
        %v1919 = vsel %vm690, %v1918, %v1845
        %v1921 = vunpack.c.l.s4 1983009808
        %v1922 = vunpack.c.0.s8 %v1921
        %v1923 = vperm.slane %v1919, %v1922
        %v1924 = vrot.slane %v1912, 4
        %v1925 = vsel %vm690, %v1924, %v1906
        %v1926 = vrot.slane %v1906, 4
        %v1927 = vsel %vm690, %v1912, %v1926
        %v1929 = vunpack.c.l.s4 1934713408
        %v1930 = vunpack.c.0.s8 %v1929
        %v1931 = vperm.slane %v1925, %v1930
        %v1933 = vunpack.c.l.s4 1934713408
        %v1934 = vunpack.c.0.s8 %v1933
        %v1935 = vperm.slane %v1927, %v1934
        %v1936 = vrot.slane %v1923, 4
        %v1937 = vsel %vm690, %v1936, %v1917
        %v1938 = vrot.slane %v1917, 4
        %v1939 = vsel %vm690, %v1923, %v1938
        %v1941 = vunpack.c.l.s4 1934713408
        %v1942 = vunpack.c.0.s8 %v1941
        %v1943 = vperm.slane %v1937, %v1942
        %v1945 = vunpack.c.l.s4 1934713408
        %v1946 = vunpack.c.0.s8 %v1945
        %v1947 = vperm.slane %v1939, %v1946
        %v1948 = vrot.slane %v1943, 4
        %v1949 = vsel %vm690, %v1948, %v1931
        %v1950 = vrot.slane %v1931, 4
        %v1951 = vsel %vm690, %v1943, %v1950
        %v1952 = vrot.slane %v1947, 4
        %v1953 = vsel %vm690, %v1952, %v1935
        %v1954 = vrot.slane %v1935, 4
        %v1955 = vsel %vm690, %v1947, %v1954
        %1958 = vrot.lane.b32.xlu0 %v1897, 32
        %v1959 = vpop.permute.xlu0 %1958
        %1960 = vrot.lane.b32.xlu0 %v1951, 32
        %v1961 = vpop.permute.xlu0 %1960
        %1966 = vrot.lane.b32.xlu0 %v1899, 64
        %v1967 = vpop.permute.xlu0 %1966
        %1968 = vrot.lane.b32.xlu0 %v1953, 64
        %v1969 = vpop.permute.xlu0 %1968
        %1974 = vrot.lane.b32.xlu0 %v1901, 96
        %v1975 = vpop.permute.xlu0 %1974
        %1976 = vrot.lane.b32.xlu0 %v1955, 96
        %v1977 = vpop.permute.xlu0 %1976
        %v1980 = vsel %vm1390, %v1895, %v1959
        %v1981 = vsel %vm1390, %v1949, %v1961
        %vm1982 = vcmask 523264
        %v1983 = vsel %vm1982, %v1980, %v1967
        %v1984 = vsel %vm1982, %v1981, %v1969
        %vm1985 = vcmask 785408
        %v1986 = vsel %vm1985, %v1983, %v1975
        %v1987 = vsel %vm1985, %v1984, %v1977
        %v1988 = vld [vmem:[#allocation8] sm:$0xff]
        %v1989 = vld [vmem:[#allocation8 + $0x8] sm:$0xff]
        %v1990 = vld [vmem:[#allocation8 + $0x10] sm:$0xff]
        %v1991 = vld [vmem:[#allocation8 + $0x18] sm:$0xff]
        %v1992 = vld [vmem:[#allocation8 + $0x20] sm:$0xff]
        %v1993 = vld [vmem:[#allocation8 + $0x28] sm:$0xff]
        %v1994 = vld [vmem:[#allocation8 + $0x30] sm:$0xff]
        %v1995 = vld [vmem:[#allocation8 + $0x38] sm:$0xff]
        %v1996 = vld [vmem:[#allocation8 + $0x40] sm:$0xff]
        %v1997 = vld [vmem:[#allocation8 + $0x48] sm:$0xff]
        %v1998 = vld [vmem:[#allocation8 + $0x50] sm:$0xff]
        %v1999 = vld [vmem:[#allocation8 + $0x58] sm:$0xff]
        %v2000 = vld [vmem:[#allocation8 + $0x60] sm:$0xff]
        %v2001 = vld [vmem:[#allocation8 + $0x68] sm:$0xff]
        %v2002 = vld [vmem:[#allocation8 + $0x70] sm:$0xff]
        %v2003 = vld [vmem:[#allocation8 + $0x78] sm:$0xff]
        %v2004 = vld [vmem:[%s4] sm:$0x1]
        %v2006 = vperm.slane %v2004, 0
        %2008 = vmatpush.msra.mxu0 %v2003
        %2009 = vmatpush.msra.mxu0 %v2002
        %2010 = vmatpush.msra.mxu0 %v2001
        %2011 = vmatpush.msra.mxu0 %v2000
        %2012 = vmatpush.msra.mxu0 %v1999
        %2013 = vmatpush.msra.mxu0 %v1998
        %2014 = vmatpush.msra.mxu0 %v1997
        %2015 = vmatpush.msra.mxu0 %v1996
        %2016 = vmatpush.msra.mxu0 %v1995
        %2017 = vmatpush.msra.mxu0 %v1994
        %2018 = vmatpush.msra.mxu0 %v1993
        %2019 = vmatpush.msra.mxu0 %v1992
        %2020 = vmatpush.msra.mxu0 %v1991
        %2021 = vmatpush.msra.mxu0 %v1990
        %2022 = vmatpush.msra.mxu0 %v1989
        %2023 = vmatpush.msra.mxu0 %v1988
        %2024 = vmatmul.f32.gmra.mxu0 %v1986
        %v2025 = vpop.f32.mrf.mxu0
        %v2026 = vadd.f32 %v2006, %v2025
        %2027 = vmatmul.f32.gmra.mxu0 %v1987
        %v2028 = vpop.f32.mrf.mxu0
        %v2029 = vadd.f32 %v2006, %v2028
        %2030 = vdwg.mxu0
        %v2031 = vadd.f32 %v542, %v2026
        %v2032 = vadd.f32 %v543, %v2029
        %v2033 = vld [vmem:[%s5] sm:$0x1]
        %v2034 = vld [vmem:[%s6] sm:$0x1]
        %2035 = vadd.xlane.f32.xlu0 %v2031
        %v2036 = vpop.xlane.xlu0 %2035
        %2037 = vadd.xlane.f32.xlu0 %v2032
        %v2038 = vpop.xlane.xlu0 %2037
        %v2039 = vrcp.pop 128.0
        %v2040 = vmul.f32 128.0, %v2039
        %v2041 = vsub.f32 1.0, %v2040
        %v2042 = vmul.f32 %v2039, %v2041
        %v2043 = vadd.f32 %v2039, %v2042
        %vm2044 = vweird.f32 %v2039
        %v2045 = vsel %vm2044, %v2039, %v2043
        %v2046 = vmul.f32 %v2036, %v2045
        %v2047 = vmul.f32 %v2038, %v2045
        %v2048 = vsub.f32 %v2031, %v2046
        %v2049 = vsub.f32 %v2032, %v2047
        %v2050 = vmul.f32 %v2048, %v2048
        %v2051 = vmul.f32 %v2049, %v2049
        %2052 = vadd.xlane.f32.xlu0 %v2050
        %v2053 = vpop.xlane.xlu0 %2052
        %2054 = vadd.xlane.f32.xlu0 %v2051
        %v2055 = vpop.xlane.xlu0 %2054
        %v2056 = vmul.f32 %v2053, %v2045
        %v2057 = vmul.f32 %v2055, %v2045
        %v2058 = vadd.f32 %v2056, 1e-05
        %v2059 = vadd.f32 %v2057, 1e-05
        %v2060 = vrsqrt.pop %v2058
        %v2061 = vmul.f32 %v2060, %v2058
        %v2062 = vmul.f32 %v2061, %v2060
        %v2063 = vmul.f32 0.5, %v2062
        %v2064 = vsub.f32 1.5, %v2063
        %v2065 = vmul.f32 %v2060, %v2064
        %vm2066 = vweird.f32 %v2058
        %vm2067 = vweird.f32 %v2060
        %vm2068 = vmor %vm2066, %vm2067
        %v2069 = vsel %vm2068, %v2060, %v2065
        %v2070 = vrsqrt.pop %v2059
        %v2071 = vmul.f32 %v2070, %v2059
        %v2072 = vmul.f32 %v2071, %v2070
        %v2073 = vmul.f32 0.5, %v2072
        %v2074 = vsub.f32 1.5, %v2073
        %v2075 = vmul.f32 %v2070, %v2074
        %vm2076 = vweird.f32 %v2059
        %vm2077 = vweird.f32 %v2070
        %vm2078 = vmor %vm2076, %vm2077
        %v2079 = vsel %vm2078, %v2070, %v2075
        %v2080 = vmul.f32 %v2048, %v2069
        %v2081 = vmul.f32 %v2049, %v2079
        %v2083 = vperm.slane %v2033, 0
        %v2085 = vmul.f32 %v2080, %v2083
        %v2086 = vmul.f32 %v2081, %v2083
        %v2088 = vperm.slane %v2034, 0
        %v2090 = vadd.f32 %v2085, %v2088
        %v2091 = vadd.f32 %v2086, %v2088
        %v2092 = vld [vmem:[#allocation10] sm:$0xff]
        %v2093 = vld [vmem:[#allocation10 + $0x8] sm:$0xff]
        %v2094 = vld [vmem:[#allocation10 + $0x10] sm:$0xff]
        %v2095 = vld [vmem:[#allocation10 + $0x18] sm:$0xff]
        %v2096 = vld [vmem:[#allocation10 + $0x20] sm:$0xff]
        %v2097 = vld [vmem:[#allocation10 + $0x28] sm:$0xff]
        %v2098 = vld [vmem:[#allocation10 + $0x30] sm:$0xff]
        %v2099 = vld [vmem:[#allocation10 + $0x38] sm:$0xff]
        %v2100 = vld [vmem:[#allocation10 + $0x40] sm:$0xff]
        %v2101 = vld [vmem:[#allocation10 + $0x48] sm:$0xff]
        %v2102 = vld [vmem:[#allocation10 + $0x50] sm:$0xff]
        %v2103 = vld [vmem:[#allocation10 + $0x58] sm:$0xff]
        %v2104 = vld [vmem:[#allocation10 + $0x60] sm:$0xff]
        %v2105 = vld [vmem:[#allocation10 + $0x68] sm:$0xff]
        %v2106 = vld [vmem:[#allocation10 + $0x70] sm:$0xff]
        %v2107 = vld [vmem:[#allocation10 + $0x78] sm:$0xff]
        %v2108 = vld [vmem:[#allocation10 + $0x80] sm:$0xff]
        %v2109 = vld [vmem:[#allocation10 + $0x88] sm:$0xff]
        %v2110 = vld [vmem:[#allocation10 + $0x90] sm:$0xff]
        %v2111 = vld [vmem:[#allocation10 + $0x98] sm:$0xff]
        %v2112 = vld [vmem:[#allocation10 + $0xa0] sm:$0xff]
        %v2113 = vld [vmem:[#allocation10 + $0xa8] sm:$0xff]
        %v2114 = vld [vmem:[#allocation10 + $0xb0] sm:$0xff]
        %v2115 = vld [vmem:[#allocation10 + $0xb8] sm:$0xff]
        %v2116 = vld [vmem:[#allocation10 + $0xc0] sm:$0xff]
        %v2117 = vld [vmem:[#allocation10 + $0xc8] sm:$0xff]
        %v2118 = vld [vmem:[#allocation10 + $0xd0] sm:$0xff]
        %v2119 = vld [vmem:[#allocation10 + $0xd8] sm:$0xff]
        %v2120 = vld [vmem:[#allocation10 + $0xe0] sm:$0xff]
        %v2121 = vld [vmem:[#allocation10 + $0xe8] sm:$0xff]
        %v2122 = vld [vmem:[#allocation10 + $0xf0] sm:$0xff]
        %v2123 = vld [vmem:[#allocation10 + $0xf8] sm:$0xff]
        %v2124 = vld [vmem:[%s8] sm:$0x3]
        %v2126 = vperm.slane %v2124, 0
        %v2127 = vperm.slane %v2124, 1
        %2130 = vmatpush.msra.mxu0 %v2122
        %2131 = vmatpush.msra.mxu0 %v2120
        %2132 = vmatpush.msra.mxu0 %v2118
        %2133 = vmatpush.msra.mxu0 %v2116
        %2134 = vmatpush.msra.mxu0 %v2114
        %2135 = vmatpush.msra.mxu0 %v2112
        %2136 = vmatpush.msra.mxu0 %v2110
        %2137 = vmatpush.msra.mxu0 %v2108
        %2138 = vmatpush.msra.mxu0 %v2106
        %2139 = vmatpush.msra.mxu0 %v2104
        %2140 = vmatpush.msra.mxu0 %v2102
        %2141 = vmatpush.msra.mxu0 %v2100
        %2142 = vmatpush.msra.mxu0 %v2098
        %2143 = vmatpush.msra.mxu0 %v2096
        %2144 = vmatpush.msra.mxu0 %v2094
        %2145 = vmatpush.msra.mxu0 %v2092
        %2146 = vmatmul.f32.gmra.mxu0 %v2090
        %v2147 = vpop.f32.mrf.mxu0
        %v2148 = vadd.f32 %v2126, %v2147
        %2149 = vmatmul.f32.gmra.mxu0 %v2091
        %v2150 = vpop.f32.mrf.mxu0
        %v2151 = vadd.f32 %v2126, %v2150
        %2152 = vdwg.mxu0
        %2153 = vmatpush.msra.mxu0 %v2123
        %2154 = vmatpush.msra.mxu0 %v2121
        %2155 = vmatpush.msra.mxu0 %v2119
        %2156 = vmatpush.msra.mxu0 %v2117
        %2157 = vmatpush.msra.mxu0 %v2115
        %2158 = vmatpush.msra.mxu0 %v2113
        %2159 = vmatpush.msra.mxu0 %v2111
        %2160 = vmatpush.msra.mxu0 %v2109
        %2161 = vmatpush.msra.mxu0 %v2107
        %2162 = vmatpush.msra.mxu0 %v2105
        %2163 = vmatpush.msra.mxu0 %v2103
        %2164 = vmatpush.msra.mxu0 %v2101
        %2165 = vmatpush.msra.mxu0 %v2099
        %2166 = vmatpush.msra.mxu0 %v2097
        %2167 = vmatpush.msra.mxu0 %v2095
        %2168 = vmatpush.msra.mxu0 %v2093
        %2169 = vmatmul.f32.gmra.mxu0 %v2090
        %v2170 = vpop.f32.mrf.mxu0
        %v2171 = vadd.f32 %v2127, %v2170
        %2172 = vmatmul.f32.gmra.mxu0 %v2091
        %v2173 = vpop.f32.mrf.mxu0
        %v2174 = vadd.f32 %v2127, %v2173
        %2175 = vdwg.mxu0
        %v2176 = vmax.f32 %v2148, 0.0
        %v2177 = vmax.f32 %v2171, 0.0
        %v2178 = vmax.f32 %v2151, 0.0
        %v2179 = vmax.f32 %v2174, 0.0
        %v2180 = vld [vmem:[#allocation11] sm:$0xff]
        %v2181 = vld [vmem:[#allocation11 + $0x8] sm:$0xff]
        %v2182 = vld [vmem:[#allocation11 + $0x10] sm:$0xff]
        %v2183 = vld [vmem:[#allocation11 + $0x18] sm:$0xff]
        %v2184 = vld [vmem:[#allocation11 + $0x20] sm:$0xff]
        %v2185 = vld [vmem:[#allocation11 + $0x28] sm:$0xff]
        %v2186 = vld [vmem:[#allocation11 + $0x30] sm:$0xff]
        %v2187 = vld [vmem:[#allocation11 + $0x38] sm:$0xff]
        %v2188 = vld [vmem:[#allocation11 + $0x40] sm:$0xff]
        %v2189 = vld [vmem:[#allocation11 + $0x48] sm:$0xff]
        %v2190 = vld [vmem:[#allocation11 + $0x50] sm:$0xff]
        %v2191 = vld [vmem:[#allocation11 + $0x58] sm:$0xff]
        %v2192 = vld [vmem:[#allocation11 + $0x60] sm:$0xff]
        %v2193 = vld [vmem:[#allocation11 + $0x68] sm:$0xff]
        %v2194 = vld [vmem:[#allocation11 + $0x70] sm:$0xff]
        %v2195 = vld [vmem:[#allocation11 + $0x78] sm:$0xff]
        %v2196 = vld [vmem:[#allocation11 + $0x80] sm:$0xff]
        %v2197 = vld [vmem:[#allocation11 + $0x88] sm:$0xff]
        %v2198 = vld [vmem:[#allocation11 + $0x90] sm:$0xff]
        %v2199 = vld [vmem:[#allocation11 + $0x98] sm:$0xff]
        %v2200 = vld [vmem:[#allocation11 + $0xa0] sm:$0xff]
        %v2201 = vld [vmem:[#allocation11 + $0xa8] sm:$0xff]
        %v2202 = vld [vmem:[#allocation11 + $0xb0] sm:$0xff]
        %v2203 = vld [vmem:[#allocation11 + $0xb8] sm:$0xff]
        %v2204 = vld [vmem:[#allocation11 + $0xc0] sm:$0xff]
        %v2205 = vld [vmem:[#allocation11 + $0xc8] sm:$0xff]
        %v2206 = vld [vmem:[#allocation11 + $0xd0] sm:$0xff]
        %v2207 = vld [vmem:[#allocation11 + $0xd8] sm:$0xff]
        %v2208 = vld [vmem:[#allocation11 + $0xe0] sm:$0xff]
        %v2209 = vld [vmem:[#allocation11 + $0xe8] sm:$0xff]
        %v2210 = vld [vmem:[#allocation11 + $0xf0] sm:$0xff]
        %v2211 = vld [vmem:[#allocation11 + $0xf8] sm:$0xff]
        %v2212 = vld [vmem:[%s10] sm:$0x1]
        %v2214 = vperm.slane %v2212, 0
        %2216 = vmatpush.msra.mxu0 %v2195
        %2217 = vmatpush.msra.mxu0 %v2194
        %2218 = vmatpush.msra.mxu0 %v2193
        %2219 = vmatpush.msra.mxu0 %v2192
        %2220 = vmatpush.msra.mxu0 %v2191
        %2221 = vmatpush.msra.mxu0 %v2190
        %2222 = vmatpush.msra.mxu0 %v2189
        %2223 = vmatpush.msra.mxu0 %v2188
        %2224 = vmatpush.msra.mxu0 %v2187
        %2225 = vmatpush.msra.mxu0 %v2186
        %2226 = vmatpush.msra.mxu0 %v2185
        %2227 = vmatpush.msra.mxu0 %v2184
        %2228 = vmatpush.msra.mxu0 %v2183
        %2229 = vmatpush.msra.mxu0 %v2182
        %2230 = vmatpush.msra.mxu0 %v2181
        %2231 = vmatpush.msra.mxu0 %v2180
        %2232 = vmatmul.f32.gmra.mxu0 %v2176
        %v2233 = vpop.f32.mrf.mxu0
        %v2234 = vadd.f32 %v2214, %v2233
        %2235 = vmatmul.f32.gmra.mxu0 %v2178
        %v2236 = vpop.f32.mrf.mxu0
        %v2237 = vadd.f32 %v2214, %v2236
        %2238 = vdwg.mxu0
        %2239 = vmatpush.msra.mxu0 %v2211
        %2240 = vmatpush.msra.mxu0 %v2210
        %2241 = vmatpush.msra.mxu0 %v2209
        %2242 = vmatpush.msra.mxu0 %v2208
        %2243 = vmatpush.msra.mxu0 %v2207
        %2244 = vmatpush.msra.mxu0 %v2206
        %2245 = vmatpush.msra.mxu0 %v2205
        %2246 = vmatpush.msra.mxu0 %v2204
        %2247 = vmatpush.msra.mxu0 %v2203
        %2248 = vmatpush.msra.mxu0 %v2202
        %2249 = vmatpush.msra.mxu0 %v2201
        %2250 = vmatpush.msra.mxu0 %v2200
        %2251 = vmatpush.msra.mxu0 %v2199
        %2252 = vmatpush.msra.mxu0 %v2198
        %2253 = vmatpush.msra.mxu0 %v2197
        %2254 = vmatpush.msra.mxu0 %v2196
        %2255 = vmatmul.f32.gmra.mxu0 %v2177
        %v2256 = vpop.f32.mrf.mxu0
        %v2257 = vadd.f32 %v2234, %v2256
        %2258 = vmatmul.f32.gmra.mxu0 %v2179
        %v2259 = vpop.f32.mrf.mxu0
        %v2260 = vadd.f32 %v2237, %v2259
        %2261 = vdwg.mxu0
        %v2262 = vadd.f32 %v2090, %v2257
        %v2263 = vadd.f32 %v2091, %v2260
        %v2264 = vld [vmem:[%s11] sm:$0x1]
        %v2265 = vld [vmem:[%s12] sm:$0x1]
        %2266 = vadd.xlane.f32.xlu0 %v2262
        %v2267 = vpop.xlane.xlu0 %2266
        %2268 = vadd.xlane.f32.xlu0 %v2263
        %v2269 = vpop.xlane.xlu0 %2268
        %v2270 = vmul.f32 %v2267, %v2045
        %v2271 = vmul.f32 %v2269, %v2045
        %v2272 = vsub.f32 %v2262, %v2270
        %v2273 = vsub.f32 %v2263, %v2271
        %v2274 = vmul.f32 %v2272, %v2272
        %v2275 = vmul.f32 %v2273, %v2273
        %2276 = vadd.xlane.f32.xlu0 %v2274
        %v2277 = vpop.xlane.xlu0 %2276
        %2278 = vadd.xlane.f32.xlu0 %v2275
        %v2279 = vpop.xlane.xlu0 %2278
        %v2280 = vmul.f32 %v2277, %v2045
        %v2281 = vmul.f32 %v2279, %v2045
        %v2282 = vadd.f32 %v2280, 1e-05
        %v2283 = vadd.f32 %v2281, 1e-05
        %v2284 = vrsqrt.pop %v2282
        %v2285 = vmul.f32 %v2284, %v2282
        %v2286 = vmul.f32 %v2285, %v2284
        %v2287 = vmul.f32 0.5, %v2286
        %v2288 = vsub.f32 1.5, %v2287
        %v2289 = vmul.f32 %v2284, %v2288
        %vm2290 = vweird.f32 %v2282
        %vm2291 = vweird.f32 %v2284
        %vm2292 = vmor %vm2290, %vm2291
        %v2293 = vsel %vm2292, %v2284, %v2289
        %v2294 = vrsqrt.pop %v2283
        %v2295 = vmul.f32 %v2294, %v2283
        %v2296 = vmul.f32 %v2295, %v2294
        %v2297 = vmul.f32 0.5, %v2296
        %v2298 = vsub.f32 1.5, %v2297
        %v2299 = vmul.f32 %v2294, %v2298
        %vm2300 = vweird.f32 %v2283
        %vm2301 = vweird.f32 %v2294
        %vm2302 = vmor %vm2300, %vm2301
        %v2303 = vsel %vm2302, %v2294, %v2299
        %v2304 = vmul.f32 %v2272, %v2293
        %v2305 = vmul.f32 %v2273, %v2303
        %v2307 = vperm.slane %v2264, 0
        %v2309 = vmul.f32 %v2304, %v2307
        %v2310 = vmul.f32 %v2305, %v2307
        %v2312 = vperm.slane %v2265, 0
        %v2314 = vadd.f32 %v2309, %v2312
        %v2315 = vadd.f32 %v2310, %v2312
        %2316 = vst [vmem:[%s541] sm:$0xff] %v2314
        %2317 = vst [vmem:[%s541 + $0x8] sm:$0xff] %v2315
        %s2318 = sand.u32 %s319, 1
        %s2319 = scalar_lea.sflag [#allocation4], %s2318
        %s2320 = sand.u32 %s319, 1
        %s2321 = smul.addr %s2320, 16
        %s2322 = scalar_lea.vmem [#allocation13], %s2321
        // Predicated region
        $region97: #{tpu_custom_call.1} parent=71 // pred_check
          %p2323 = pneg %p329
        $region98: #{tpu_custom_call.1} parent=71 // pred_check_branch
          %2325 = sbr.rel (%p2323) target = $region100
        $region99: #{tpu_custom_call.1} parent=71 // pred_region
          %2327 = vsyncadd %s2319, 0
          %s2328 = smul.addr %s33, 2
          %s2329 = smul.addr %s2328, 8
          %s2330 = scalar_lea.hbm %s13, %s2329
          %s2331 = sshll.u32 %s2322, 4
          %s2332 = int_to_ptr.vmem [resolvable:$true] %s2331
          %s2333 = sshll.u32 %s2330, 4
          %s2334 = int_to_ptr.hbm [resolvable:$true] %s2333
          %2339 = dma.vmem_to_hbm [thread:$0]  %s2332, 256, %s2334, %s2319, 128, 128, 8
        $region100: #{tpu_custom_call.1} parent=71 // pred_fallthru
          _
      $region72: #{tpu_custom_call.1} parent=5 // pred_fallthru
        _
      %p2340 = scmp.le.s32.totalorder 2, %s28
      // Predicated region
      $region101: #{tpu_custom_call.1} parent=5 // pred_check
        %p2341 = pneg %p2340
      $region102: #{tpu_custom_call.1} parent=5 // pred_check_branch
        %2343 = sbr.rel (%p2341) target = $region104
      $region103: #{tpu_custom_call.1} parent=5 // pred_region
        %s2344 = ssub.s32 %s28, 2
        // Predicated region
        $region105: #{tpu_custom_call.1} parent=103 // pred_check
          %p2345 = pneg %p335
        $region106: #{tpu_custom_call.1} parent=103 // pred_check_branch
          %2347 = sbr.rel (%p2345) target = $region108
        $region107: #{tpu_custom_call.1} parent=103 // pred_region
          %s2348 = sand.u32 %s320, 1
          %s2349 = scalar_lea.sflag [#allocation4], %s2348
          %s2350 = sand.u32 %s320, 1
          %s2351 = smul.addr %s2350, 16
          %s2352 = scalar_lea.vmem [#allocation13], %s2351
          %2354 = dma.done %s2349, 256
        $region108: #{tpu_custom_call.1} parent=103 // pred_fallthru
          _
      $region104: #{tpu_custom_call.1} parent=5 // pred_fallthru
        _
    $region6: #{tpu_custom_call.1} parent=1 // loop_footer
      %s32 = sadd.s32 1, %s28
    $region7: #{tpu_custom_call.1} parent=1 // loop_footer_branch
      %27 = sbr.rel target = $region3
    $region8: #{tpu_custom_call.1} parent=1 // loop_exit
      _
    %2355 = vsyncpa [#allocation3], 1
    %s2356 = scalar_lea.sflag [#allocation3], 1
    %2357 = vsyncpa %s2356, 1
    %2358 = vsyncpa [#allocation6], 1
    %2359 = vsyncpa [#allocation9], 1
    %2360 = vsyncpa [#allocation12], 1
    %2361 = vsyncpa [#allocation4], 1
    %s2362 = scalar_lea.sflag [#allocation4], 1
    %2363 = vsyncpa %s2362, 1

</llo_original>
